<compile_context>
chip_gen: v7x
topology: tpu7x:2x2x1
jax: 0.10.0
libtpu: 0.0.40
codegen_flags: <defaults>
</compile_context>

<pallas_src>
import functools

import jax
import jax.numpy as jnp
from jax.experimental import pallas as pl
from jax.experimental.pallas import tpu as pltpu


# ---------------------------- hw-dependent knobs ----------------------------

def _tpu_vmem_bytes():
    try:
        return int(pltpu.get_tpu_info().vmem_capacity_bytes)
    except Exception:
        return 64 * 1024 * 1024      # conservative (v7x-sized) fallback


_VMEM_CAP = _tpu_vmem_bytes()
if _VMEM_CAP >= 100 * 1024 * 1024:    # v5e / v6e: 128 MiB physical VMEM
    _VMEM_LIMIT = 100 * 1024 * 1024
    _PREF_N = 1024
    _PREF_K = 1024
else:                                 # v7x: 64 MiB physical VMEM
    _VMEM_LIMIT = 48 * 1024 * 1024
    _PREF_N = 512
    _PREF_K = 512


def _compiler_params(dims):
    return pltpu.CompilerParams(dimension_semantics=dims,
                                vmem_limit_bytes=_VMEM_LIMIT)


def _pick_tile(dim, pref, align):
    """Largest tile <= pref dividing dim; prefer multiples of 256 (MXU cadence),
    then fall back to `align`-multiples, else the full dim."""
    if dim <= pref:
        return dim
    for step in (256, align):
        if step < align:
            continue
        t = (pref // step) * step
        while t >= step:
            if dim % t == 0:
                return t
            t -= step
    return dim


# ---------------------------- Pallas kernels ----------------------------

def _matmul_kernel(*refs, activation, has_residual):
    """2-D tiled matmul + bias (+ residual) (+ activation); full-K weight panel
    held in VMEM (no reduction grid axis)."""
    if has_residual:
        x_ref, w_ref, b_ref, r_ref, o_ref = refs
    else:
        x_ref, w_ref, b_ref, o_ref = refs
        r_ref = None
    y = jnp.dot(x_ref[...].astype(jnp.bfloat16), w_ref[...],
                preferred_element_type=jnp.float32)
    y = y + b_ref[...]
    if has_residual:
        y = y + r_ref[...].astype(jnp.float32)
    if activation == "gelu":
        # TODO(synk): torch nn.GELU is exact-erf; tanh approximation used for a
        # Mosaic-friendly transcendental path (difference ~1e-3).
        y = jax.nn.gelu(y, approximate=True)
    elif activation == "relu":
        y = jnp.maximum(y, 0.0)
    o_ref[...] = y.astype(o_ref.dtype)


def _ln_linear_kernel(x_ref, g_ref, bln_ref, w_ref, b_ref, o_ref, xn_ref, *,
                      eps, activation):
    """Fused LayerNorm (full feature dim) + linear (+ activation).

    The LN output is computed once per row tile (inner grid axis j == 0) into a
    bf16 VMEM scratch and reused for all subsequent output-column tiles.
    """
    @pl.when(pl.program_id(1) == 0)
    def _():
        x = x_ref[...].astype(jnp.float32)
        mean = jnp.mean(x, axis=-1, keepdims=True)
        var = jnp.mean(jnp.square(x - mean), axis=-1, keepdims=True)
        xn = (x - mean) * jax.lax.rsqrt(var + eps)
        xn_ref[...] = (xn * g_ref[...] + bln_ref[...]).astype(xn_ref.dtype)

    y = jnp.dot(xn_ref[...], w_ref[...], preferred_element_type=jnp.float32)
    y = y + b_ref[...]
    if activation == "gelu":
        y = jax.nn.gelu(y, approximate=True)
    elif activation == "relu":
        y = jnp.maximum(y, 0.0)
    o_ref[...] = y.astype(o_ref.dtype)


def _ln_mlp_kernel(x_ref, g_ref, bln_ref, w1_ref, b1_ref, w2_ref, b2_ref,
                   r_ref, o_ref, acc_ref, xn_ref, *, eps):
    """Fused LN + fc1 + gelu + fc2 + residual; MLP dim is the reduction grid
    axis.  LN output is cached in a bf16 scratch at k == 0."""
    k = pl.program_id(1)

    @pl.when(k == 0)
    def _():
        acc_ref[...] = jnp.zeros_like(acc_ref)
        x = x_ref[...].astype(jnp.float32)
        mean = jnp.mean(x, axis=-1, keepdims=True)
        var = jnp.mean(jnp.square(x - mean), axis=-1, keepdims=True)
        xn = (x - mean) * jax.lax.rsqrt(var + eps)
        xn_ref[...] = (xn * g_ref[...] + bln_ref[...]).astype(xn_ref.dtype)

    h = jnp.dot(xn_ref[...], w1_ref[...], preferred_element_type=jnp.float32)
    h = jax.nn.gelu(h + b1_ref[...], approximate=True)
    acc_ref[...] += jnp.dot(h.astype(jnp.bfloat16), w2_ref[...],
                            preferred_element_type=jnp.float32)

    @pl.when(k == pl.num_programs(1) - 1)
    def _():
        y = acc_ref[...] + b2_ref[...] + r_ref[...].astype(jnp.float32)
        o_ref[...] = y.astype(o_ref.dtype)


def _attn_kernel(q_ref, k_ref, v_ref, o_ref, *, hp, hd, n_real):
    """Fused multi-head attention for one (batch, head-group) grid step.

    q/k/v blocks are 128-lane-wide head groups sliced from the qkv slab via
    BlockSpec column indexing; no f32 slab cast (softmax scale pre-folded into
    qkv_w).  Per-head outputs are stored incrementally (no concat).  Padded key
    tokens (>= n_real) are masked out of the softmax.
    """
    n = q_ref.shape[1]
    key_mask = jax.lax.broadcasted_iota(jnp.int32, (n, n), 1) < n_real
    q_all = q_ref[0]                                       # (N_pad, gw) bf16
    k_all = k_ref[0]
    v_all = v_ref[0]
    for h in range(hp):
        sl = slice(h * hd, (h + 1) * hd)
        q = q_all[:, sl]
        k = k_all[:, sl]
        v = v_all[:, sl]
        s = jax.lax.dot_general(q, k, (((1,), (1,)), ((), ())),
                                preferred_element_type=jnp.float32)
        s = jnp.where(key_mask, s, jnp.float32(-1e30))
        m = jnp.max(s, axis=-1, keepdims=True)
        p = jnp.exp(s - m)
        l = jnp.sum(p, axis=-1, keepdims=True)
        o_h = jax.lax.dot_general(p.astype(jnp.bfloat16), v,
                                  (((1,), (0,)), ((), ())),
                                  preferred_element_type=jnp.float32)
        o_ref[0, :, sl] = (o_h * pl.reciprocal(l, approx=True)).astype(o_ref.dtype)


# ---------------------------- kernel wrappers ----------------------------

def matmul_bias_act(x, w, b, *, activation="none", residual=None):
    M, K = x.shape
    _, N = w.shape
    tm = _pick_tile(M, 256, 16)
    tn = _pick_tile(N, _PREF_N, 128)
    grid = (M // tm, N // tn)
    has_res = residual is not None

    in_specs = [
        pl.BlockSpec((tm, K), lambda i, j: (i, 0)),
        pl.BlockSpec((K, tn), lambda i, j: (0, j)),
        pl.BlockSpec((1, tn), lambda i, j: (0, j)),
    ]
    args = [x, w, b.reshape(1, N)]
    if has_res:
        in_specs.append(pl.BlockSpec((tm, tn), lambda i, j: (i, j)))
        args.append(residual)

    bytes_acc = (2 * M * K + 2 * K * N + 2 * M * N + 4 * N
                 + (2 * M * N if has_res else 0))
    cost = pl.CostEstimate(
        flops=2 * M * N * K,
        transcendentals=M * N if activation == "gelu" else 0,
        bytes_accessed=int(bytes_acc))

    return pl.pallas_call(
        functools.partial(_matmul_kernel, activation=activation,
                          has_residual=has_res),
        out_shape=jax.ShapeDtypeStruct((M, N), x.dtype),
        grid_spec=pltpu.PrefetchScalarGridSpec(
            num_scalar_prefetch=0,
            grid=grid,
            in_specs=in_specs,
            out_specs=pl.BlockSpec((tm, tn), lambda i, j: (i, j))),
        compiler_params=_compiler_params(("parallel", "parallel")),
        cost_estimate=cost,
    )(*args)


def ln_linear(x, g, b_ln, w, b, *, activation="none", eps=1e-6):
    M, K = x.shape
    _, N = w.shape
    tm = _pick_tile(M, 256, 16)
    tn = _pick_tile(N, _PREF_N, 128)
    grid = (M // tm, N // tn)
    cost = pl.CostEstimate(
        flops=2 * M * N * K + 10 * M * K,
        transcendentals=M + (M * N if activation == "gelu" else 0),
        bytes_accessed=int(2 * (M * K + K * N + M * N) + 4 * (2 * K + N)))
    return pl.pallas_call(
        functools.partial(_ln_linear_kernel, eps=eps, activation=activation),
        out_shape=jax.ShapeDtypeStruct((M, N), x.dtype),
        grid_spec=pltpu.PrefetchScalarGridSpec(
            num_scalar_prefetch=0,
            grid=grid,
            in_specs=[
                pl.BlockSpec((tm, K), lambda i, j: (i, 0)),
                pl.BlockSpec((1, K), lambda i, j: (0, 0)),
                pl.BlockSpec((1, K), lambda i, j: (0, 0)),
                pl.BlockSpec((K, tn), lambda i, j: (0, j)),
                pl.BlockSpec((1, tn), lambda i, j: (0, j)),
            ],
            out_specs=pl.BlockSpec((tm, tn), lambda i, j: (i, j)),
            scratch_shapes=[pltpu.VMEM((tm, K), jnp.bfloat16)]),
        # inner axis is "arbitrary": the cached LN scratch is filled at j == 0
        compiler_params=_compiler_params(("parallel", "arbitrary")),
        cost_estimate=cost,
    )(x, g.reshape(1, K), b_ln.reshape(1, K), w, b.reshape(1, N))


def ln_mlp(x, g, b_ln, w1, b1, w2, b2, residual, *, eps=1e-6):
    M, D = x.shape
    _, MLP = w1.shape
    tm = _pick_tile(M, 256, 16)
    tk = _pick_tile(MLP, _PREF_K, 128)
    grid = (M // tm, MLP // tk)
    cost = pl.CostEstimate(
        flops=4 * M * MLP * D,
        transcendentals=M * MLP + M,
        bytes_accessed=int(2 * (3 * M * D + 2 * D * MLP) + 4 * (MLP + 3 * D)))
    return pl.pallas_call(
        functools.partial(_ln_mlp_kernel, eps=eps),
        out_shape=jax.ShapeDtypeStruct((M, D), x.dtype),
        grid_spec=pltpu.PrefetchScalarGridSpec(
            num_scalar_prefetch=0,
            grid=grid,
            in_specs=[
                pl.BlockSpec((tm, D), lambda i, k: (i, 0)),
                pl.BlockSpec((1, D), lambda i, k: (0, 0)),
                pl.BlockSpec((1, D), lambda i, k: (0, 0)),
                pl.BlockSpec((D, tk), lambda i, k: (0, k)),
                pl.BlockSpec((1, tk), lambda i, k: (0, k)),
                pl.BlockSpec((tk, D), lambda i, k: (k, 0)),
                pl.BlockSpec((1, D), lambda i, k: (0, 0)),
                pl.BlockSpec((tm, D), lambda i, k: (i, 0)),
            ],
            out_specs=pl.BlockSpec((tm, D), lambda i, k: (i, 0)),
            scratch_shapes=[pltpu.VMEM((tm, D), jnp.float32),
                            pltpu.VMEM((tm, D), jnp.bfloat16)]),
        compiler_params=_compiler_params(("parallel", "arbitrary")),
        cost_estimate=cost,
    )(x, g.reshape(1, D), b_ln.reshape(1, D), w1, b1.reshape(1, MLP),
      w2, b2.reshape(1, D), residual)


def attention(qkv, *, heads, hd, n_real):
    B, NP, threeD = qkv.shape
    D = threeD // 3
    # head group: as many heads as fit in 128 lanes (2 at hd=64, 4 at hd=32)
    hp = max(1, min(heads, 128 // max(hd, 1)))
    while heads % hp:
        hp -= 1
    gw = hp * hd
    n_groups = heads // hp
    cost = pl.CostEstimate(
        flops=4 * B * heads * NP * NP * hd,
        transcendentals=B * heads * NP * NP,
        bytes_accessed=int(2 * (B * NP * threeD + B * NP * D)))
    return pl.pallas_call(
        functools.partial(_attn_kernel, hp=hp, hd=hd, n_real=n_real),
        out_shape=jax.ShapeDtypeStruct((B, NP, D), qkv.dtype),
        grid_spec=pltpu.PrefetchScalarGridSpec(
            num_scalar_prefetch=0,
            grid=(B, n_groups),
            in_specs=[
                pl.BlockSpec((1, NP, gw), lambda b, g: (b, 0, g)),
                pl.BlockSpec((1, NP, gw), lambda b, g: (b, 0, g + n_groups)),
                pl.BlockSpec((1, NP, gw), lambda b, g: (b, 0, g + 2 * n_groups)),
            ],
            out_specs=pl.BlockSpec((1, NP, gw), lambda b, g: (b, 0, g))),
        compiler_params=_compiler_params(("parallel", "parallel")),
        cost_estimate=cost,
    )(qkv, qkv, qkv)


# ---------------------------- parameters ----------------------------

def init_params(key, *, in_chans, patch, embed_dim, depth, heads, mlp_dim,
                num_classes, num_patches):
    def nrm(k, shape, scale=0.02):
        return scale * jax.random.normal(k, shape, dtype=jnp.float32)

    keys = iter(jax.random.split(key, 8 + depth * 12))
    D = embed_dim
    params = {
        "patch_w": nrm(next(keys), (in_chans * patch * patch, D)),
        "patch_b": jnp.zeros((D,), jnp.float32),
        "cls_token": nrm(next(keys), (1, 1, D)),
        "pos_embed": nrm(next(keys), (1, num_patches + 1, D)),
        "ln_g": jnp.ones((D,), jnp.float32),
        "ln_b": jnp.zeros((D,), jnp.float32),
        "head_w": nrm(next(keys), (D, num_classes)),
        "head_b": jnp.zeros((num_classes,), jnp.float32),
        "blocks": [],
    }
    for _ in range(depth):
        params["blocks"].append({
            "ln1_g": jnp.ones((D,), jnp.float32),
            "ln1_b": jnp.zeros((D,), jnp.float32),
            "qkv_w": nrm(next(keys), (D, 3 * D)),
            "qkv_b": jnp.zeros((3 * D,), jnp.float32),
            "proj_w": nrm(next(keys), (D, D)),
            "proj_b": jnp.zeros((D,), jnp.float32),
            "ln2_g": jnp.ones((D,), jnp.float32),
            "ln2_b": jnp.zeros((D,), jnp.float32),
            "fc1_w": nrm(next(keys), (D, mlp_dim)),
            "fc1_b": jnp.zeros((mlp_dim,), jnp.float32),
            "fc2_w": nrm(next(keys), (mlp_dim, D)),
            "fc2_b": jnp.zeros((D,), jnp.float32),
        })
    return params


def prepare_params(params, *, heads):
    """One-time prep: cast weights to bf16 and fold the softmax scale into the
    q columns of qkv_w / qkv_b (keeps biases / LN params in f32)."""
    D = params["cls_token"].shape[-1]
    hd = D // heads
    scale = hd ** -0.5
    qscale = jnp.concatenate([jnp.full((D,), scale, jnp.float32),
                              jnp.ones((2 * D,), jnp.float32)])
    p = dict(params)
    p["patch_w"] = params["patch_w"].astype(jnp.bfloat16)
    p["head_w"] = params["head_w"].astype(jnp.bfloat16)
    blocks = []
    for blk in params["blocks"]:
        b = dict(blk)
        b["qkv_w"] = (blk["qkv_w"] * qscale[None, :]).astype(jnp.bfloat16)
        b["qkv_b"] = blk["qkv_b"] * qscale
        b["proj_w"] = blk["proj_w"].astype(jnp.bfloat16)
        b["fc1_w"] = blk["fc1_w"].astype(jnp.bfloat16)
        b["fc2_w"] = blk["fc2_w"].astype(jnp.bfloat16)
        blocks.append(b)
    p["blocks"] = blocks
    return p


# ---------------------------- forward ----------------------------

def vitb16_forward(params, x, *, patch, heads):
    B, C, H, W = x.shape
    D = params["cls_token"].shape[-1]
    gh, gw = H // patch, W // patch
    n_patches = gh * gw
    n_real = n_patches + 1
    NP = ((n_real + 15) // 16) * 16      # bf16-sublane-aligned token count
    hd = D // heads

    # Patch embedding: conv(k=16, s=16) == per-patch matmul.
    # TODO(synk): the im2col rearrangement is still materialized by XLA; it
    # could be folded into the patch-embed BlockSpec index_map at 224x224.
    patches = x.reshape(B, C, gh, patch, gw, patch)
    patches = patches.transpose(0, 2, 4, 1, 3, 5).reshape(
        B * n_patches, C * patch * patch).astype(jnp.bfloat16)
    tok = matmul_bias_act(patches, params["patch_w"], params["patch_b"])
    tok = tok.reshape(B, n_patches, D)

    cls = jnp.broadcast_to(params["cls_token"], (B, 1, D))
    x_tok = (jnp.concatenate([cls, tok.astype(jnp.float32)], axis=1)
             + params["pos_embed"])
    x_tok = jnp.pad(x_tok, ((0, 0), (0, NP - n_real), (0, 0)))
    x2d = x_tok.astype(jnp.bfloat16).reshape(B * NP, D)

    for blk in params["blocks"]:
        # LN1 + QKV projection fused (softmax scale pre-folded into qkv_w).
        qkv = ln_linear(x2d, blk["ln1_g"], blk["ln1_b"],
                        blk["qkv_w"], blk["qkv_b"])
        # Fused attention over 128-lane head groups; padded keys masked.
        attn = attention(qkv.reshape(B, NP, 3 * D),
                         heads=heads, hd=hd, n_real=n_real)
        # Output projection with the residual add fused into the epilogue.
        x2d = matmul_bias_act(attn.reshape(B * NP, D),
                              blk["proj_w"], blk["proj_b"], residual=x2d)
        # LN2 + fc1(gelu) + fc2 + residual fused in one kernel.
        x2d = ln_mlp(x2d, blk["ln2_g"], blk["ln2_b"],
                     blk["fc1_w"], blk["fc1_b"],
                     blk["fc2_w"], blk["fc2_b"], residual=x2d)

    # Final LN is row-wise -> apply only to cls rows; gather them into a
    # sublane-aligned buffer and fuse final LN + head + the trailing nn.ReLU.
    cls_tok = x2d.reshape(B, NP, D)[:, 0, :]
    m_rows = max(8, ((B + 7) // 8) * 8)
    cls_pad = jnp.pad(cls_tok, ((0, m_rows - B), (0, 0)))
    logits = ln_linear(cls_pad, params["ln_g"], params["ln_b"],
                       params["head_w"], params["head_b"], activation="relu")
    return logits[:B].astype(jnp.float32)


# ---------------------------- main ----------------------------

if __name__ == "__main__":
    # Small ViT consistent with the module (DeiT-B shrunk for a smoke test).
    B, C, IMG, PATCH = 2, 3, 32, 16
    EMBED, DEPTH, HEADS, MLP, CLASSES = 128, 2, 4, 512, 128
    NUM_PATCHES = (IMG // PATCH) ** 2

    key = jax.random.PRNGKey(0)
    k_params, k_x = jax.random.split(key)
    params = init_params(k_params, in_chans=C, patch=PATCH, embed_dim=EMBED,
                         depth=DEPTH, heads=HEADS, mlp_dim=MLP,
                         num_classes=CLASSES, num_patches=NUM_PATCHES)
    params = prepare_params(params, heads=HEADS)
    x = jax.random.normal(k_x, (B, C, IMG, IMG), dtype=jnp.float32)

    fwd = jax.jit(functools.partial(vitb16_forward, patch=PATCH, heads=HEADS))
    out = fwd(params, x)
    jax.block_until_ready(out)
    assert out.shape == (B, CLASSES)
    assert bool(jnp.all(out >= 0.0))  # trailing ReLU
    print("KERNEL_OK")
</pallas_src>

<mosaic_0001>
module attributes {stable_mosaic.version = 11 : i64} {
  func.func @_matmul_kernel(%arg0: i32, %arg1: i32, %arg2: memref<8x768xbf16, #tpu.memory_space<vmem>>, %arg3: memref<768x128xbf16, #tpu.memory_space<vmem>>, %arg4: memref<1x128xf32, #tpu.memory_space<vmem>>, %arg5: memref<8x128xbf16, #tpu.memory_space<vmem>>) attributes {dimension_semantics = [#tpu.dimension_semantics<parallel>, #tpu.dimension_semantics<parallel>], iteration_bounds = array<i64: 1, 1>, scalar_prefetch = 0 : i64, scratch_operands = 0 : i64, tpu.core_type = #tpu.core_type<tc>, window_params = [{transform_indices = @transform_0, window_bounds = array<i64: 8, 768>}, {transform_indices = @transform_1, window_bounds = array<i64: 768, 128>}, {transform_indices = @transform_2, window_bounds = array<i64: 1, 128>}, {transform_indices = @transform_3, window_bounds = array<i64: 8, 128>}]} {
    %c0 = arith.constant 0 : index
    %c0_0 = arith.constant 0 : index
    %0 = vector.load %arg2[%c0, %c0_0] : memref<8x768xbf16, #tpu.memory_space<vmem>>, vector<8x768xbf16>
    %c0_1 = arith.constant 0 : index
    %c0_2 = arith.constant 0 : index
    %1 = vector.load %arg3[%c0_1, %c0_2] : memref<768x128xbf16, #tpu.memory_space<vmem>>, vector<768x128xbf16>
    %cst = arith.constant dense<0.000000e+00> : vector<8x128xf32>
    %2 = tpu.matmul %0, %1, %cst {dimension_numbers = #tpu.dot_dimension_numbers<[1], [0], [0], [1], [0, 0, 1, 1], [], []>} : vector<8x768xbf16>, vector<768x128xbf16>, vector<8x128xf32> -> vector<8x128xf32>
    %c0_3 = arith.constant 0 : index
    %c0_4 = arith.constant 0 : index
    %3 = vector.load %arg4[%c0_3, %c0_4] : memref<1x128xf32, #tpu.memory_space<vmem>>, vector<1x128xf32>
    %4 = vector.broadcast %3 : vector<1x128xf32> to vector<8x128xf32>
    %5 = arith.addf %2, %4 : vector<8x128xf32>
    %6 = arith.truncf %5 : vector<8x128xf32> to vector<8x128xbf16>
    %c0_5 = arith.constant 0 : index
    %c0_6 = arith.constant 0 : index
    %7 = vector.load %arg5[%c0_5, %c0_6] : memref<8x128xbf16, #tpu.memory_space<vmem>>, vector<8x128xbf16>
    tpu.vector_store %arg5[%c0_5, %c0_6], %6 {strides = array<i32>} : memref<8x128xbf16, #tpu.memory_space<vmem>>, vector<8x128xbf16>,
    return
  }
  func.func @transform_0(%arg0: i32, %arg1: i32) -> (i32, i32) {
    %c0_i32 = arith.constant 0 : i32
    %c0_i32_0 = arith.constant 0 : i32
    return %arg0, %c0_i32 : i32, i32
  }
  func.func @transform_1(%arg0: i32, %arg1: i32) -> (i32, i32) {
    %c0_i32 = arith.constant 0 : i32
    %c0_i32_0 = arith.constant 0 : i32
    return %c0_i32, %arg1 : i32, i32
  }
  func.func @transform_2(%arg0: i32, %arg1: i32) -> (i32, i32) {
    %c0_i32 = arith.constant 0 : i32
    %c0_i32_0 = arith.constant 0 : i32
    return %c0_i32, %arg1 : i32, i32
  }
  func.func @transform_3(%arg0: i32, %arg1: i32) -> (i32, i32) {
    %c0_i32 = arith.constant 0 : i32
    return %arg0, %arg1 : i32, i32
  }
}

module attributes {stable_mosaic.version = 11 : i64} {
  func.func @_attn_kernel(%arg0: i32, %arg1: i32, %arg2: memref<1x16x128xbf16, #tpu.memory_space<vmem>>, %arg3: memref<1x16x128xbf16, #tpu.memory_space<vmem>>, %arg4: memref<1x16x128xbf16, #tpu.memory_space<vmem>>, %arg5: memref<1x16x128xbf16, #tpu.memory_space<vmem>>) attributes {dimension_semantics = [#tpu.dimension_semantics<parallel>, #tpu.dimension_semantics<parallel>], iteration_bounds = array<i64: 2, 1>, scalar_prefetch = 0 : i64, scratch_operands = 0 : i64, tpu.core_type = #tpu.core_type<tc>, window_params = [{transform_indices = @transform_0, window_bounds = array<i64: 1, 16, 128>}, {transform_indices = @transform_1, window_bounds = array<i64: 1, 16, 128>}, {transform_indices = @transform_2, window_bounds = array<i64: 1, 16, 128>}, {transform_indices = @transform_3, window_bounds = array<i64: 1, 16, 128>}]} {
    %0 = tpu.iota {dimensions = array<i32: 1>} : vector<16x16xi32>
    %c5_i32 = arith.constant 5 : i32
    %1 = vector.broadcast %c5_i32 : i32 to vector<16x16xi32>
    %2 = arith.cmpi slt, %0, %1 : vector<16x16xi32>
    %c0 = arith.constant 0 : index
    %c0_0 = arith.constant 0 : index
    %c0_1 = arith.constant 0 : index
    %3 = vector.load %arg2[%c0, %c0_0, %c0_1] : memref<1x16x128xbf16, #tpu.memory_space<vmem>>, vector<1x16x128xbf16>
    %4 = vector.shape_cast %3 : vector<1x16x128xbf16> to vector<16x128xbf16>
    %c0_2 = arith.constant 0 : index
    %c0_3 = arith.constant 0 : index
    %c0_4 = arith.constant 0 : index
    %5 = vector.load %arg3[%c0_2, %c0_3, %c0_4] : memref<1x16x128xbf16, #tpu.memory_space<vmem>>, vector<1x16x128xbf16>
    %6 = vector.shape_cast %5 : vector<1x16x128xbf16> to vector<16x128xbf16>
    %c0_5 = arith.constant 0 : index
    %c0_6 = arith.constant 0 : index
    %c0_7 = arith.constant 0 : index
    %7 = vector.load %arg4[%c0_5, %c0_6, %c0_7] : memref<1x16x128xbf16, #tpu.memory_space<vmem>>, vector<1x16x128xbf16>
    %8 = vector.shape_cast %7 : vector<1x16x128xbf16> to vector<16x128xbf16>
    %9 = vector.extract_strided_slice %4 {offsets = [0, 0], sizes = [16, 32], strides = [1, 1]} : vector<16x128xbf16> to vector<16x32xbf16>
    %10 = vector.extract_strided_slice %6 {offsets = [0, 0], sizes = [16, 32], strides = [1, 1]} : vector<16x128xbf16> to vector<16x32xbf16>
    %11 = vector.extract_strided_slice %8 {offsets = [0, 0], sizes = [16, 32], strides = [1, 1]} : vector<16x128xbf16> to vector<16x32xbf16>
    %cst = arith.constant dense<0.000000e+00> : vector<16x16xf32>
    %12 = tpu.matmul %9, %10, %cst {dimension_numbers = #tpu.dot_dimension_numbers<[1], [1], [0], [0], [0, 0, 1, 0], [], []>} : vector<16x32xbf16>, vector<16x32xbf16>, vector<16x16xf32> -> vector<16x16xf32>
    %cst_8 = arith.constant -1.000000e+30 : f32
    %13 = vector.broadcast %cst_8 : f32 to vector<16x16xf32>
    %14 = arith.select %2, %12, %13 : vector<16x16xi1>, vector<16x16xf32>
    %cst_9 = arith.constant dense<0xFF800000> : vector<16xf32>
    %15 = vector.multi_reduction <maximumf>, %14, %cst_9 [1] : vector<16x16xf32> to vector<16xf32>
    %16 = vector.shape_cast %15 : vector<16xf32> to vector<16x1xf32>
    %17 = vector.broadcast %16 : vector<16x1xf32> to vector<16x16xf32>
    %18 = arith.subf %14, %17 : vector<16x16xf32>
    %19 = math.exp %18 : vector<16x16xf32>
    %cst_10 = arith.constant dense<0.000000e+00> : vector<16xf32>
    %20 = vector.multi_reduction <add>, %19, %cst_10 [1] : vector<16x16xf32> to vector<16xf32>
    %21 = vector.shape_cast %20 : vector<16xf32> to vector<16x1xf32>
    %22 = arith.truncf %19 : vector<16x16xf32> to vector<16x16xbf16>
    %cst_11 = arith.constant dense<0.000000e+00> : vector<16x32xf32>
    %23 = tpu.matmul %22, %11, %cst_11 {dimension_numbers = #tpu.dot_dimension_numbers<[1], [0], [0], [1], [0, 0, 1, 1], [], []>} : vector<16x16xbf16>, vector<16x32xbf16>, vector<16x32xf32> -> vector<16x32xf32>
    %24 = tpu.reciprocal %21 {approx = true} : vector<16x1xf32> -> vector<16x1xf32>
    %25 = vector.broadcast %24 : vector<16x1xf32> to vector<16x32xf32>
    %26 = arith.mulf %23, %25 : vector<16x32xf32>
    %27 = arith.truncf %26 : vector<16x32xf32> to vector<16x32xbf16>
    %c0_12 = arith.constant 0 : index
    %c0_13 = arith.constant 0 : index
    %c0_14 = arith.constant 0 : index
    %28 = vector.load %arg5[%c0_12, %c0_13, %c0_14] : memref<1x16x128xbf16, #tpu.memory_space<vmem>>, vector<1x16x32xbf16>
    %29 = vector.shape_cast %28 : vector<1x16x32xbf16> to vector<16x32xbf16>
    %30 = vector.shape_cast %27 : vector<16x32xbf16> to vector<1x16x32xbf16>
    tpu.vector_store %arg5[%c0_12, %c0_13, %c0_14], %30 {strides = array<i32>} : memref<1x16x128xbf16, #tpu.memory_space<vmem>>, vector<1x16x32xbf16>,
    %31 = vector.extract_strided_slice %4 {offsets = [0, 32], sizes = [16, 32], strides = [1, 1]} : vector<16x128xbf16> to vector<16x32xbf16>
    %32 = vector.extract_strided_slice %6 {offsets = [0, 32], sizes = [16, 32], strides = [1, 1]} : vector<16x128xbf16> to vector<16x32xbf16>
    %33 = vector.extract_strided_slice %8 {offsets = [0, 32], sizes = [16, 32], strides = [1, 1]} : vector<16x128xbf16> to vector<16x32xbf16>
    %cst_15 = arith.constant dense<0.000000e+00> : vector<16x16xf32>
    %34 = tpu.matmul %31, %32, %cst_15 {dimension_numbers = #tpu.dot_dimension_numbers<[1], [1], [0], [0], [0, 0, 1, 0], [], []>} : vector<16x32xbf16>, vector<16x32xbf16>, vector<16x16xf32> -> vector<16x16xf32>
    %cst_16 = arith.constant -1.000000e+30 : f32
    %35 = vector.broadcast %cst_16 : f32 to vector<16x16xf32>
    %36 = arith.select %2, %34, %35 : vector<16x16xi1>, vector<16x16xf32>
    %cst_17 = arith.constant dense<0xFF800000> : vector<16xf32>
    %37 = vector.multi_reduction <maximumf>, %36, %cst_17 [1] : vector<16x16xf32> to vector<16xf32>
    %38 = vector.shape_cast %37 : vector<16xf32> to vector<16x1xf32>
    %39 = vector.broadcast %38 : vector<16x1xf32> to vector<16x16xf32>
    %40 = arith.subf %36, %39 : vector<16x16xf32>
    %41 = math.exp %40 : vector<16x16xf32>
    %cst_18 = arith.constant dense<0.000000e+00> : vector<16xf32>
    %42 = vector.multi_reduction <add>, %41, %cst_18 [1] : vector<16x16xf32> to vector<16xf32>
    %43 = vector.shape_cast %42 : vector<16xf32> to vector<16x1xf32>
    %44 = arith.truncf %41 : vector<16x16xf32> to vector<16x16xbf16>
    %cst_19 = arith.constant dense<0.000000e+00> : vector<16x32xf32>
    %45 = tpu.matmul %44, %33, %cst_19 {dimension_numbers = #tpu.dot_dimension_numbers<[1], [0], [0], [1], [0, 0, 1, 1], [], []>} : vector<16x16xbf16>, vector<16x32xbf16>, vector<16x32xf32> -> vector<16x32xf32>
    %46 = tpu.reciprocal %43 {approx = true} : vector<16x1xf32> -> vector<16x1xf32>
    %47 = vector.broadcast %46 : vector<16x1xf32> to vector<16x32xf32>
    %48 = arith.mulf %45, %47 : vector<16x32xf32>
    %49 = arith.truncf %48 : vector<16x32xf32> to vector<16x32xbf16>
    %c0_20 = arith.constant 0 : index
    %c0_21 = arith.constant 0 : index
    %c32 = arith.constant 32 : index
    %50 = vector.load %arg5[%c0_20, %c0_21, %c32] : memref<1x16x128xbf16, #tpu.memory_space<vmem>>, vector<1x16x32xbf16>
    %51 = vector.shape_cast %50 : vector<1x16x32xbf16> to vector<16x32xbf16>
    %52 = vector.shape_cast %49 : vector<16x32xbf16> to vector<1x16x32xbf16>
    tpu.vector_store %arg5[%c0_20, %c0_21, %c32], %52 {strides = array<i32>} : memref<1x16x128xbf16, #tpu.memory_space<vmem>>, vector<1x16x32xbf16>,
    %53 = vector.extract_strided_slice %4 {offsets = [0, 64], sizes = [16, 32], strides = [1, 1]} : vector<16x128xbf16> to vector<16x32xbf16>
    %54 = vector.extract_strided_slice %6 {offsets = [0, 64], sizes = [16, 32], strides = [1, 1]} : vector<16x128xbf16> to vector<16x32xbf16>
    %55 = vector.extract_strided_slice %8 {offsets = [0, 64], sizes = [16, 32], strides = [1, 1]} : vector<16x128xbf16> to vector<16x32xbf16>
    %cst_22 = arith.constant dense<0.000000e+00> : vector<16x16xf32>
    %56 = tpu.matmul %53, %54, %cst_22 {dimension_numbers = #tpu.dot_dimension_numbers<[1], [1], [0], [0], [0, 0, 1, 0], [], []>} : vector<16x32xbf16>, vector<16x32xbf16>, vector<16x16xf32> -> vector<16x16xf32>
    %cst_23 = arith.constant -1.000000e+30 : f32
    %57 = vector.broadcast %cst_23 : f32 to vector<16x16xf32>
    %58 = arith.select %2, %56, %57 : vector<16x16xi1>, vector<16x16xf32>
    %cst_24 = arith.constant dense<0xFF800000> : vector<16xf32>
    %59 = vector.multi_reduction <maximumf>, %58, %cst_24 [1] : vector<16x16xf32> to vector<16xf32>
    %60 = vector.shape_cast %59 : vector<16xf32> to vector<16x1xf32>
    %61 = vector.broadcast %60 : vector<16x1xf32> to vector<16x16xf32>
    %62 = arith.subf %58, %61 : vector<16x16xf32>
    %63 = math.exp %62 : vector<16x16xf32>
    %cst_25 = arith.constant dense<0.000000e+00> : vector<16xf32>
    %64 = vector.multi_reduction <add>, %63, %cst_25 [1] : vector<16x16xf32> to vector<16xf32>
    %65 = vector.shape_cast %64 : vector<16xf32> to vector<16x1xf32>
    %66 = arith.truncf %63 : vector<16x16xf32> to vector<16x16xbf16>
    %cst_26 = arith.constant dense<0.000000e+00> : vector<16x32xf32>
    %67 = tpu.matmul %66, %55, %cst_26 {dimension_numbers = #tpu.dot_dimension_numbers<[1], [0], [0], [1], [0, 0, 1, 1], [], []>} : vector<16x16xbf16>, vector<16x32xbf16>, vector<16x32xf32> -> vector<16x32xf32>
    %68 = tpu.reciprocal %65 {approx = true} : vector<16x1xf32> -> vector<16x1xf32>
    %69 = vector.broadcast %68 : vector<16x1xf32> to vector<16x32xf32>
    %70 = arith.mulf %67, %69 : vector<16x32xf32>
    %71 = arith.truncf %70 : vector<16x32xf32> to vector<16x32xbf16>
    %c0_27 = arith.constant 0 : index
    %c0_28 = arith.constant 0 : index
    %c64 = arith.constant 64 : index
    %72 = vector.load %arg5[%c0_27, %c0_28, %c64] : memref<1x16x128xbf16, #tpu.memory_space<vmem>>, vector<1x16x32xbf16>
    %73 = vector.shape_cast %72 : vector<1x16x32xbf16> to vector<16x32xbf16>
    %74 = vector.shape_cast %71 : vector<16x32xbf16> to vector<1x16x32xbf16>
    tpu.vector_store %arg5[%c0_27, %c0_28, %c64], %74 {strides = array<i32>} : memref<1x16x128xbf16, #tpu.memory_space<vmem>>, vector<1x16x32xbf16>,
    %75 = vector.extract_strided_slice %4 {offsets = [0, 96], sizes = [16, 32], strides = [1, 1]} : vector<16x128xbf16> to vector<16x32xbf16>
    %76 = vector.extract_strided_slice %6 {offsets = [0, 96], sizes = [16, 32], strides = [1, 1]} : vector<16x128xbf16> to vector<16x32xbf16>
    %77 = vector.extract_strided_slice %8 {offsets = [0, 96], sizes = [16, 32], strides = [1, 1]} : vector<16x128xbf16> to vector<16x32xbf16>
    %cst_29 = arith.constant dense<0.000000e+00> : vector<16x16xf32>
    %78 = tpu.matmul %75, %76, %cst_29 {dimension_numbers = #tpu.dot_dimension_numbers<[1], [1], [0], [0], [0, 0, 1, 0], [], []>} : vector<16x32xbf16>, vector<16x32xbf16>, vector<16x16xf32> -> vector<16x16xf32>
    %cst_30 = arith.constant -1.000000e+30 : f32
    %79 = vector.broadcast %cst_30 : f32 to vector<16x16xf32>
    %80 = arith.select %2, %78, %79 : vector<16x16xi1>, vector<16x16xf32>
    %cst_31 = arith.constant dense<0xFF800000> : vector<16xf32>
    %81 = vector.multi_reduction <maximumf>, %80, %cst_31 [1] : vector<16x16xf32> to vector<16xf32>
    %82 = vector.shape_cast %81 : vector<16xf32> to vector<16x1xf32>
    %83 = vector.broadcast %82 : vector<16x1xf32> to vector<16x16xf32>
    %84 = arith.subf %80, %83 : vector<16x16xf32>
    %85 = math.exp %84 : vector<16x16xf32>
    %cst_32 = arith.constant dense<0.000000e+00> : vector<16xf32>
    %86 = vector.multi_reduction <add>, %85, %cst_32 [1] : vector<16x16xf32> to vector<16xf32>
    %87 = vector.shape_cast %86 : vector<16xf32> to vector<16x1xf32>
    %88 = arith.truncf %85 : vector<16x16xf32> to vector<16x16xbf16>
    %cst_33 = arith.constant dense<0.000000e+00> : vector<16x32xf32>
    %89 = tpu.matmul %88, %77, %cst_33 {dimension_numbers = #tpu.dot_dimension_numbers<[1], [0], [0], [1], [0, 0, 1, 1], [], []>} : vector<16x16xbf16>, vector<16x32xbf16>, vector<16x32xf32> -> vector<16x32xf32>
    %90 = tpu.reciprocal %87 {approx = true} : vector<16x1xf32> -> vector<16x1xf32>
    %91 = vector.broadcast %90 : vector<16x1xf32> to vector<16x32xf32>
    %92 = arith.mulf %89, %91 : vector<16x32xf32>
    %93 = arith.truncf %92 : vector<16x32xf32> to vector<16x32xbf16>
    %c0_34 = arith.constant 0 : index
    %c0_35 = arith.constant 0 : index
    %c96 = arith.constant 96 : index
    %94 = vector.load %arg5[%c0_34, %c0_35, %c96] : memref<1x16x128xbf16, #tpu.memory_space<vmem>>, vector<1x16x32xbf16>
    %95 = vector.shape_cast %94 : vector<1x16x32xbf16> to vector<16x32xbf16>
    %96 = vector.shape_cast %93 : vector<16x32xbf16> to vector<1x16x32xbf16>
    tpu.vector_store %arg5[%c0_34, %c0_35, %c96], %96 {strides = array<i32>} : memref<1x16x128xbf16, #tpu.memory_space<vmem>>, vector<1x16x32xbf16>,
    return
  }
  func.func @transform_0(%arg0: i32, %arg1: i32) -> (i32, i32, i32) {
    %c0_i32 = arith.constant 0 : i32
    %c0_i32_0 = arith.constant 0 : i32
    return %arg0, %c0_i32, %arg1 : i32, i32, i32
  }
  func.func @transform_1(%arg0: i32, %arg1: i32) -> (i32, i32, i32) {
    %c1_i32 = arith.constant 1 : i32
    %0 = arith.addi %arg1, %c1_i32 : i32
    %c0_i32 = arith.constant 0 : i32
    %c0_i32_0 = arith.constant 0 : i32
    return %arg0, %c0_i32, %0 : i32, i32, i32
  }
  func.func @transform_2(%arg0: i32, %arg1: i32) -> (i32, i32, i32) {
    %c2_i32 = arith.constant 2 : i32
    %0 = arith.addi %arg1, %c2_i32 : i32
    %c0_i32 = arith.constant 0 : i32
    %c0_i32_0 = arith.constant 0 : i32
    return %arg0, %c0_i32, %0 : i32, i32, i32
  }
  func.func @transform_3(%arg0: i32, %arg1: i32) -> (i32, i32, i32) {
    %c0_i32 = arith.constant 0 : i32
    %c0_i32_0 = arith.constant 0 : i32
    return %arg0, %c0_i32, %arg1 : i32, i32, i32
  }
}

module attributes {stable_mosaic.version = 11 : i64} {
  func.func @_matmul_kernel(%arg0: i32, %arg1: i32, %arg2: memref<32x128xbf16, #tpu.memory_space<vmem>>, %arg3: memref<128x128xbf16, #tpu.memory_space<vmem>>, %arg4: memref<1x128xf32, #tpu.memory_space<vmem>>, %arg5: memref<32x128xbf16, #tpu.memory_space<vmem>>, %arg6: memref<32x128xbf16, #tpu.memory_space<vmem>>) attributes {dimension_semantics = [#tpu.dimension_semantics<parallel>, #tpu.dimension_semantics<parallel>], iteration_bounds = array<i64: 1, 1>, scalar_prefetch = 0 : i64, scratch_operands = 0 : i64, tpu.core_type = #tpu.core_type<tc>, window_params = [{transform_indices = @transform_0, window_bounds = array<i64: 32, 128>}, {transform_indices = @transform_1, window_bounds = array<i64: 128, 128>}, {transform_indices = @transform_2, window_bounds = array<i64: 1, 128>}, {transform_indices = @transform_3, window_bounds = array<i64: 32, 128>}, {transform_indices = @transform_4, window_bounds = array<i64: 32, 128>}]} {
    %c0 = arith.constant 0 : index
    %c0_0 = arith.constant 0 : index
    %0 = vector.load %arg2[%c0, %c0_0] : memref<32x128xbf16, #tpu.memory_space<vmem>>, vector<32x128xbf16>
    %c0_1 = arith.constant 0 : index
    %c0_2 = arith.constant 0 : index
    %1 = vector.load %arg3[%c0_1, %c0_2] : memref<128x128xbf16, #tpu.memory_space<vmem>>, vector<128x128xbf16>
    %cst = arith.constant dense<0.000000e+00> : vector<32x128xf32>
    %2 = tpu.matmul %0, %1, %cst {dimension_numbers = #tpu.dot_dimension_numbers<[1], [0], [0], [1], [0, 0, 1, 1], [], []>} : vector<32x128xbf16>, vector<128x128xbf16>, vector<32x128xf32> -> vector<32x128xf32>
    %c0_3 = arith.constant 0 : index
    %c0_4 = arith.constant 0 : index
    %3 = vector.load %arg4[%c0_3, %c0_4] : memref<1x128xf32, #tpu.memory_space<vmem>>, vector<1x128xf32>
    %4 = vector.broadcast %3 : vector<1x128xf32> to vector<32x128xf32>
    %5 = arith.addf %2, %4 : vector<32x128xf32>
    %c0_5 = arith.constant 0 : index
    %c0_6 = arith.constant 0 : index
    %6 = vector.load %arg5[%c0_5, %c0_6] : memref<32x128xbf16, #tpu.memory_space<vmem>>, vector<32x128xbf16>
    %7 = arith.extf %6 : vector<32x128xbf16> to vector<32x128xf32>
    %8 = arith.addf %5, %7 : vector<32x128xf32>
    %9 = arith.truncf %8 : vector<32x128xf32> to vector<32x128xbf16>
    %c0_7 = arith.constant 0 : index
    %c0_8 = arith.constant 0 : index
    %10 = vector.load %arg6[%c0_7, %c0_8] : memref<32x128xbf16, #tpu.memory_space<vmem>>, vector<32x128xbf16>
    tpu.vector_store %arg6[%c0_7, %c0_8], %9 {strides = array<i32>} : memref<32x128xbf16, #tpu.memory_space<vmem>>, vector<32x128xbf16>,
    return
  }
  func.func @transform_0(%arg0: i32, %arg1: i32) -> (i32, i32) {
    %c0_i32 = arith.constant 0 : i32
    %c0_i32_0 = arith.constant 0 : i32
    return %arg0, %c0_i32 : i32, i32
  }
  func.func @transform_1(%arg0: i32, %arg1: i32) -> (i32, i32) {
    %c0_i32 = arith.constant 0 : i32
    %c0_i32_0 = arith.constant 0 : i32
    return %c0_i32, %arg1 : i32, i32
  }
  func.func @transform_2(%arg0: i32, %arg1: i32) -> (i32, i32) {
    %c0_i32 = arith.constant 0 : i32
    %c0_i32_0 = arith.constant 0 : i32
    return %c0_i32, %arg1 : i32, i32
  }
  func.func @transform_3(%arg0: i32, %arg1: i32) -> (i32, i32) {
    %c0_i32 = arith.constant 0 : i32
    return %arg0, %arg1 : i32, i32
  }
  func.func @transform_4(%arg0: i32, %arg1: i32) -> (i32, i32) {
    %c0_i32 = arith.constant 0 : i32
    return %arg0, %arg1 : i32, i32
  }
}

module attributes {stable_mosaic.version = 11 : i64} {
  func.func @_ln_linear_kernel(%arg0: i32, %arg1: i32, %arg2: memref<32x128xbf16, #tpu.memory_space<vmem>>, %arg3: memref<1x128xf32, #tpu.memory_space<vmem>>, %arg4: memref<1x128xf32, #tpu.memory_space<vmem>>, %arg5: memref<128x384xbf16, #tpu.memory_space<vmem>>, %arg6: memref<1x384xf32, #tpu.memory_space<vmem>>, %arg7: memref<32x384xbf16, #tpu.memory_space<vmem>>, %arg8: memref<32x128xbf16, #tpu.memory_space<vmem>>) attributes {dimension_semantics = [#tpu.dimension_semantics<parallel>, #tpu.dimension_semantics<arbitrary>], iteration_bounds = array<i64: 1, 1>, scalar_prefetch = 0 : i64, scratch_operands = 1 : i64, tpu.core_type = #tpu.core_type<tc>, window_params = [{transform_indices = @transform_0, window_bounds = array<i64: 32, 128>}, {pipeline_mode = #tpu.pipeline_mode<synchronous>, transform_indices = @transform_1, window_bounds = array<i64: 1, 128>}, {pipeline_mode = #tpu.pipeline_mode<synchronous>, transform_indices = @transform_2, window_bounds = array<i64: 1, 128>}, {transform_indices = @transform_3, window_bounds = array<i64: 128, 384>}, {transform_indices = @transform_4, window_bounds = array<i64: 1, 384>}, {transform_indices = @transform_5, window_bounds = array<i64: 32, 384>}]} {
    %c0_i32 = arith.constant 0 : i32
    %0 = arith.cmpi eq, %arg1, %c0_i32 : i32
    %1 = arith.extui %0 : i1 to i32
    %c0_i32_0 = arith.constant 0 : i32
    %2 = arith.cmpi ne, %1, %c0_i32_0 : i32
    scf.if %2 {
      %c0_8 = arith.constant 0 : index
      %c0_9 = arith.constant 0 : index
      %11 = vector.load %arg2[%c0_8, %c0_9] : memref<32x128xbf16, #tpu.memory_space<vmem>>, vector<32x128xbf16>
      %12 = arith.extf %11 : vector<32x128xbf16> to vector<32x128xf32>
      %cst_10 = arith.constant dense<0.000000e+00> : vector<32xf32>
      %13 = vector.multi_reduction <add>, %12, %cst_10 [1] : vector<32x128xf32> to vector<32xf32>
      %14 = vector.shape_cast %13 : vector<32xf32> to vector<32x1xf32>
      %cst_11 = arith.constant 1.280000e+02 : f32
      %15 = vector.broadcast %cst_11 : f32 to vector<32x1xf32>
      %16 = arith.divf %14, %15 : vector<32x1xf32>
      %17 = vector.broadcast %16 : vector<32x1xf32> to vector<32x128xf32>
      %18 = arith.subf %12, %17 : vector<32x128xf32>
      %19 = arith.mulf %18, %18 : vector<32x128xf32>
      %cst_12 = arith.constant dense<0.000000e+00> : vector<32xf32>
      %20 = vector.multi_reduction <add>, %19, %cst_12 [1] : vector<32x128xf32> to vector<32xf32>
      %21 = vector.shape_cast %20 : vector<32xf32> to vector<32x1xf32>
      %cst_13 = arith.constant 1.280000e+02 : f32
      %22 = vector.broadcast %cst_13 : f32 to vector<32x1xf32>
      %23 = arith.divf %21, %22 : vector<32x1xf32>
      %24 = vector.broadcast %16 : vector<32x1xf32> to vector<32x128xf32>
      %25 = arith.subf %12, %24 : vector<32x128xf32>
      %cst_14 = arith.constant 9.99999997E-7 : f32
      %26 = vector.broadcast %cst_14 : f32 to vector<32x1xf32>
      %27 = arith.addf %23, %26 : vector<32x1xf32>
      %28 = math.rsqrt %27 : vector<32x1xf32>
      %29 = vector.broadcast %28 : vector<32x1xf32> to vector<32x128xf32>
      %30 = arith.mulf %25, %29 : vector<32x128xf32>
      %c0_15 = arith.constant 0 : index
      %c0_16 = arith.constant 0 : index
      %31 = vector.load %arg3[%c0_15, %c0_16] : memref<1x128xf32, #tpu.memory_space<vmem>>, vector<1x128xf32>
      %32 = vector.broadcast %31 : vector<1x128xf32> to vector<32x128xf32>
      %33 = arith.mulf %30, %32 : vector<32x128xf32>
      %c0_17 = arith.constant 0 : index
      %c0_18 = arith.constant 0 : index
      %34 = vector.load %arg4[%c0_17, %c0_18] : memref<1x128xf32, #tpu.memory_space<vmem>>, vector<1x128xf32>
      %35 = vector.broadcast %34 : vector<1x128xf32> to vector<32x128xf32>
      %36 = arith.addf %33, %35 : vector<32x128xf32>
      %37 = arith.truncf %36 : vector<32x128xf32> to vector<32x128xbf16>
      %c0_19 = arith.constant 0 : index
      %c0_20 = arith.constant 0 : index
      %38 = vector.load %arg8[%c0_19, %c0_20] : memref<32x128xbf16, #tpu.memory_space<vmem>>, vector<32x128xbf16>
      tpu.vector_store %arg8[%c0_19, %c0_20], %37 {strides = array<i32>} : memref<32x128xbf16, #tpu.memory_space<vmem>>, vector<32x128xbf16>,
    } else {
    }
    %c0 = arith.constant 0 : index
    %c0_1 = arith.constant 0 : index
    %3 = vector.load %arg8[%c0, %c0_1] : memref<32x128xbf16, #tpu.memory_space<vmem>>, vector<32x128xbf16>
    %c0_2 = arith.constant 0 : index
    %c0_3 = arith.constant 0 : index
    %4 = vector.load %arg5[%c0_2, %c0_3] : memref<128x384xbf16, #tpu.memory_space<vmem>>, vector<128x384xbf16>
    %cst = arith.constant dense<0.000000e+00> : vector<32x384xf32>
    %5 = tpu.matmul %3, %4, %cst {dimension_numbers = #tpu.dot_dimension_numbers<[1], [0], [0], [1], [0, 0, 1, 1], [], []>} : vector<32x128xbf16>, vector<128x384xbf16>, vector<32x384xf32> -> vector<32x384xf32>
    %c0_4 = arith.constant 0 : index
    %c0_5 = arith.constant 0 : index
    %6 = vector.load %arg6[%c0_4, %c0_5] : memref<1x384xf32, #tpu.memory_space<vmem>>, vector<1x384xf32>
    %7 = vector.broadcast %6 : vector<1x384xf32> to vector<32x384xf32>
    %8 = arith.addf %5, %7 : vector<32x384xf32>
    %9 = arith.truncf %8 : vector<32x384xf32> to vector<32x384xbf16>
    %c0_6 = arith.constant 0 : index
    %c0_7 = arith.constant 0 : index
    %10 = vector.load %arg7[%c0_6, %c0_7] : memref<32x384xbf16, #tpu.memory_space<vmem>>, vector<32x384xbf16>
    tpu.vector_store %arg7[%c0_6, %c0_7], %9 {strides = array<i32>} : memref<32x384xbf16, #tpu.memory_space<vmem>>, vector<32x384xbf16>,
    return
  }
  func.func @transform_0(%arg0: i32, %arg1: i32) -> (i32, i32) {
    %c0_i32 = arith.constant 0 : i32
    %c0_i32_0 = arith.constant 0 : i32
    return %arg0, %c0_i32 : i32, i32
  }
  func.func @transform_1(%arg0: i32, %arg1: i32) -> (i32, i32) {
    %c0_i32 = arith.constant 0 : i32
    %c0_i32_0 = arith.constant 0 : i32
    %c0_i32_1 = arith.constant 0 : i32
    return %c0_i32, %c0_i32_0 : i32, i32
  }
  func.func @transform_2(%arg0: i32, %arg1: i32) -> (i32, i32) {
    %c0_i32 = arith.constant 0 : i32
    %c0_i32_0 = arith.constant 0 : i32
    %c0_i32_1 = arith.constant 0 : i32
    return %c0_i32, %c0_i32_0 : i32, i32
  }
  func.func @transform_3(%arg0: i32, %arg1: i32) -> (i32, i32) {
    %c0_i32 = arith.constant 0 : i32
    %c0_i32_0 = arith.constant 0 : i32
    return %c0_i32, %arg1 : i32, i32
  }
  func.func @transform_4(%arg0: i32, %arg1: i32) -> (i32, i32) {
    %c0_i32 = arith.constant 0 : i32
    %c0_i32_0 = arith.constant 0 : i32
    return %c0_i32, %arg1 : i32, i32
  }
  func.func @transform_5(%arg0: i32, %arg1: i32) -> (i32, i32) {
    %c0_i32 = arith.constant 0 : i32
    return %arg0, %arg1 : i32, i32
  }
}

module attributes {stable_mosaic.version = 11 : i64} {
  func.func @_ln_mlp_kernel(%arg0: i32, %arg1: i32, %arg2: memref<32x128xbf16, #tpu.memory_space<vmem>>, %arg3: memref<1x128xf32, #tpu.memory_space<vmem>>, %arg4: memref<1x128xf32, #tpu.memory_space<vmem>>, %arg5: memref<128x512xbf16, #tpu.memory_space<vmem>>, %arg6: memref<1x512xf32, #tpu.memory_space<vmem>>, %arg7: memref<512x128xbf16, #tpu.memory_space<vmem>>, %arg8: memref<1x128xf32, #tpu.memory_space<vmem>>, %arg9: memref<32x128xbf16, #tpu.memory_space<vmem>>, %arg10: memref<32x128xbf16, #tpu.memory_space<vmem>>, %arg11: memref<32x128xf32, #tpu.memory_space<vmem>>, %arg12: memref<32x128xbf16, #tpu.memory_space<vmem>>) attributes {dimension_semantics = [#tpu.dimension_semantics<parallel>, #tpu.dimension_semantics<arbitrary>], iteration_bounds = array<i64: 1, 1>, scalar_prefetch = 0 : i64, scratch_operands = 2 : i64, tpu.core_type = #tpu.core_type<tc>, window_params = [{transform_indices = @transform_0, window_bounds = array<i64: 32, 128>}, {pipeline_mode = #tpu.pipeline_mode<synchronous>, transform_indices = @transform_1, window_bounds = array<i64: 1, 128>}, {pipeline_mode = #tpu.pipeline_mode<synchronous>, transform_indices = @transform_2, window_bounds = array<i64: 1, 128>}, {transform_indices = @transform_3, window_bounds = array<i64: 128, 512>}, {transform_indices = @transform_4, window_bounds = array<i64: 1, 512>}, {transform_indices = @transform_5, window_bounds = array<i64: 512, 128>}, {pipeline_mode = #tpu.pipeline_mode<synchronous>, transform_indices = @transform_6, window_bounds = array<i64: 1, 128>}, {transform_indices = @transform_7, window_bounds = array<i64: 32, 128>}, {transform_indices = @transform_8, window_bounds = array<i64: 32, 128>}]} {
    %c0_i32 = arith.constant 0 : i32
    %0 = arith.cmpi eq, %arg1, %c0_i32 : i32
    %1 = arith.extui %0 : i1 to i32
    %c0_i32_0 = arith.constant 0 : i32
    %2 = arith.cmpi ne, %1, %c0_i32_0 : i32
    scf.if %2 {
      %cst_19 = arith.constant 0.000000e+00 : f32
      %31 = vector.broadcast %cst_19 : f32 to vector<32x128xf32>
      %c0_20 = arith.constant 0 : index
      %c0_21 = arith.constant 0 : index
      %32 = vector.load %arg11[%c0_20, %c0_21] : memref<32x128xf32, #tpu.memory_space<vmem>>, vector<32x128xf32>
      tpu.vector_store %arg11[%c0_20, %c0_21], %31 {strides = array<i32>} : memref<32x128xf32, #tpu.memory_space<vmem>>, vector<32x128xf32>,
      %c0_22 = arith.constant 0 : index
      %c0_23 = arith.constant 0 : index
      %33 = vector.load %arg2[%c0_22, %c0_23] : memref<32x128xbf16, #tpu.memory_space<vmem>>, vector<32x128xbf16>
      %34 = arith.extf %33 : vector<32x128xbf16> to vector<32x128xf32>
      %cst_24 = arith.constant dense<0.000000e+00> : vector<32xf32>
      %35 = vector.multi_reduction <add>, %34, %cst_24 [1] : vector<32x128xf32> to vector<32xf32>
      %36 = vector.shape_cast %35 : vector<32xf32> to vector<32x1xf32>
      %cst_25 = arith.constant 1.280000e+02 : f32
      %37 = vector.broadcast %cst_25 : f32 to vector<32x1xf32>
      %38 = arith.divf %36, %37 : vector<32x1xf32>
      %39 = vector.broadcast %38 : vector<32x1xf32> to vector<32x128xf32>
      %40 = arith.subf %34, %39 : vector<32x128xf32>
      %41 = arith.mulf %40, %40 : vector<32x128xf32>
      %cst_26 = arith.constant dense<0.000000e+00> : vector<32xf32>
      %42 = vector.multi_reduction <add>, %41, %cst_26 [1] : vector<32x128xf32> to vector<32xf32>
      %43 = vector.shape_cast %42 : vector<32xf32> to vector<32x1xf32>
      %cst_27 = arith.constant 1.280000e+02 : f32
      %44 = vector.broadcast %cst_27 : f32 to vector<32x1xf32>
      %45 = arith.divf %43, %44 : vector<32x1xf32>
      %46 = vector.broadcast %38 : vector<32x1xf32> to vector<32x128xf32>
      %47 = arith.subf %34, %46 : vector<32x128xf32>
      %cst_28 = arith.constant 9.99999997E-7 : f32
      %48 = vector.broadcast %cst_28 : f32 to vector<32x1xf32>
      %49 = arith.addf %45, %48 : vector<32x1xf32>
      %50 = math.rsqrt %49 : vector<32x1xf32>
      %51 = vector.broadcast %50 : vector<32x1xf32> to vector<32x128xf32>
      %52 = arith.mulf %47, %51 : vector<32x128xf32>
      %c0_29 = arith.constant 0 : index
      %c0_30 = arith.constant 0 : index
      %53 = vector.load %arg3[%c0_29, %c0_30] : memref<1x128xf32, #tpu.memory_space<vmem>>, vector<1x128xf32>
      %54 = vector.broadcast %53 : vector<1x128xf32> to vector<32x128xf32>
      %55 = arith.mulf %52, %54 : vector<32x128xf32>
      %c0_31 = arith.constant 0 : index
      %c0_32 = arith.constant 0 : index
      %56 = vector.load %arg4[%c0_31, %c0_32] : memref<1x128xf32, #tpu.memory_space<vmem>>, vector<1x128xf32>
      %57 = vector.broadcast %56 : vector<1x128xf32> to vector<32x128xf32>
      %58 = arith.addf %55, %57 : vector<32x128xf32>
      %59 = arith.truncf %58 : vector<32x128xf32> to vector<32x128xbf16>
      %c0_33 = arith.constant 0 : index
      %c0_34 = arith.constant 0 : index
      %60 = vector.load %arg12[%c0_33, %c0_34] : memref<32x128xbf16, #tpu.memory_space<vmem>>, vector<32x128xbf16>
      tpu.vector_store %arg12[%c0_33, %c0_34], %59 {strides = array<i32>} : memref<32x128xbf16, #tpu.memory_space<vmem>>, vector<32x128xbf16>,
    } else {
    }
    %c0 = arith.constant 0 : index
    %c0_1 = arith.constant 0 : index
    %3 = vector.load %arg12[%c0, %c0_1] : memref<32x128xbf16, #tpu.memory_space<vmem>>, vector<32x128xbf16>
    %c0_2 = arith.constant 0 : index
    %c0_3 = arith.constant 0 : index
    %4 = vector.load %arg5[%c0_2, %c0_3] : memref<128x512xbf16, #tpu.memory_space<vmem>>, vector<128x512xbf16>
    %cst = arith.constant dense<0.000000e+00> : vector<32x512xf32>
    %5 = tpu.matmul %3, %4, %cst {dimension_numbers = #tpu.dot_dimension_numbers<[1], [0], [0], [1], [0, 0, 1, 1], [], []>} : vector<32x128xbf16>, vector<128x512xbf16>, vector<32x512xf32> -> vector<32x512xf32>
    %c0_4 = arith.constant 0 : index
    %c0_5 = arith.constant 0 : index
    %6 = vector.load %arg6[%c0_4, %c0_5] : memref<1x512xf32, #tpu.memory_space<vmem>>, vector<1x512xf32>
    %7 = vector.broadcast %6 : vector<1x512xf32> to vector<32x512xf32>
    %8 = arith.addf %5, %7 : vector<32x512xf32>
    %9 = arith.mulf %8, %8 : vector<32x512xf32>
    %10 = arith.mulf %8, %9 : vector<32x512xf32>
    %cst_6 = arith.constant 4.471500e-02 : f32
    %11 = vector.broadcast %cst_6 : f32 to vector<32x512xf32>
    %12 = arith.mulf %11, %10 : vector<32x512xf32>
    %13 = arith.addf %8, %12 : vector<32x512xf32>
    %cst_7 = arith.constant 0.797884583 : f32
    %14 = vector.broadcast %cst_7 : f32 to vector<32x512xf32>
    %15 = arith.mulf %14, %13 : vector<32x512xf32>
    %16 = math.tanh %15 : vector<32x512xf32>
    %cst_8 = arith.constant 1.000000e+00 : f32
    %17 = vector.broadcast %cst_8 : f32 to vector<32x512xf32>
    %18 = arith.addf %17, %16 : vector<32x512xf32>
    %cst_9 = arith.constant 5.000000e-01 : f32
    %19 = vector.broadcast %cst_9 : f32 to vector<32x512xf32>
    %20 = arith.mulf %19, %18 : vector<32x512xf32>
    %21 = arith.mulf %8, %20 : vector<32x512xf32>
    %c0_10 = arith.constant 0 : index
    %c0_11 = arith.constant 0 : index
    %22 = vector.load %arg11[%c0_10, %c0_11] : memref<32x128xf32, #tpu.memory_space<vmem>>, vector<32x128xf32>
    %23 = arith.truncf %21 : vector<32x512xf32> to vector<32x512xbf16>
    %c0_12 = arith.constant 0 : index
    %c0_13 = arith.constant 0 : index
    %24 = vector.load %arg7[%c0_12, %c0_13] : memref<512x128xbf16, #tpu.memory_space<vmem>>, vector<512x128xbf16>
    %cst_14 = arith.constant dense<0.000000e+00> : vector<32x128xf32>
    %25 = tpu.matmul %23, %24, %cst_14 {dimension_numbers = #tpu.dot_dimension_numbers<[1], [0], [0], [1], [0, 0, 1, 1], [], []>} : vector<32x512xbf16>, vector<512x128xbf16>, vector<32x128xf32> -> vector<32x128xf32>
    %26 = arith.addf %22, %25 : vector<32x128xf32>
    %c0_15 = arith.constant 0 : index
    %c0_16 = arith.constant 0 : index
    %27 = vector.load %arg11[%c0_15, %c0_16] : memref<32x128xf32, #tpu.memory_space<vmem>>, vector<32x128xf32>
    tpu.vector_store %arg11[%c0_15, %c0_16], %26 {strides = array<i32>} : memref<32x128xf32, #tpu.memory_space<vmem>>, vector<32x128xf32>,
    %c0_i32_17 = arith.constant 0 : i32
    %28 = arith.cmpi eq, %arg1, %c0_i32_17 : i32
    %29 = arith.extui %28 : i1 to i32
    %c0_i32_18 = arith.constant 0 : i32
    %30 = arith.cmpi ne, %29, %c0_i32_18 : i32
    scf.if %30 {
      %c0_19 = arith.constant 0 : index
      %c0_20 = arith.constant 0 : index
      %31 = vector.load %arg11[%c0_19, %c0_20] : memref<32x128xf32, #tpu.memory_space<vmem>>, vector<32x128xf32>
      %c0_21 = arith.constant 0 : index
      %c0_22 = arith.constant 0 : index
      %32 = vector.load %arg8[%c0_21, %c0_22] : memref<1x128xf32, #tpu.memory_space<vmem>>, vector<1x128xf32>
      %33 = vector.broadcast %32 : vector<1x128xf32> to vector<32x128xf32>
      %34 = arith.addf %31, %33 : vector<32x128xf32>
      %c0_23 = arith.constant 0 : index
      %c0_24 = arith.constant 0 : index
      %35 = vector.load %arg9[%c0_23, %c0_24] : memref<32x128xbf16, #tpu.memory_space<vmem>>, vector<32x128xbf16>
      %36 = arith.extf %35 : vector<32x128xbf16> to vector<32x128xf32>
      %37 = arith.addf %34, %36 : vector<32x128xf32>
      %38 = arith.truncf %37 : vector<32x128xf32> to vector<32x128xbf16>
      %c0_25 = arith.constant 0 : index
      %c0_26 = arith.constant 0 : index
      %39 = vector.load %arg10[%c0_25, %c0_26] : memref<32x128xbf16, #tpu.memory_space<vmem>>, vector<32x128xbf16>
      tpu.vector_store %arg10[%c0_25, %c0_26], %38 {strides = array<i32>} : memref<32x128xbf16, #tpu.memory_space<vmem>>, vector<32x128xbf16>,
    } else {
    }
    return
  }
  func.func @transform_0(%arg0: i32, %arg1: i32) -> (i32, i32) {
    %c0_i32 = arith.constant 0 : i32
    %c0_i32_0 = arith.constant 0 : i32
    return %arg0, %c0_i32 : i32, i32
  }
  func.func @transform_1(%arg0: i32, %arg1: i32) -> (i32, i32) {
    %c0_i32 = arith.constant 0 : i32
    %c0_i32_0 = arith.constant 0 : i32
    %c0_i32_1 = arith.constant 0 : i32
    return %c0_i32, %c0_i32_0 : i32, i32
  }
  func.func @transform_2(%arg0: i32, %arg1: i32) -> (i32, i32) {
    %c0_i32 = arith.constant 0 : i32
    %c0_i32_0 = arith.constant 0 : i32
    %c0_i32_1 = arith.constant 0 : i32
    return %c0_i32, %c0_i32_0 : i32, i32
  }
  func.func @transform_3(%arg0: i32, %arg1: i32) -> (i32, i32) {
    %c0_i32 = arith.constant 0 : i32
    %c0_i32_0 = arith.constant 0 : i32
    return %c0_i32, %arg1 : i32, i32
  }
  func.func @transform_4(%arg0: i32, %arg1: i32) -> (i32, i32) {
    %c0_i32 = arith.constant 0 : i32
    %c0_i32_0 = arith.constant 0 : i32
    return %c0_i32, %arg1 : i32, i32
  }
  func.func @transform_5(%arg0: i32, %arg1: i32) -> (i32, i32) {
    %c0_i32 = arith.constant 0 : i32
    %c0_i32_0 = arith.constant 0 : i32
    return %arg1, %c0_i32 : i32, i32
  }
  func.func @transform_6(%arg0: i32, %arg1: i32) -> (i32, i32) {
    %c0_i32 = arith.constant 0 : i32
    %c0_i32_0 = arith.constant 0 : i32
    %c0_i32_1 = arith.constant 0 : i32
    return %c0_i32, %c0_i32_0 : i32, i32
  }
  func.func @transform_7(%arg0: i32, %arg1: i32) -> (i32, i32) {
    %c0_i32 = arith.constant 0 : i32
    %c0_i32_0 = arith.constant 0 : i32
    return %arg0, %c0_i32 : i32, i32
  }
  func.func @transform_8(%arg0: i32, %arg1: i32) -> (i32, i32) {
    %c0_i32 = arith.constant 0 : i32
    %c0_i32_0 = arith.constant 0 : i32
    return %arg0, %c0_i32 : i32, i32
  }
}

module attributes {stable_mosaic.version = 11 : i64} {
  func.func @_ln_linear_kernel(%arg0: i32, %arg1: i32, %arg2: memref<8x128xbf16, #tpu.memory_space<vmem>>, %arg3: memref<1x128xf32, #tpu.memory_space<vmem>>, %arg4: memref<1x128xf32, #tpu.memory_space<vmem>>, %arg5: memref<128x128xbf16, #tpu.memory_space<vmem>>, %arg6: memref<1x128xf32, #tpu.memory_space<vmem>>, %arg7: memref<8x128xbf16, #tpu.memory_space<vmem>>, %arg8: memref<8x128xbf16, #tpu.memory_space<vmem>>) attributes {dimension_semantics = [#tpu.dimension_semantics<parallel>, #tpu.dimension_semantics<arbitrary>], iteration_bounds = array<i64: 1, 1>, scalar_prefetch = 0 : i64, scratch_operands = 1 : i64, tpu.core_type = #tpu.core_type<tc>, window_params = [{transform_indices = @transform_0, window_bounds = array<i64: 8, 128>}, {pipeline_mode = #tpu.pipeline_mode<synchronous>, transform_indices = @transform_1, window_bounds = array<i64: 1, 128>}, {pipeline_mode = #tpu.pipeline_mode<synchronous>, transform_indices = @transform_2, window_bounds = array<i64: 1, 128>}, {transform_indices = @transform_3, window_bounds = array<i64: 128, 128>}, {transform_indices = @transform_4, window_bounds = array<i64: 1, 128>}, {transform_indices = @transform_5, window_bounds = array<i64: 8, 128>}]} {
    %c0_i32 = arith.constant 0 : i32
    %0 = arith.cmpi eq, %arg1, %c0_i32 : i32
    %1 = arith.extui %0 : i1 to i32
    %c0_i32_0 = arith.constant 0 : i32
    %2 = arith.cmpi ne, %1, %c0_i32_0 : i32
    scf.if %2 {
      %c0_9 = arith.constant 0 : index
      %c0_10 = arith.constant 0 : index
      %13 = vector.load %arg2[%c0_9, %c0_10] : memref<8x128xbf16, #tpu.memory_space<vmem>>, vector<8x128xbf16>
      %14 = arith.extf %13 : vector<8x128xbf16> to vector<8x128xf32>
      %cst_11 = arith.constant dense<0.000000e+00> : vector<8xf32>
      %15 = vector.multi_reduction <add>, %14, %cst_11 [1] : vector<8x128xf32> to vector<8xf32>
      %16 = vector.shape_cast %15 : vector<8xf32> to vector<8x1xf32>
      %cst_12 = arith.constant 1.280000e+02 : f32
      %17 = vector.broadcast %cst_12 : f32 to vector<8x1xf32>
      %18 = arith.divf %16, %17 : vector<8x1xf32>
      %19 = vector.broadcast %18 : vector<8x1xf32> to vector<8x128xf32>
      %20 = arith.subf %14, %19 : vector<8x128xf32>
      %21 = arith.mulf %20, %20 : vector<8x128xf32>
      %cst_13 = arith.constant dense<0.000000e+00> : vector<8xf32>
      %22 = vector.multi_reduction <add>, %21, %cst_13 [1] : vector<8x128xf32> to vector<8xf32>
      %23 = vector.shape_cast %22 : vector<8xf32> to vector<8x1xf32>
      %cst_14 = arith.constant 1.280000e+02 : f32
      %24 = vector.broadcast %cst_14 : f32 to vector<8x1xf32>
      %25 = arith.divf %23, %24 : vector<8x1xf32>
      %26 = vector.broadcast %18 : vector<8x1xf32> to vector<8x128xf32>
      %27 = arith.subf %14, %26 : vector<8x128xf32>
      %cst_15 = arith.constant 9.99999997E-7 : f32
      %28 = vector.broadcast %cst_15 : f32 to vector<8x1xf32>
      %29 = arith.addf %25, %28 : vector<8x1xf32>
      %30 = math.rsqrt %29 : vector<8x1xf32>
      %31 = vector.broadcast %30 : vector<8x1xf32> to vector<8x128xf32>
      %32 = arith.mulf %27, %31 : vector<8x128xf32>
      %c0_16 = arith.constant 0 : index
      %c0_17 = arith.constant 0 : index
      %33 = vector.load %arg3[%c0_16, %c0_17] : memref<1x128xf32, #tpu.memory_space<vmem>>, vector<1x128xf32>
      %34 = vector.broadcast %33 : vector<1x128xf32> to vector<8x128xf32>
      %35 = arith.mulf %32, %34 : vector<8x128xf32>
      %c0_18 = arith.constant 0 : index
      %c0_19 = arith.constant 0 : index
      %36 = vector.load %arg4[%c0_18, %c0_19] : memref<1x128xf32, #tpu.memory_space<vmem>>, vector<1x128xf32>
      %37 = vector.broadcast %36 : vector<1x128xf32> to vector<8x128xf32>
      %38 = arith.addf %35, %37 : vector<8x128xf32>
      %39 = arith.truncf %38 : vector<8x128xf32> to vector<8x128xbf16>
      %c0_20 = arith.constant 0 : index
      %c0_21 = arith.constant 0 : index
      %40 = vector.load %arg8[%c0_20, %c0_21] : memref<8x128xbf16, #tpu.memory_space<vmem>>, vector<8x128xbf16>
      tpu.vector_store %arg8[%c0_20, %c0_21], %39 {strides = array<i32>} : memref<8x128xbf16, #tpu.memory_space<vmem>>, vector<8x128xbf16>,
    } else {
    }
    %c0 = arith.constant 0 : index
    %c0_1 = arith.constant 0 : index
    %3 = vector.load %arg8[%c0, %c0_1] : memref<8x128xbf16, #tpu.memory_space<vmem>>, vector<8x128xbf16>
    %c0_2 = arith.constant 0 : index
    %c0_3 = arith.constant 0 : index
    %4 = vector.load %arg5[%c0_2, %c0_3] : memref<128x128xbf16, #tpu.memory_space<vmem>>, vector<128x128xbf16>
    %cst = arith.constant dense<0.000000e+00> : vector<8x128xf32>
    %5 = tpu.matmul %3, %4, %cst {dimension_numbers = #tpu.dot_dimension_numbers<[1], [0], [0], [1], [0, 0, 1, 1], [], []>} : vector<8x128xbf16>, vector<128x128xbf16>, vector<8x128xf32> -> vector<8x128xf32>
    %c0_4 = arith.constant 0 : index
    %c0_5 = arith.constant 0 : index
    %6 = vector.load %arg6[%c0_4, %c0_5] : memref<1x128xf32, #tpu.memory_space<vmem>>, vector<1x128xf32>
    %7 = vector.broadcast %6 : vector<1x128xf32> to vector<8x128xf32>
    %8 = arith.addf %5, %7 : vector<8x128xf32>
    %cst_6 = arith.constant 0.000000e+00 : f32
    %9 = vector.broadcast %cst_6 : f32 to vector<8x128xf32>
    %10 = arith.maximumf %8, %9 : vector<8x128xf32>
    %11 = arith.truncf %10 : vector<8x128xf32> to vector<8x128xbf16>
    %c0_7 = arith.constant 0 : index
    %c0_8 = arith.constant 0 : index
    %12 = vector.load %arg7[%c0_7, %c0_8] : memref<8x128xbf16, #tpu.memory_space<vmem>>, vector<8x128xbf16>
    tpu.vector_store %arg7[%c0_7, %c0_8], %11 {strides = array<i32>} : memref<8x128xbf16, #tpu.memory_space<vmem>>, vector<8x128xbf16>,
    return
  }
  func.func @transform_0(%arg0: i32, %arg1: i32) -> (i32, i32) {
    %c0_i32 = arith.constant 0 : i32
    %c0_i32_0 = arith.constant 0 : i32
    return %arg0, %c0_i32 : i32, i32
  }
  func.func @transform_1(%arg0: i32, %arg1: i32) -> (i32, i32) {
    %c0_i32 = arith.constant 0 : i32
    %c0_i32_0 = arith.constant 0 : i32
    %c0_i32_1 = arith.constant 0 : i32
    return %c0_i32, %c0_i32_0 : i32, i32
  }
  func.func @transform_2(%arg0: i32, %arg1: i32) -> (i32, i32) {
    %c0_i32 = arith.constant 0 : i32
    %c0_i32_0 = arith.constant 0 : i32
    %c0_i32_1 = arith.constant 0 : i32
    return %c0_i32, %c0_i32_0 : i32, i32
  }
  func.func @transform_3(%arg0: i32, %arg1: i32) -> (i32, i32) {
    %c0_i32 = arith.constant 0 : i32
    %c0_i32_0 = arith.constant 0 : i32
    return %c0_i32, %arg1 : i32, i32
  }
  func.func @transform_4(%arg0: i32, %arg1: i32) -> (i32, i32) {
    %c0_i32 = arith.constant 0 : i32
    %c0_i32_0 = arith.constant 0 : i32
    return %c0_i32, %arg1 : i32, i32
  }
  func.func @transform_5(%arg0: i32, %arg1: i32) -> (i32, i32) {
    %c0_i32 = arith.constant 0 : i32
    return %arg0, %arg1 : i32, i32
  }
}

</mosaic_0001>

<llo_original>
// kernel: vitb16_forward.13
$region0: #{vitb16_forward.13}
  #allocation0 [shape = 'u32[]', space=smem, size = 0x4, offset = 0x4, fixed_abs, tag = 'smem constant byte address 0x4 - core index']
  #allocation1 [shape = 'u32[144,128]{1,0:T(1,128)}', space=vmem, size = 0x12000, scoped, tag = 'internal scratch']
  %s0 = inlined_call_operand.vmem [shape: bf16[32,128], index: 0, kind: input, shape index: {}]
  %s1 = inlined_call_operand.vmem [shape: bf16[128,128], index: 1, kind: input, shape index: {}]
  %s2 = inlined_call_operand.vmem [shape: f32[1,128], index: 2, kind: input, shape index: {}]
  %s3 = inlined_call_operand.vmem [shape: bf16[32,128], index: 3, kind: input, shape index: {}]
  %s4 = inlined_call_operand.vmem [shape: bf16[32,128], index: 4, kind: output, shape index: {}]
  %s5 = sld [smem:[#allocation0]]
  $region26: #{vitb16_forward.13} parent=0
    _
  %s7 = ssub.s32 1, %s5
  %s8 = scalar_select 0, %s7, %s5
  // Predicated region
  $region2: #{vitb16_forward.13} parent=0 // pred_check
    _
  $region3: #{vitb16_forward.13} parent=0 // pred_check_branch
    %10 = sbr.rel (0) target = $region5
  $region4: #{vitb16_forward.13} parent=0 // pred_region
    _
  $region5: #{vitb16_forward.13} parent=0 // pred_fallthru
    _
  // Predicated region
  $region6: #{vitb16_forward.13} parent=0 // pred_check
    _
  $region7: #{vitb16_forward.13} parent=0 // pred_check_branch
    %12 = sbr.rel (0) target = $region9
  $region8: #{vitb16_forward.13} parent=0 // pred_region
    _
  $region9: #{vitb16_forward.13} parent=0 // pred_fallthru
    _
  // Predicated region
  $region10: #{vitb16_forward.13} parent=0 // pred_check
    _
  $region11: #{vitb16_forward.13} parent=0 // pred_check_branch
    %14 = sbr.rel (0) target = $region13
  $region12: #{vitb16_forward.13} parent=0 // pred_region
    _
  $region13: #{vitb16_forward.13} parent=0 // pred_fallthru
    _
  // Predicated region
  $region14: #{vitb16_forward.13} parent=0 // pred_check
    _
  $region15: #{vitb16_forward.13} parent=0 // pred_check_branch
    %16 = sbr.rel (0) target = $region17
  $region16: #{vitb16_forward.13} parent=0 // pred_region
    _
  $region17: #{vitb16_forward.13} parent=0 // pred_fallthru
    _
  %v18 = vld [vmem:[%s0] sm:$0xf]
  %v19 = vld [vmem:[%s0 + $0x4] sm:$0xf]
  %v20 = vld [vmem:[%s0 + $0x8] sm:$0xf]
  %v21 = vld [vmem:[%s0 + $0xc] sm:$0xf]
  %v22 = vld [vmem:[%s1] sm:$0xf]
  %v23 = vld [vmem:[%s1 + $0x4] sm:$0xf]
  %v24 = vld [vmem:[%s1 + $0x8] sm:$0xf]
  %v25 = vld [vmem:[%s1 + $0xc] sm:$0xf]
  %v26 = vld [vmem:[%s1 + $0x10] sm:$0xf]
  %v27 = vld [vmem:[%s1 + $0x14] sm:$0xf]
  %v28 = vld [vmem:[%s1 + $0x18] sm:$0xf]
  %v29 = vld [vmem:[%s1 + $0x1c] sm:$0xf]
  %v30 = vld [vmem:[%s1 + $0x20] sm:$0xf]
  %v31 = vld [vmem:[%s1 + $0x24] sm:$0xf]
  %v32 = vld [vmem:[%s1 + $0x28] sm:$0xf]
  %v33 = vld [vmem:[%s1 + $0x2c] sm:$0xf]
  %v34 = vld [vmem:[%s1 + $0x30] sm:$0xf]
  %v35 = vld [vmem:[%s1 + $0x34] sm:$0xf]
  %v36 = vld [vmem:[%s1 + $0x38] sm:$0xf]
  %v37 = vld [vmem:[%s1 + $0x3c] sm:$0xf]
  %v38 = vld [vmem:[%s2] sm:$0x1]
  %v40 = vlaneseq
  %v41 = vshrl.u32 %v40, 7
  %v42 = vsub.s32 0, %v41
  %v43 = vrot.slane %v38, %v42
  %v49 = vunpack.c.l.b16 %v18
  %v50 = vunpack.c.l.b16 %v19
  %v51 = vunpack.c.l.b16 %v20
  %v52 = vunpack.c.l.b16 %v21
  %v53 = vpack.c.b16 %v50, %v49
  %v54 = vpack.c.b16 %v52, %v51
  %v73 = vunpack.c.l.b16 %v22
  %v74 = vunpack.c.l.b16 %v23
  %v75 = vunpack.c.l.b16 %v24
  %v76 = vunpack.c.l.b16 %v25
  %v77 = vunpack.c.l.b16 %v26
  %v78 = vunpack.c.l.b16 %v27
  %v79 = vunpack.c.l.b16 %v28
  %v80 = vunpack.c.l.b16 %v29
  %v81 = vunpack.c.l.b16 %v30
  %v82 = vunpack.c.l.b16 %v31
  %v83 = vunpack.c.l.b16 %v32
  %v84 = vunpack.c.l.b16 %v33
  %v85 = vunpack.c.l.b16 %v34
  %v86 = vunpack.c.l.b16 %v35
  %v87 = vunpack.c.l.b16 %v36
  %v88 = vunpack.c.l.b16 %v37
  %v89 = vpack.c.b16 %v74, %v73
  %v90 = vpack.c.b16 %v76, %v75
  %v91 = vpack.c.b16 %v78, %v77
  %v92 = vpack.c.b16 %v80, %v79
  %v93 = vpack.c.b16 %v82, %v81
  %v94 = vpack.c.b16 %v84, %v83
  %v95 = vpack.c.b16 %v86, %v85
  %v96 = vpack.c.b16 %v88, %v87
  %105 = vmatprep.subr.bf16.mxu0 0
  %106 = vmatpush1.bf16.msra.mxu0 %v89
  %107 = vmatprep.subr.bf16.mxu0 0
  %108 = vmatpush1.bf16.msra.mxu0 %v90
  %109 = vmatprep.subr.bf16.mxu0 0
  %110 = vmatpush1.bf16.msra.mxu0 %v91
  %111 = vmatprep.subr.bf16.mxu0 0
  %112 = vmatpush1.bf16.msra.mxu0 %v92
  %113 = vmatprep.subr.bf16.mxu0 0
  %114 = vmatpush1.bf16.msra.mxu0 %v93
  %115 = vmatprep.subr.bf16.mxu0 0
  %116 = vmatpush1.bf16.msra.mxu0 %v94
  %117 = vmatprep.subr.bf16.mxu0 0
  %118 = vmatpush1.bf16.msra.mxu0 %v95
  %119 = vmatprep.subr.bf16.mxu0 0
  %120 = vmatpush1.bf16.msra.mxu0 %v96
  %121 = vmatprep.subr.bf16.mxu0 0
  %122 = vmatpush1.bf16.msra.mxu0 0
  %123 = vmatprep.subr.bf16.mxu0 0
  %124 = vmatpush1.bf16.msra.mxu0 0
  %125 = vmatprep.subr.bf16.mxu0 0
  %126 = vmatpush1.bf16.msra.mxu0 0
  %127 = vmatprep.subr.bf16.mxu0 0
  %128 = vmatpush1.bf16.msra.mxu0 0
  %129 = vmatprep.subr.bf16.mxu0 0
  %130 = vmatpush1.bf16.msra.mxu0 0
  %131 = vmatprep.subr.bf16.mxu0 0
  %132 = vmatpush1.bf16.msra.mxu0 0
  %133 = vmatprep.subr.bf16.mxu0 0
  %134 = vmatpush1.bf16.msra.mxu0 0
  %135 = vmatprep.subr.bf16.mxu0 0
  %136 = vmatpush1.bf16.msra.mxu0 0
  %137 = vmatprep.mubr.bf16.mxu0 0
  %138 = vmatmul.mubr.bf16.gmra.mrb[0].mxu0 %v53
  %v139 = vpop.f32.mrb[0].mxu0
  %v140 = vadd.f32 %v43, %v139
  %v141 = vpop.f32.mrb[0].mxu0
  %v142 = vpop.f32.mrb[0].mxu0
  %v143 = vadd.f32 %v43, %v142
  %v144 = vpop.f32.mrb[0].mxu0
  %145 = vmatprep.mubr.bf16.mxu0 0
  %146 = vmatmul.mubr.bf16.gmra.mrb[0].mxu0 %v54
  %v147 = vpop.f32.mrb[0].mxu0
  %v148 = vadd.f32 %v43, %v147
  %v149 = vpop.f32.mrb[0].mxu0
  %v150 = vpop.f32.mrb[0].mxu0
  %v151 = vadd.f32 %v43, %v150
  %v152 = vpop.f32.mrb[0].mxu0
  %153 = vdwg.mxu0
  %v154 = vld [vmem:[%s3] sm:$0xf]
  %v155 = vld [vmem:[%s3 + $0x4] sm:$0xf]
  %v156 = vld [vmem:[%s3 + $0x8] sm:$0xf]
  %v157 = vld [vmem:[%s3 + $0xc] sm:$0xf]
  %v158 = vunpack.c.l.bf16 %v154
  %v159 = vunpack.c.l.bf16 %v155
  %v160 = vunpack.c.l.bf16 %v156
  %v161 = vunpack.c.l.bf16 %v157
  %v162 = vadd.f32 %v140, %v158
  %v163 = vadd.f32 %v143, %v159
  %v164 = vadd.f32 %v148, %v160
  %v165 = vadd.f32 %v151, %v161
  %v166 = vpack.c.bf16 %v163, %v162
  %v167 = vpack.c.bf16 %v165, %v164
  %v170 = vunpack.c.l.b16 %v166
  %v171 = vunpack.c.h.b16 %v166
  %v172 = vunpack.c.l.b16 %v167
  %v173 = vunpack.c.h.b16 %v167
  %v174 = vpack.c.b16 %v170, %v170
  %v175 = vpack.c.b16 %v171, %v171
  %v176 = vpack.c.b16 %v172, %v172
  %v177 = vpack.c.b16 %v173, %v173
  %182 = vst [vmem:[%s4] sm:$0xf] %v174
  %183 = vst [vmem:[%s4 + $0x4] sm:$0xf] %v175
  %184 = vst [vmem:[%s4 + $0x8] sm:$0xf] %v176
  %185 = vst [vmem:[%s4 + $0xc] sm:$0xf] %v177
  // Predicated region
  $region18: #{vitb16_forward.13} parent=0 // pred_check
    _
  $region19: #{vitb16_forward.13} parent=0 // pred_check_branch
    %187 = sbr.rel (0) target = $region21
  $region20: #{vitb16_forward.13} parent=0 // pred_region
    _
  $region21: #{vitb16_forward.13} parent=0 // pred_fallthru
    _
  // Predicated region
  $region22: #{vitb16_forward.13} parent=0 // pred_check
    _
  $region23: #{vitb16_forward.13} parent=0 // pred_check_branch
    %189 = sbr.rel (0) target = $region25
  $region24: #{vitb16_forward.13} parent=0 // pred_region
    _
  $region25: #{vitb16_forward.13} parent=0 // pred_fallthru
    _

// kernel: vitb16_forward.12
$region0: #{vitb16_forward.12}
  #allocation0 [shape = 'u32[]', space=smem, size = 0x4, offset = 0x4, fixed_abs, tag = 'smem constant byte address 0x4 - core index']
  #allocation1 [shape = 'u32[144,128]{1,0:T(1,128)}', space=vmem, size = 0x12000, scoped, tag = 'internal scratch']
  %s0 = inlined_call_operand.vmem [shape: bf16[2,16,384], index: 0, kind: input, shape index: {}, may-alias: {0,1,2}]
  %s1 = inlined_call_operand.vmem [shape: bf16[2,16,384], index: 1, kind: input, shape index: {}, may-alias: {0,1,2}]
  %s2 = inlined_call_operand.vmem [shape: bf16[2,16,384], index: 2, kind: input, shape index: {}, may-alias: {0,1,2}]
  %s3 = inlined_call_operand.vmem [shape: bf16[2,16,128], index: 3, kind: output, shape index: {}]
  %s4 = sld [smem:[#allocation0]]
  $region168: #{vitb16_forward.12} parent=0
    _
  %s6 = ssub.s32 1, %s4
  %s7 = scalar_select 0, %s6, %s4
  $region1: #{vitb16_forward.12} parent=0
    #allocation2 [shape = 'u8[8192]{0}', space=vmem, size = 0x2000, scoped, tag = 'input window, operand 0']
    #allocation3 [shape = 'u8[8192]{0}', space=vmem, size = 0x2000, scoped, tag = 'input window, operand 1']
    #allocation4 [shape = 'u8[8192]{0}', space=vmem, size = 0x2000, scoped, tag = 'input window, operand 2']
    loop: start=0, step=1, limit=4
    $region2: #{vitb16_forward.12} parent=1 // loop_pre_header
      _
    $region3: #{vitb16_forward.12} parent=1 // loop_header
      %s9 = sphi 0, %s13
      %p10 = scmp.ge.s32.totalorder %s9, 4
      %s16 = sphi 0, %s28
      %s17 = sphi 0, %s24
      %s18 = sphi 0, %s16
      %s19 = sphi 0, %s17
      %s20 = sphi 0, %s18
      %s21 = sphi 0, %s19
      %s33 = sphi 0, %s35
      %s36 = sphi 0, %s33
      %s37 = sphi 0, %s36
      %s53 = sphi 0, %s37
      %s63 = sphi 0, %s65
      %s66 = sphi 0, %s63
      %s67 = sphi 0, %s66
      %s83 = sphi 0, %s67
      %s93 = sphi 0, %s95
      %s96 = sphi 0, %s93
      %s97 = sphi 0, %s96
      %s113 = sphi 0, %s97
      %s121 = sphi 0, %s123
      %s124 = sphi 0, %s121
      %s125 = sphi 0, %s124
      %s141 = sphi 0, %s125
    $region4: #{vitb16_forward.12} parent=1 // loop_header_branch
      %12 = sbr.rel (%p10) target = $region8
    $region5: #{vitb16_forward.12} parent=1 // loop_body
      %s14 = ssub.s32 %s9, 1
      %s15 = ssub.s32 %s9, 2
      %s22 = sadd.s32 1, %s17
      %p23 = scmp.ge.s32.totalorder %s22, 1
      %s24 = scalar_select %p23, 0, %s22
      %s25 = sadd.s32 1, %s16
      %s26 = scalar_select %p23, %s25, %s16
      %p27 = scmp.ge.s32.totalorder %s26, 2
      %s28 = scalar_select %p27, 0, %s26
      %s29 = ssub.s32 %s16, %s28
      %s30 = ssub.s32 %s17, %s24
      %s31 = sor.u32 %s29, %s30
      %p32 = scmp.eq.s32.totalorder %s31, 0
      %s34 = sadd.s32 %s33, 1
      %s35 = scalar_select %p32, %s33, %s34
      %p38 = pneg %p32
      %p39 = scmp.eq.s32.totalorder %s9, 1
      %p40 = por %p38, %p39
      %p41 = scmp.ne.s32.totalorder %s33, %s36
      %p42 = scmp.eq.s32.totalorder %s9, 0
      %p43 = por %p41, %p42
      %p44 = scmp.ne.s32.totalorder %s33, %s36
      %p45 = scmp.eq.s32.totalorder %s14, 1
      %p46 = por %p44, %p45
      %p47 = scmp.ne.s32.totalorder %s36, %s37
      %p48 = scmp.eq.s32.totalorder %s14, 0
      %p49 = por %p47, %p48
      %p50 = scmp.ne.s32.totalorder %s36, %s37
      %p51 = scmp.eq.s32.totalorder %s15, 1
      %p52 = por %p50, %p51
      %p54 = scmp.ne.s32.totalorder %s37, %s53
      %p55 = scmp.eq.s32.totalorder %s15, 0
      %p56 = por %p54, %p55
      %s57 = sadd.s32 %s17, 1
      %s58 = sadd.s32 %s24, 1
      %s59 = ssub.s32 %s16, %s28
      %s60 = ssub.s32 %s57, %s58
      %s61 = sor.u32 %s59, %s60
      %p62 = scmp.eq.s32.totalorder %s61, 0
      %s64 = sadd.s32 %s63, 1
      %s65 = scalar_select %p62, %s63, %s64
      %p68 = pneg %p62
      %p69 = scmp.eq.s32.totalorder %s9, 1
      %p70 = por %p68, %p69
      %p71 = scmp.ne.s32.totalorder %s63, %s66
      %p72 = scmp.eq.s32.totalorder %s9, 0
      %p73 = por %p71, %p72
      %p74 = scmp.ne.s32.totalorder %s63, %s66
      %p75 = scmp.eq.s32.totalorder %s14, 1
      %p76 = por %p74, %p75
      %p77 = scmp.ne.s32.totalorder %s66, %s67
      %p78 = scmp.eq.s32.totalorder %s14, 0
      %p79 = por %p77, %p78
      %p80 = scmp.ne.s32.totalorder %s66, %s67
      %p81 = scmp.eq.s32.totalorder %s15, 1
      %p82 = por %p80, %p81
      %p84 = scmp.ne.s32.totalorder %s67, %s83
      %p85 = scmp.eq.s32.totalorder %s15, 0
      %p86 = por %p84, %p85
      %s87 = sadd.s32 %s17, 2
      %s88 = sadd.s32 %s24, 2
      %s89 = ssub.s32 %s16, %s28
      %s90 = ssub.s32 %s87, %s88
      %s91 = sor.u32 %s89, %s90
      %p92 = scmp.eq.s32.totalorder %s91, 0
      %s94 = sadd.s32 %s93, 1
      %s95 = scalar_select %p92, %s93, %s94
      %p98 = pneg %p92
      %p99 = scmp.eq.s32.totalorder %s9, 1
      %p100 = por %p98, %p99
      %p101 = scmp.ne.s32.totalorder %s93, %s96
      %p102 = scmp.eq.s32.totalorder %s9, 0
      %p103 = por %p101, %p102
      %p104 = scmp.ne.s32.totalorder %s93, %s96
      %p105 = scmp.eq.s32.totalorder %s14, 1
      %p106 = por %p104, %p105
      %p107 = scmp.ne.s32.totalorder %s96, %s97
      %p108 = scmp.eq.s32.totalorder %s14, 0
      %p109 = por %p107, %p108
      %p110 = scmp.ne.s32.totalorder %s96, %s97
      %p111 = scmp.eq.s32.totalorder %s15, 1
      %p112 = por %p110, %p111
      %p114 = scmp.ne.s32.totalorder %s97, %s113
      %p115 = scmp.eq.s32.totalorder %s15, 0
      %p116 = por %p114, %p115
      %s117 = ssub.s32 %s16, %s28
      %s118 = ssub.s32 %s17, %s24
      %s119 = sor.u32 %s117, %s118
      %p120 = scmp.eq.s32.totalorder %s119, 0
      %s122 = sadd.s32 %s121, 1
      %s123 = scalar_select %p120, %s121, %s122
      %p126 = pneg %p120
      %p127 = scmp.eq.s32.totalorder %s9, 1
      %p128 = por %p126, %p127
      %p129 = scmp.ne.s32.totalorder %s121, %s124
      %p130 = scmp.eq.s32.totalorder %s9, 0
      %p131 = por %p129, %p130
      %p132 = scmp.ne.s32.totalorder %s121, %s124
      %p133 = scmp.eq.s32.totalorder %s14, 1
      %p134 = por %p132, %p133
      %p135 = scmp.ne.s32.totalorder %s124, %s125
      %p136 = scmp.eq.s32.totalorder %s14, 0
      %p137 = por %p135, %p136
      %p138 = scmp.ne.s32.totalorder %s124, %s125
      %p139 = scmp.eq.s32.totalorder %s15, 1
      %p140 = por %p138, %p139
      %p142 = scmp.ne.s32.totalorder %s125, %s141
      %p143 = scmp.eq.s32.totalorder %s15, 0
      %p144 = por %p142, %p143
      %p145 = scmp.le.s32.totalorder 1, %s9
      %p146 = scmp.lt.s32.totalorder %s9, 3
      %p147 = pnand %p145, %p146
      %p148 = pneg %p147
      // Predicated region
      $region9: #{vitb16_forward.12} parent=5 // pred_check
        _
      $region10: #{vitb16_forward.12} parent=5 // pred_check_branch
        %150 = sbr.rel (%p147) target = $region12
      $region11: #{vitb16_forward.12} parent=5 // pred_region
        %s151 = ssub.s32 %s9, 1
      $region12: #{vitb16_forward.12} parent=5 // pred_fallthru
        _
      %p152 = scmp.lt.s32.totalorder %s9, 2
      // Predicated region
      $region13: #{vitb16_forward.12} parent=5 // pred_check
        %p153 = pneg %p152
      $region14: #{vitb16_forward.12} parent=5 // pred_check_branch
        %155 = sbr.rel (%p153) target = $region16
      $region15: #{vitb16_forward.12} parent=5 // pred_region
        // Predicated region
        $region17: #{vitb16_forward.12} parent=15 // pred_check
          %p156 = pneg %p43
        $region18: #{vitb16_forward.12} parent=15 // pred_check_branch
          %158 = sbr.rel (%p156) target = $region20
        $region19: #{vitb16_forward.12} parent=15 // pred_region
          %s159 = sand.u32 %s33, 1
          %s160 = sand.u32 %s33, 1
          %s161 = smul.addr %s160, 8
          %s162 = scalar_lea.vmem [#allocation2], %s161
          %s163 = smul.addr %s16, 6
          %s164 = sadd.s32 %s17, %s163
          %s165 = smul.addr %s164, 4
          %s166 = scalar_lea.vmem %s0, %s165
          // Predicated region
          $region21: #{vitb16_forward.12} parent=19 // pred_check
            _
          $region22: #{vitb16_forward.12} parent=19 // pred_check_branch
            %168 = sbr.rel (0) target = $region24
          $region23: #{vitb16_forward.12} parent=19 // pred_region
            // Predicated region
            $region25: #{vitb16_forward.12} parent=23 // pred_check
              _
            $region26: #{vitb16_forward.12} parent=23 // pred_check_branch
              %170 = sbr.rel target = $region28
            $region27: #{vitb16_forward.12} parent=23 // pred_region
              // Predicated region
              $region40: #{vitb16_forward.12} parent=27 // pred_check
                _
              $region41: #{vitb16_forward.12} parent=27 // pred_check_branch
                %187 = sbr.rel (0) target = $region43
              $region42: #{vitb16_forward.12} parent=27 // pred_region
                loop: start=0, step=1, limit=1
                $region44: #{vitb16_forward.12} parent=42 // loop_pre_header
                  _
                $region45: #{vitb16_forward.12} parent=42 // loop_header
                  %s189 = sphi 0, %s193
                  %p190 = scmp.ge.s32.totalorder %s189, 1
                  %s194 = sphi %s166, %s166
                  %s195 = sphi %s162, %s162
                $region46: #{vitb16_forward.12} parent=42 // loop_header_branch
                  %192 = sbr.rel (%p190) target = $region50
                $region47: #{vitb16_forward.12} parent=42 // loop_body
                  _
                $region48: #{vitb16_forward.12} parent=42 // loop_footer
                  %s193 = sadd.s32 1, %s189
                $region49: #{vitb16_forward.12} parent=42 // loop_footer_branch
                  %188 = sbr.rel target = $region45
                $region50: #{vitb16_forward.12} parent=42 // loop_exit
                  _
                loop: start=0, step=1, limit=1
                $region51: #{vitb16_forward.12} parent=42 // loop_pre_header
                  _
                $region52: #{vitb16_forward.12} parent=42 // loop_header
                  %s198 = sphi 0, %s202
                  %p199 = scmp.ge.s32.totalorder %s198, 1
                  %s203 = sphi %s166, %s166
                  %s204 = sphi %s162, %s162
                $region53: #{vitb16_forward.12} parent=42 // loop_header_branch
                  %201 = sbr.rel (%p199) target = $region57
                $region54: #{vitb16_forward.12} parent=42 // loop_body
                  %v205 = vld [vmem:[%s203] sm:$0xf]
                  %206 = vst [vmem:[%s204] sm:$0xf] %v205
                  %v207 = vld [vmem:[%s203 + $0xc] sm:$0xf]
                  %208 = vst [vmem:[%s204 + $0x4] sm:$0xf] %v207
                $region55: #{vitb16_forward.12} parent=42 // loop_footer
                  %s202 = sadd.s32 1, %s198
                $region56: #{vitb16_forward.12} parent=42 // loop_footer_branch
                  %197 = sbr.rel target = $region52
                $region57: #{vitb16_forward.12} parent=42 // loop_exit
                  _
              $region43: #{vitb16_forward.12} parent=27 // pred_fallthru
                _
            $region28: #{vitb16_forward.12} parent=23 // pred_fallthru
              _
            // Predicated region
            $region29: #{vitb16_forward.12} parent=23 // pred_check
              _
            $region30: #{vitb16_forward.12} parent=23 // pred_check_branch
              %172 = sbr.rel (0) target = $region32
            $region31: #{vitb16_forward.12} parent=23 // pred_region
              loop: start=0, step=1, limit=1
              $region33: #{vitb16_forward.12} parent=31 // loop_pre_header
                _
              $region34: #{vitb16_forward.12} parent=31 // loop_header
                %s175 = sphi 0, %s179
                %p176 = scmp.ge.s32.totalorder %s175, 1
                %s180 = sphi %s166, %s166
                %s181 = sphi %s162, %s162
              $region35: #{vitb16_forward.12} parent=31 // loop_header_branch
                %178 = sbr.rel (%p176) target = $region39
              $region36: #{vitb16_forward.12} parent=31 // loop_body
                %v182 = vld [vmem:[%s180] sm:$0xf]
                %183 = vst [vmem:[%s181] sm:$0xf] %v182
                %v184 = vld [vmem:[%s180 + $0xc] sm:$0xf]
                %185 = vst [vmem:[%s181 + $0x4] sm:$0xf] %v184
              $region37: #{vitb16_forward.12} parent=31 // loop_footer
                %s179 = sadd.s32 1, %s175
              $region38: #{vitb16_forward.12} parent=31 // loop_footer_branch
                %174 = sbr.rel target = $region34
              $region39: #{vitb16_forward.12} parent=31 // loop_exit
                _
            $region32: #{vitb16_forward.12} parent=23 // pred_fallthru
              _
          $region24: #{vitb16_forward.12} parent=19 // pred_fallthru
            _
          %209 = vnop
        $region20: #{vitb16_forward.12} parent=15 // pred_fallthru
          _
        // Predicated region
        $region58: #{vitb16_forward.12} parent=15 // pred_check
          %p210 = pneg %p73
        $region59: #{vitb16_forward.12} parent=15 // pred_check_branch
          %212 = sbr.rel (%p210) target = $region61
        $region60: #{vitb16_forward.12} parent=15 // pred_region
          %s213 = sand.u32 %s63, 1
          %s214 = sand.u32 %s63, 1
          %s215 = smul.addr %s214, 8
          %s216 = scalar_lea.vmem [#allocation3], %s215
          %s217 = sadd.s32 %s17, 1
          %s218 = smul.addr %s16, 6
          %s219 = sadd.s32 %s217, %s218
          %s220 = smul.addr %s219, 4
          %s221 = scalar_lea.vmem %s1, %s220
          // Predicated region
          $region62: #{vitb16_forward.12} parent=60 // pred_check
            _
          $region63: #{vitb16_forward.12} parent=60 // pred_check_branch
            %223 = sbr.rel (0) target = $region65
          $region64: #{vitb16_forward.12} parent=60 // pred_region
            // Predicated region
            $region66: #{vitb16_forward.12} parent=64 // pred_check
              _
            $region67: #{vitb16_forward.12} parent=64 // pred_check_branch
              %225 = sbr.rel target = $region69
            $region68: #{vitb16_forward.12} parent=64 // pred_region
              // Predicated region
              $region81: #{vitb16_forward.12} parent=68 // pred_check
                _
              $region82: #{vitb16_forward.12} parent=68 // pred_check_branch
                %242 = sbr.rel (0) target = $region84
              $region83: #{vitb16_forward.12} parent=68 // pred_region
                loop: start=0, step=1, limit=1
                $region85: #{vitb16_forward.12} parent=83 // loop_pre_header
                  _
                $region86: #{vitb16_forward.12} parent=83 // loop_header
                  %s244 = sphi 0, %s248
                  %p245 = scmp.ge.s32.totalorder %s244, 1
                  %s249 = sphi %s221, %s221
                  %s250 = sphi %s216, %s216
                $region87: #{vitb16_forward.12} parent=83 // loop_header_branch
                  %247 = sbr.rel (%p245) target = $region91
                $region88: #{vitb16_forward.12} parent=83 // loop_body
                  _
                $region89: #{vitb16_forward.12} parent=83 // loop_footer
                  %s248 = sadd.s32 1, %s244
                $region90: #{vitb16_forward.12} parent=83 // loop_footer_branch
                  %243 = sbr.rel target = $region86
                $region91: #{vitb16_forward.12} parent=83 // loop_exit
                  _
                loop: start=0, step=1, limit=1
                $region92: #{vitb16_forward.12} parent=83 // loop_pre_header
                  _
                $region93: #{vitb16_forward.12} parent=83 // loop_header
                  %s253 = sphi 0, %s257
                  %p254 = scmp.ge.s32.totalorder %s253, 1
                  %s258 = sphi %s221, %s221
                  %s259 = sphi %s216, %s216
                $region94: #{vitb16_forward.12} parent=83 // loop_header_branch
                  %256 = sbr.rel (%p254) target = $region98
                $region95: #{vitb16_forward.12} parent=83 // loop_body
                  %v260 = vld [vmem:[%s258] sm:$0xf]
                  %261 = vst [vmem:[%s259] sm:$0xf] %v260
                  %v262 = vld [vmem:[%s258 + $0xc] sm:$0xf]
                  %263 = vst [vmem:[%s259 + $0x4] sm:$0xf] %v262
                $region96: #{vitb16_forward.12} parent=83 // loop_footer
                  %s257 = sadd.s32 1, %s253
                $region97: #{vitb16_forward.12} parent=83 // loop_footer_branch
                  %252 = sbr.rel target = $region93
                $region98: #{vitb16_forward.12} parent=83 // loop_exit
                  _
              $region84: #{vitb16_forward.12} parent=68 // pred_fallthru
                _
            $region69: #{vitb16_forward.12} parent=64 // pred_fallthru
              _
            // Predicated region
            $region70: #{vitb16_forward.12} parent=64 // pred_check
              _
            $region71: #{vitb16_forward.12} parent=64 // pred_check_branch
              %227 = sbr.rel (0) target = $region73
            $region72: #{vitb16_forward.12} parent=64 // pred_region
              loop: start=0, step=1, limit=1
              $region74: #{vitb16_forward.12} parent=72 // loop_pre_header
                _
              $region75: #{vitb16_forward.12} parent=72 // loop_header
                %s230 = sphi 0, %s234
                %p231 = scmp.ge.s32.totalorder %s230, 1
                %s235 = sphi %s221, %s221
                %s236 = sphi %s216, %s216
              $region76: #{vitb16_forward.12} parent=72 // loop_header_branch
                %233 = sbr.rel (%p231) target = $region80
              $region77: #{vitb16_forward.12} parent=72 // loop_body
                %v237 = vld [vmem:[%s235] sm:$0xf]
                %238 = vst [vmem:[%s236] sm:$0xf] %v237
                %v239 = vld [vmem:[%s235 + $0xc] sm:$0xf]
                %240 = vst [vmem:[%s236 + $0x4] sm:$0xf] %v239
              $region78: #{vitb16_forward.12} parent=72 // loop_footer
                %s234 = sadd.s32 1, %s230
              $region79: #{vitb16_forward.12} parent=72 // loop_footer_branch
                %229 = sbr.rel target = $region75
              $region80: #{vitb16_forward.12} parent=72 // loop_exit
                _
            $region73: #{vitb16_forward.12} parent=64 // pred_fallthru
              _
          $region65: #{vitb16_forward.12} parent=60 // pred_fallthru
            _
          %264 = vnop
        $region61: #{vitb16_forward.12} parent=15 // pred_fallthru
          _
        // Predicated region
        $region99: #{vitb16_forward.12} parent=15 // pred_check
          %p265 = pneg %p103
        $region100: #{vitb16_forward.12} parent=15 // pred_check_branch
          %267 = sbr.rel (%p265) target = $region102
        $region101: #{vitb16_forward.12} parent=15 // pred_region
          %s268 = sand.u32 %s93, 1
          %s269 = sand.u32 %s93, 1
          %s270 = smul.addr %s269, 8
          %s271 = scalar_lea.vmem [#allocation4], %s270
          %s272 = sadd.s32 %s17, 2
          %s273 = smul.addr %s16, 6
          %s274 = sadd.s32 %s272, %s273
          %s275 = smul.addr %s274, 4
          %s276 = scalar_lea.vmem %s2, %s275
          // Predicated region
          $region103: #{vitb16_forward.12} parent=101 // pred_check
            _
          $region104: #{vitb16_forward.12} parent=101 // pred_check_branch
            %278 = sbr.rel (0) target = $region106
          $region105: #{vitb16_forward.12} parent=101 // pred_region
            // Predicated region
            $region107: #{vitb16_forward.12} parent=105 // pred_check
              _
            $region108: #{vitb16_forward.12} parent=105 // pred_check_branch
              %280 = sbr.rel target = $region110
            $region109: #{vitb16_forward.12} parent=105 // pred_region
              // Predicated region
              $region122: #{vitb16_forward.12} parent=109 // pred_check
                _
              $region123: #{vitb16_forward.12} parent=109 // pred_check_branch
                %297 = sbr.rel (0) target = $region125
              $region124: #{vitb16_forward.12} parent=109 // pred_region
                loop: start=0, step=1, limit=1
                $region126: #{vitb16_forward.12} parent=124 // loop_pre_header
                  _
                $region127: #{vitb16_forward.12} parent=124 // loop_header
                  %s299 = sphi 0, %s303
                  %p300 = scmp.ge.s32.totalorder %s299, 1
                  %s304 = sphi %s276, %s276
                  %s305 = sphi %s271, %s271
                $region128: #{vitb16_forward.12} parent=124 // loop_header_branch
                  %302 = sbr.rel (%p300) target = $region132
                $region129: #{vitb16_forward.12} parent=124 // loop_body
                  _
                $region130: #{vitb16_forward.12} parent=124 // loop_footer
                  %s303 = sadd.s32 1, %s299
                $region131: #{vitb16_forward.12} parent=124 // loop_footer_branch
                  %298 = sbr.rel target = $region127
                $region132: #{vitb16_forward.12} parent=124 // loop_exit
                  _
                loop: start=0, step=1, limit=1
                $region133: #{vitb16_forward.12} parent=124 // loop_pre_header
                  _
                $region134: #{vitb16_forward.12} parent=124 // loop_header
                  %s308 = sphi 0, %s312
                  %p309 = scmp.ge.s32.totalorder %s308, 1
                  %s313 = sphi %s276, %s276
                  %s314 = sphi %s271, %s271
                $region135: #{vitb16_forward.12} parent=124 // loop_header_branch
                  %311 = sbr.rel (%p309) target = $region139
                $region136: #{vitb16_forward.12} parent=124 // loop_body
                  %v315 = vld [vmem:[%s313] sm:$0xf]
                  %316 = vst [vmem:[%s314] sm:$0xf] %v315
                  %v317 = vld [vmem:[%s313 + $0xc] sm:$0xf]
                  %318 = vst [vmem:[%s314 + $0x4] sm:$0xf] %v317
                $region137: #{vitb16_forward.12} parent=124 // loop_footer
                  %s312 = sadd.s32 1, %s308
                $region138: #{vitb16_forward.12} parent=124 // loop_footer_branch
                  %307 = sbr.rel target = $region134
                $region139: #{vitb16_forward.12} parent=124 // loop_exit
                  _
              $region125: #{vitb16_forward.12} parent=109 // pred_fallthru
                _
            $region110: #{vitb16_forward.12} parent=105 // pred_fallthru
              _
            // Predicated region
            $region111: #{vitb16_forward.12} parent=105 // pred_check
              _
            $region112: #{vitb16_forward.12} parent=105 // pred_check_branch
              %282 = sbr.rel (0) target = $region114
            $region113: #{vitb16_forward.12} parent=105 // pred_region
              loop: start=0, step=1, limit=1
              $region115: #{vitb16_forward.12} parent=113 // loop_pre_header
                _
              $region116: #{vitb16_forward.12} parent=113 // loop_header
                %s285 = sphi 0, %s289
                %p286 = scmp.ge.s32.totalorder %s285, 1
                %s290 = sphi %s276, %s276
                %s291 = sphi %s271, %s271
              $region117: #{vitb16_forward.12} parent=113 // loop_header_branch
                %288 = sbr.rel (%p286) target = $region121
              $region118: #{vitb16_forward.12} parent=113 // loop_body
                %v292 = vld [vmem:[%s290] sm:$0xf]
                %293 = vst [vmem:[%s291] sm:$0xf] %v292
                %v294 = vld [vmem:[%s290 + $0xc] sm:$0xf]
                %295 = vst [vmem:[%s291 + $0x4] sm:$0xf] %v294
              $region119: #{vitb16_forward.12} parent=113 // loop_footer
                %s289 = sadd.s32 1, %s285
              $region120: #{vitb16_forward.12} parent=113 // loop_footer_branch
                %284 = sbr.rel target = $region116
              $region121: #{vitb16_forward.12} parent=113 // loop_exit
                _
            $region114: #{vitb16_forward.12} parent=105 // pred_fallthru
              _
          $region106: #{vitb16_forward.12} parent=101 // pred_fallthru
            _
          %319 = vnop
        $region102: #{vitb16_forward.12} parent=15 // pred_fallthru
          _
      $region16: #{vitb16_forward.12} parent=5 // pred_fallthru
        _
      %p320 = scmp.le.s32.totalorder 1, %s9
      %p321 = scmp.lt.s32.totalorder %s9, 3
      %p322 = pnand %p320, %p321
      %p323 = pneg %p322
      // Predicated region
      $region140: #{vitb16_forward.12} parent=5 // pred_check
        _
      $region141: #{vitb16_forward.12} parent=5 // pred_check_branch
        %325 = sbr.rel (%p322) target = $region143
      $region142: #{vitb16_forward.12} parent=5 // pred_region
        %s326 = ssub.s32 %s9, 1
        %s327 = sand.u32 %s36, 1
        %s328 = sand.u32 %s36, 1
        %s329 = smul.addr %s328, 8
        %s330 = scalar_lea.vmem [#allocation2], %s329
        // Predicated region
        $region144: #{vitb16_forward.12} parent=142 // pred_check
          %p331 = pneg %p49
        $region145: #{vitb16_forward.12} parent=142 // pred_check_branch
          %333 = sbr.rel (%p331) target = $region147
        $region146: #{vitb16_forward.12} parent=142 // pred_region
          _
        $region147: #{vitb16_forward.12} parent=142 // pred_fallthru
          _
        %s334 = sand.u32 %s66, 1
        %s335 = sand.u32 %s66, 1
        %s336 = smul.addr %s335, 8
        %s337 = scalar_lea.vmem [#allocation3], %s336
        // Predicated region
        $region148: #{vitb16_forward.12} parent=142 // pred_check
          %p338 = pneg %p79
        $region149: #{vitb16_forward.12} parent=142 // pred_check_branch
          %340 = sbr.rel (%p338) target = $region151
        $region150: #{vitb16_forward.12} parent=142 // pred_region
          _
        $region151: #{vitb16_forward.12} parent=142 // pred_fallthru
          _
        %s341 = sand.u32 %s96, 1
        %s342 = sand.u32 %s96, 1
        %s343 = smul.addr %s342, 8
        %s344 = scalar_lea.vmem [#allocation4], %s343
        // Predicated region
        $region152: #{vitb16_forward.12} parent=142 // pred_check
          %p345 = pneg %p109
        $region153: #{vitb16_forward.12} parent=142 // pred_check_branch
          %347 = sbr.rel (%p345) target = $region155
        $region154: #{vitb16_forward.12} parent=142 // pred_region
          _
        $region155: #{vitb16_forward.12} parent=142 // pred_fallthru
          _
        %s348 = sand.u32 %s36, 1
        %s349 = sand.u32 %s36, 1
        %s350 = smul.addr %s349, 8
        %s351 = scalar_lea.vmem [#allocation2], %s350
        %p352 = pneg %p49
        %p353 = pneg %p46
        %s354 = sand.u32 %s66, 1
        %s355 = sand.u32 %s66, 1
        %s356 = smul.addr %s355, 8
        %s357 = scalar_lea.vmem [#allocation3], %s356
        %p358 = pneg %p79
        %p359 = pneg %p76
        %s360 = sand.u32 %s96, 1
        %s361 = sand.u32 %s96, 1
        %s362 = smul.addr %s361, 8
        %s363 = scalar_lea.vmem [#allocation4], %s362
        %p364 = pneg %p109
        %p365 = pneg %p106
        %p366 = pneg %p137
        %p367 = pneg %p134
        %p368 = scmp.lt.s32.totalorder %s18, 1
        %s369 = scalar_select %p368, %s18, 1
        %p370 = scmp.lt.s32.totalorder %s19, 0
        %s371 = scalar_select %p370, %s19, 0
        %s372 = smul.addr %s369, 2
        %s373 = sadd.s32 %s371, %s372
        %s374 = smul.addr %s373, 4
        %s375 = scalar_lea.vmem %s3, %s374
        %s376 = sadd.s32 %s19, 1
        %s377 = sadd.s32 %s19, 2
        %p378 = scmp.lt.s32.totalorder %s18, 1
        %s379 = scalar_select %p378, %s18, 1
        %p380 = scmp.lt.s32.totalorder %s19, 0
        %s381 = scalar_select %p380, %s19, 0
        %s382 = smul.addr %s379, 2
        %s383 = sadd.s32 %s381, %s382
        %s384 = smul.addr %s383, 4
        %s385 = scalar_lea.vmem %s3, %s384
        %v387 = vlaneseq
        %v388 = vand.u32 %v387, 127
        %vm389 = vcmp.lt.s32.totalorder %v388, 5
        %v390 = vld [vmem:[%s330] sm:$0xf]
        %v391 = vld [vmem:[%s330 + $0x4] sm:$0xf]
        %v392 = vld [vmem:[%s337] sm:$0xf]
        %v393 = vld [vmem:[%s337 + $0x4] sm:$0xf]
        %v394 = vld [vmem:[%s344] sm:$0xf]
        %v395 = vld [vmem:[%s344 + $0x4] sm:$0xf]
        %v398 = vunpack.c.l.b16 %v390
        %v399 = vunpack.c.l.b16 %v391
        %v400 = vpack.c.b16 %v399, %v398
        %v403 = vunpack.c.l.b16 %v392
        %v404 = vunpack.c.l.b16 %v393
        %v405 = vpack.c.b16 %v404, %v403
        %vm406 = vcmask 261120
        %v408 = vsel %vm406, %v400, 0
        %v411 = vsel %vm406, %v405, 0
        %413 = vmatprep.subr.bf16.mxu0 0
        %414 = vmatpush1.bf16.xpose.msra.mxu0 %v411
        %415 = vmatprep.subr.bf16.mxu0 0
        %416 = vmatpush1.bf16.xpose.msra.mxu0 0
        %417 = vmatprep.subr.bf16.mxu0 0
        %418 = vmatpush1.bf16.xpose.msra.mxu0 0
        %419 = vmatprep.subr.bf16.mxu0 0
        %420 = vmatpush1.bf16.xpose.msra.mxu0 0
        %421 = vmatprep.subr.bf16.mxu0 0
        %422 = vmatpush1.bf16.xpose.msra.mxu0 0
        %423 = vmatprep.subr.bf16.mxu0 0
        %424 = vmatpush1.bf16.xpose.msra.mxu0 0
        %425 = vmatprep.subr.bf16.mxu0 0
        %426 = vmatpush1.bf16.xpose.msra.mxu0 0
        %427 = vmatprep.subr.bf16.mxu0 0
        %428 = vmatpush1.bf16.xpose.msra.mxu0 0
        %429 = vmatprep.subr.bf16.mxu0 0
        %430 = vmatpush1.bf16.xpose.msra.mxu0 0
        %431 = vmatprep.subr.bf16.mxu0 0
        %432 = vmatpush1.bf16.xpose.msra.mxu0 0
        %433 = vmatprep.subr.bf16.mxu0 0
        %434 = vmatpush1.bf16.xpose.msra.mxu0 0
        %435 = vmatprep.subr.bf16.mxu0 0
        %436 = vmatpush1.bf16.xpose.msra.mxu0 0
        %437 = vmatprep.subr.bf16.mxu0 0
        %438 = vmatpush1.bf16.xpose.msra.mxu0 0
        %439 = vmatprep.subr.bf16.mxu0 0
        %440 = vmatpush1.bf16.xpose.msra.mxu0 0
        %441 = vmatprep.subr.bf16.mxu0 0
        %442 = vmatpush1.bf16.xpose.msra.mxu0 0
        %443 = vmatprep.subr.bf16.mxu0 0
        %444 = vmatpush1.bf16.xpose.msra.mxu0 0
        %445 = vmatprep.mubr.bf16.mxu0 0
        %446 = vmatmul.mubr.bf16.gmra.mrb[0].mxu0 %v408
        %v447 = vpop.f32.mrb[0].mxu0
        %v448 = vadd.f32 0.0, %v447
        %v449 = vpop.f32.mrb[0].mxu0
        %v450 = vpop.f32.mrb[0].mxu0
        %v451 = vadd.f32 0.0, %v450
        %v452 = vpop.f32.mrb[0].mxu0
        %453 = vdwg.mxu0
        %v454 = vsel %vm389, %v448, -1e+30
        %v455 = vsel %vm389, %v451, -1e+30
        %vm456 = vcmask 130048
        %v457 = vsel %vm456, %v454, -inf
        %458 = vmax.xlane.f32.xlu0 %v457
        %v459 = vpop.xlane.xlu0 %458
        %v460 = vsel %vm456, %v455, -inf
        %461 = vmax.xlane.f32.xlu0 %v460
        %v462 = vpop.xlane.xlu0 %461
        %v463 = vsub.f32 %v454, %v459
        %v464 = vsub.f32 %v455, %v462
        %v465 = vmul.f32 %v463, 1.442695
        %v466 = vpow.pop %v465
        %v467 = vmul.f32 %v464, 1.442695
        %v468 = vpow.pop %v467
        %v469 = vsel %vm456, %v466, 0.0
        %470 = vadd.xlane.f32.xlu0 %v469
        %v471 = vpop.xlane.xlu0 %470
        %v472 = vsel %vm456, %v468, 0.0
        %473 = vadd.xlane.f32.xlu0 %v472
        %v474 = vpop.xlane.xlu0 %473
        %v475 = vpack.c.bf16 %v468, %v466
        %v478 = vunpack.c.l.b16 %v394
        %v479 = vunpack.c.l.b16 %v395
        %v480 = vpack.c.b16 %v479, %v478
        %v483 = vsel %vm456, %v475, 0
        %485 = vmatprep.subr.bf16.mxu0 0
        %486 = vmatpush1.bf16.msra.mxu0 %v480
        %487 = vmatprep.subr.bf16.mxu0 0
        %488 = vmatpush1.bf16.msra.mxu0 0
        %489 = vmatprep.subr.bf16.mxu0 0
        %490 = vmatpush1.bf16.msra.mxu0 0
        %491 = vmatprep.subr.bf16.mxu0 0
        %492 = vmatpush1.bf16.msra.mxu0 0
        %493 = vmatprep.subr.bf16.mxu0 0
        %494 = vmatpush1.bf16.msra.mxu0 0
        %495 = vmatprep.subr.bf16.mxu0 0
        %496 = vmatpush1.bf16.msra.mxu0 0
        %497 = vmatprep.subr.bf16.mxu0 0
        %498 = vmatpush1.bf16.msra.mxu0 0
        %499 = vmatprep.subr.bf16.mxu0 0
        %500 = vmatpush1.bf16.msra.mxu0 0
        %501 = vmatprep.subr.bf16.mxu0 0
        %502 = vmatpush1.bf16.msra.mxu0 0
        %503 = vmatprep.subr.bf16.mxu0 0
        %504 = vmatpush1.bf16.msra.mxu0 0
        %505 = vmatprep.subr.bf16.mxu0 0
        %506 = vmatpush1.bf16.msra.mxu0 0
        %507 = vmatprep.subr.bf16.mxu0 0
        %508 = vmatpush1.bf16.msra.mxu0 0
        %509 = vmatprep.subr.bf16.mxu0 0
        %510 = vmatpush1.bf16.msra.mxu0 0
        %511 = vmatprep.subr.bf16.mxu0 0
        %512 = vmatpush1.bf16.msra.mxu0 0
        %513 = vmatprep.subr.bf16.mxu0 0
        %514 = vmatpush1.bf16.msra.mxu0 0
        %515 = vmatprep.subr.bf16.mxu0 0
        %516 = vmatpush1.bf16.msra.mxu0 0
        %517 = vmatprep.mubr.bf16.mxu0 0
        %518 = vmatmul.mubr.bf16.gmra.mrb[0].mxu0 %v483
        %v519 = vpop.f32.mrb[0].mxu0
        %v520 = vadd.f32 0.0, %v519
        %v521 = vpop.f32.mrb[0].mxu0
        %v522 = vpop.f32.mrb[0].mxu0
        %v523 = vadd.f32 0.0, %v522
        %v524 = vpop.f32.mrb[0].mxu0
        %525 = vdwg.mxu0
        %v526 = vrcp.pop %v471
        %v527 = vrcp.pop %v474
        %v528 = vmul.f32 %v520, %v526
        %v529 = vmul.f32 %v523, %v527
        %v530 = vpack.c.bf16 %v529, %v528
        %v532 = vunpack.c.l.b16 %v530
        %v533 = vunpack.c.h.b16 %v530
        %v534 = vpack.c.b16 %v532, %v532
        %v535 = vpack.c.b16 %v533, %v533
        %vm538 = vcmask 257024
        %539 = vst.msk [vmem:[%s385] sm:$0xf] %vm538, %v534
        %540 = vst.msk [vmem:[%s385 + $0x4] sm:$0xf] %vm538, %v535
        %541 = vrot.lane.b32.xlu0 %v400, 96
        %v542 = vpop.permute.xlu0 %541
        %543 = vrot.lane.b32.xlu0 %v405, 96
        %v544 = vpop.permute.xlu0 %543
        %v546 = vsel %vm406, %v542, 0
        %v549 = vsel %vm406, %v544, 0
        %551 = vmatprep.subr.bf16.mxu0 0
        %552 = vmatpush1.bf16.xpose.msra.mxu0 %v549
        %553 = vmatprep.subr.bf16.mxu0 0
        %554 = vmatpush1.bf16.xpose.msra.mxu0 0
        %555 = vmatprep.subr.bf16.mxu0 0
        %556 = vmatpush1.bf16.xpose.msra.mxu0 0
        %557 = vmatprep.subr.bf16.mxu0 0
        %558 = vmatpush1.bf16.xpose.msra.mxu0 0
        %559 = vmatprep.subr.bf16.mxu0 0
        %560 = vmatpush1.bf16.xpose.msra.mxu0 0
        %561 = vmatprep.subr.bf16.mxu0 0
        %562 = vmatpush1.bf16.xpose.msra.mxu0 0
        %563 = vmatprep.subr.bf16.mxu0 0
        %564 = vmatpush1.bf16.xpose.msra.mxu0 0
        %565 = vmatprep.subr.bf16.mxu0 0
        %566 = vmatpush1.bf16.xpose.msra.mxu0 0
        %567 = vmatprep.subr.bf16.mxu0 0
        %568 = vmatpush1.bf16.xpose.msra.mxu0 0
        %569 = vmatprep.subr.bf16.mxu0 0
        %570 = vmatpush1.bf16.xpose.msra.mxu0 0
        %571 = vmatprep.subr.bf16.mxu0 0
        %572 = vmatpush1.bf16.xpose.msra.mxu0 0
        %573 = vmatprep.subr.bf16.mxu0 0
        %574 = vmatpush1.bf16.xpose.msra.mxu0 0
        %575 = vmatprep.subr.bf16.mxu0 0
        %576 = vmatpush1.bf16.xpose.msra.mxu0 0
        %577 = vmatprep.subr.bf16.mxu0 0
        %578 = vmatpush1.bf16.xpose.msra.mxu0 0
        %579 = vmatprep.subr.bf16.mxu0 0
        %580 = vmatpush1.bf16.xpose.msra.mxu0 0
        %581 = vmatprep.subr.bf16.mxu0 0
        %582 = vmatpush1.bf16.xpose.msra.mxu0 0
        %583 = vmatprep.mubr.bf16.mxu0 0
        %584 = vmatmul.mubr.bf16.gmra.mrb[0].mxu0 %v546
        %v585 = vpop.f32.mrb[0].mxu0
        %v586 = vadd.f32 0.0, %v585
        %v587 = vpop.f32.mrb[0].mxu0
        %v588 = vpop.f32.mrb[0].mxu0
        %v589 = vadd.f32 0.0, %v588
        %v590 = vpop.f32.mrb[0].mxu0
        %591 = vdwg.mxu0
        %v592 = vsel %vm389, %v586, -1e+30
        %v593 = vsel %vm389, %v589, -1e+30
        %v594 = vsel %vm456, %v592, -inf
        %595 = vmax.xlane.f32.xlu0 %v594
        %v596 = vpop.xlane.xlu0 %595
        %v597 = vsel %vm456, %v593, -inf
        %598 = vmax.xlane.f32.xlu0 %v597
        %v599 = vpop.xlane.xlu0 %598
        %v600 = vsub.f32 %v592, %v596
        %v601 = vsub.f32 %v593, %v599
        %v602 = vmul.f32 %v600, 1.442695
        %v603 = vpow.pop %v602
        %v604 = vmul.f32 %v601, 1.442695
        %v605 = vpow.pop %v604
        %v606 = vsel %vm456, %v603, 0.0
        %607 = vadd.xlane.f32.xlu0 %v606
        %v608 = vpop.xlane.xlu0 %607
        %v609 = vsel %vm456, %v605, 0.0
        %610 = vadd.xlane.f32.xlu0 %v609
        %v611 = vpop.xlane.xlu0 %610
        %v612 = vpack.c.bf16 %v605, %v603
        %613 = vrot.lane.b32.xlu0 %v480, 96
        %v614 = vpop.permute.xlu0 %613
        %v617 = vsel %vm456, %v612, 0
        %619 = vmatprep.subr.bf16.mxu0 0
        %620 = vmatpush1.bf16.msra.mxu0 %v614
        %621 = vmatprep.subr.bf16.mxu0 0
        %622 = vmatpush1.bf16.msra.mxu0 0
        %623 = vmatprep.subr.bf16.mxu0 0
        %624 = vmatpush1.bf16.msra.mxu0 0
        %625 = vmatprep.subr.bf16.mxu0 0
        %626 = vmatpush1.bf16.msra.mxu0 0
        %627 = vmatprep.subr.bf16.mxu0 0
        %628 = vmatpush1.bf16.msra.mxu0 0
        %629 = vmatprep.subr.bf16.mxu0 0
        %630 = vmatpush1.bf16.msra.mxu0 0
        %631 = vmatprep.subr.bf16.mxu0 0
        %632 = vmatpush1.bf16.msra.mxu0 0
        %633 = vmatprep.subr.bf16.mxu0 0
        %634 = vmatpush1.bf16.msra.mxu0 0
        %635 = vmatprep.subr.bf16.mxu0 0
        %636 = vmatpush1.bf16.msra.mxu0 0
        %637 = vmatprep.subr.bf16.mxu0 0
        %638 = vmatpush1.bf16.msra.mxu0 0
        %639 = vmatprep.subr.bf16.mxu0 0
        %640 = vmatpush1.bf16.msra.mxu0 0
        %641 = vmatprep.subr.bf16.mxu0 0
        %642 = vmatpush1.bf16.msra.mxu0 0
        %643 = vmatprep.subr.bf16.mxu0 0
        %644 = vmatpush1.bf16.msra.mxu0 0
        %645 = vmatprep.subr.bf16.mxu0 0
        %646 = vmatpush1.bf16.msra.mxu0 0
        %647 = vmatprep.subr.bf16.mxu0 0
        %648 = vmatpush1.bf16.msra.mxu0 0
        %649 = vmatprep.subr.bf16.mxu0 0
        %650 = vmatpush1.bf16.msra.mxu0 0
        %651 = vmatprep.mubr.bf16.mxu0 0
        %652 = vmatmul.mubr.bf16.gmra.mrb[0].mxu0 %v617
        %v653 = vpop.f32.mrb[0].mxu0
        %v654 = vadd.f32 0.0, %v653
        %v655 = vpop.f32.mrb[0].mxu0
        %v656 = vpop.f32.mrb[0].mxu0
        %v657 = vadd.f32 0.0, %v656
        %v658 = vpop.f32.mrb[0].mxu0
        %659 = vdwg.mxu0
        %v660 = vrcp.pop %v608
        %v661 = vrcp.pop %v611
        %v662 = vmul.f32 %v654, %v660
        %v663 = vmul.f32 %v657, %v661
        %v664 = vpack.c.bf16 %v663, %v662
        %v666 = vunpack.c.l.b16 %v664
        %v667 = vunpack.c.h.b16 %v664
        %v668 = vpack.c.b16 %v666, %v666
        %v669 = vpack.c.b16 %v667, %v667
        %670 = vrot.lane.b32.xlu0 %v668, 32
        %v671 = vpop.permute.xlu0 %670
        %672 = vrot.lane.b32.xlu0 %v669, 32
        %v673 = vpop.permute.xlu0 %672
        %vm676 = vcmask 519424
        %677 = vst.msk [vmem:[%s385] sm:$0xf] %vm676, %v671
        %678 = vst.msk [vmem:[%s385 + $0x4] sm:$0xf] %vm676, %v673
        %679 = vrot.lane.b32.xlu0 %v400, 64
        %v680 = vpop.permute.xlu0 %679
        %681 = vrot.lane.b32.xlu0 %v405, 64
        %v682 = vpop.permute.xlu0 %681
        %v684 = vsel %vm406, %v680, 0
        %v687 = vsel %vm406, %v682, 0
        %689 = vmatprep.subr.bf16.mxu0 0
        %690 = vmatpush1.bf16.xpose.msra.mxu0 %v687
        %691 = vmatprep.subr.bf16.mxu0 0
        %692 = vmatpush1.bf16.xpose.msra.mxu0 0
        %693 = vmatprep.subr.bf16.mxu0 0
        %694 = vmatpush1.bf16.xpose.msra.mxu0 0
        %695 = vmatprep.subr.bf16.mxu0 0
        %696 = vmatpush1.bf16.xpose.msra.mxu0 0
        %697 = vmatprep.subr.bf16.mxu0 0
        %698 = vmatpush1.bf16.xpose.msra.mxu0 0
        %699 = vmatprep.subr.bf16.mxu0 0
        %700 = vmatpush1.bf16.xpose.msra.mxu0 0
        %701 = vmatprep.subr.bf16.mxu0 0
        %702 = vmatpush1.bf16.xpose.msra.mxu0 0
        %703 = vmatprep.subr.bf16.mxu0 0
        %704 = vmatpush1.bf16.xpose.msra.mxu0 0
        %705 = vmatprep.subr.bf16.mxu0 0
        %706 = vmatpush1.bf16.xpose.msra.mxu0 0
        %707 = vmatprep.subr.bf16.mxu0 0
        %708 = vmatpush1.bf16.xpose.msra.mxu0 0
        %709 = vmatprep.subr.bf16.mxu0 0
        %710 = vmatpush1.bf16.xpose.msra.mxu0 0
        %711 = vmatprep.subr.bf16.mxu0 0
        %712 = vmatpush1.bf16.xpose.msra.mxu0 0
        %713 = vmatprep.subr.bf16.mxu0 0
        %714 = vmatpush1.bf16.xpose.msra.mxu0 0
        %715 = vmatprep.subr.bf16.mxu0 0
        %716 = vmatpush1.bf16.xpose.msra.mxu0 0
        %717 = vmatprep.subr.bf16.mxu0 0
        %718 = vmatpush1.bf16.xpose.msra.mxu0 0
        %719 = vmatprep.subr.bf16.mxu0 0
        %720 = vmatpush1.bf16.xpose.msra.mxu0 0
        %721 = vmatprep.mubr.bf16.mxu0 0
        %722 = vmatmul.mubr.bf16.gmra.mrb[0].mxu0 %v684
        %v723 = vpop.f32.mrb[0].mxu0
        %v724 = vadd.f32 0.0, %v723
        %v725 = vpop.f32.mrb[0].mxu0
        %v726 = vpop.f32.mrb[0].mxu0
        %v727 = vadd.f32 0.0, %v726
        %v728 = vpop.f32.mrb[0].mxu0
        %729 = vdwg.mxu0
        %v730 = vsel %vm389, %v724, -1e+30
        %v731 = vsel %vm389, %v727, -1e+30
        %v732 = vsel %vm456, %v730, -inf
        %733 = vmax.xlane.f32.xlu0 %v732
        %v734 = vpop.xlane.xlu0 %733
        %v735 = vsel %vm456, %v731, -inf
        %736 = vmax.xlane.f32.xlu0 %v735
        %v737 = vpop.xlane.xlu0 %736
        %v738 = vsub.f32 %v730, %v734
        %v739 = vsub.f32 %v731, %v737
        %v740 = vmul.f32 %v738, 1.442695
        %v741 = vpow.pop %v740
        %v742 = vmul.f32 %v739, 1.442695
        %v743 = vpow.pop %v742
        %v744 = vsel %vm456, %v741, 0.0
        %745 = vadd.xlane.f32.xlu0 %v744
        %v746 = vpop.xlane.xlu0 %745
        %v747 = vsel %vm456, %v743, 0.0
        %748 = vadd.xlane.f32.xlu0 %v747
        %v749 = vpop.xlane.xlu0 %748
        %v750 = vpack.c.bf16 %v743, %v741
        %751 = vrot.lane.b32.xlu0 %v480, 64
        %v752 = vpop.permute.xlu0 %751
        %v755 = vsel %vm456, %v750, 0
        %757 = vmatprep.subr.bf16.mxu0 0
        %758 = vmatpush1.bf16.msra.mxu0 %v752
        %759 = vmatprep.subr.bf16.mxu0 0
        %760 = vmatpush1.bf16.msra.mxu0 0
        %761 = vmatprep.subr.bf16.mxu0 0
        %762 = vmatpush1.bf16.msra.mxu0 0
        %763 = vmatprep.subr.bf16.mxu0 0
        %764 = vmatpush1.bf16.msra.mxu0 0
        %765 = vmatprep.subr.bf16.mxu0 0
        %766 = vmatpush1.bf16.msra.mxu0 0
        %767 = vmatprep.subr.bf16.mxu0 0
        %768 = vmatpush1.bf16.msra.mxu0 0
        %769 = vmatprep.subr.bf16.mxu0 0
        %770 = vmatpush1.bf16.msra.mxu0 0
        %771 = vmatprep.subr.bf16.mxu0 0
        %772 = vmatpush1.bf16.msra.mxu0 0
        %773 = vmatprep.subr.bf16.mxu0 0
        %774 = vmatpush1.bf16.msra.mxu0 0
        %775 = vmatprep.subr.bf16.mxu0 0
        %776 = vmatpush1.bf16.msra.mxu0 0
        %777 = vmatprep.subr.bf16.mxu0 0
        %778 = vmatpush1.bf16.msra.mxu0 0
        %779 = vmatprep.subr.bf16.mxu0 0
        %780 = vmatpush1.bf16.msra.mxu0 0
        %781 = vmatprep.subr.bf16.mxu0 0
        %782 = vmatpush1.bf16.msra.mxu0 0
        %783 = vmatprep.subr.bf16.mxu0 0
        %784 = vmatpush1.bf16.msra.mxu0 0
        %785 = vmatprep.subr.bf16.mxu0 0
        %786 = vmatpush1.bf16.msra.mxu0 0
        %787 = vmatprep.subr.bf16.mxu0 0
        %788 = vmatpush1.bf16.msra.mxu0 0
        %789 = vmatprep.mubr.bf16.mxu0 0
        %790 = vmatmul.mubr.bf16.gmra.mrb[0].mxu0 %v755
        %v791 = vpop.f32.mrb[0].mxu0
        %v792 = vadd.f32 0.0, %v791
        %v793 = vpop.f32.mrb[0].mxu0
        %v794 = vpop.f32.mrb[0].mxu0
        %v795 = vadd.f32 0.0, %v794
        %v796 = vpop.f32.mrb[0].mxu0
        %797 = vdwg.mxu0
        %v798 = vrcp.pop %v746
        %v799 = vrcp.pop %v749
        %v800 = vmul.f32 %v792, %v798
        %v801 = vmul.f32 %v795, %v799
        %v802 = vpack.c.bf16 %v801, %v800
        %v804 = vunpack.c.l.b16 %v802
        %v805 = vunpack.c.h.b16 %v802
        %v806 = vpack.c.b16 %v804, %v804
        %v807 = vpack.c.b16 %v805, %v805
        %808 = vrot.lane.b32.xlu0 %v806, 64
        %v809 = vpop.permute.xlu0 %808
        %810 = vrot.lane.b32.xlu0 %v807, 64
        %v811 = vpop.permute.xlu0 %810
        %vm814 = vcmask 781824
        %815 = vst.msk [vmem:[%s385] sm:$0xf] %vm814, %v809
        %816 = vst.msk [vmem:[%s385 + $0x4] sm:$0xf] %vm814, %v811
        %817 = vrot.lane.b32.xlu0 %v400, 32
        %v818 = vpop.permute.xlu0 %817
        %819 = vrot.lane.b32.xlu0 %v405, 32
        %v820 = vpop.permute.xlu0 %819
        %v822 = vsel %vm406, %v818, 0
        %v825 = vsel %vm406, %v820, 0
        %827 = vmatprep.subr.bf16.mxu0 0
        %828 = vmatpush1.bf16.xpose.msra.mxu0 %v825
        %829 = vmatprep.subr.bf16.mxu0 0
        %830 = vmatpush1.bf16.xpose.msra.mxu0 0
        %831 = vmatprep.subr.bf16.mxu0 0
        %832 = vmatpush1.bf16.xpose.msra.mxu0 0
        %833 = vmatprep.subr.bf16.mxu0 0
        %834 = vmatpush1.bf16.xpose.msra.mxu0 0
        %835 = vmatprep.subr.bf16.mxu0 0
        %836 = vmatpush1.bf16.xpose.msra.mxu0 0
        %837 = vmatprep.subr.bf16.mxu0 0
        %838 = vmatpush1.bf16.xpose.msra.mxu0 0
        %839 = vmatprep.subr.bf16.mxu0 0
        %840 = vmatpush1.bf16.xpose.msra.mxu0 0
        %841 = vmatprep.subr.bf16.mxu0 0
        %842 = vmatpush1.bf16.xpose.msra.mxu0 0
        %843 = vmatprep.subr.bf16.mxu0 0
        %844 = vmatpush1.bf16.xpose.msra.mxu0 0
        %845 = vmatprep.subr.bf16.mxu0 0
        %846 = vmatpush1.bf16.xpose.msra.mxu0 0
        %847 = vmatprep.subr.bf16.mxu0 0
        %848 = vmatpush1.bf16.xpose.msra.mxu0 0
        %849 = vmatprep.subr.bf16.mxu0 0
        %850 = vmatpush1.bf16.xpose.msra.mxu0 0
        %851 = vmatprep.subr.bf16.mxu0 0
        %852 = vmatpush1.bf16.xpose.msra.mxu0 0
        %853 = vmatprep.subr.bf16.mxu0 0
        %854 = vmatpush1.bf16.xpose.msra.mxu0 0
        %855 = vmatprep.subr.bf16.mxu0 0
        %856 = vmatpush1.bf16.xpose.msra.mxu0 0
        %857 = vmatprep.subr.bf16.mxu0 0
        %858 = vmatpush1.bf16.xpose.msra.mxu0 0
        %859 = vmatprep.mubr.bf16.mxu0 0
        %860 = vmatmul.mubr.bf16.gmra.mrb[0].mxu0 %v822
        %v861 = vpop.f32.mrb[0].mxu0
        %v862 = vadd.f32 0.0, %v861
        %v863 = vpop.f32.mrb[0].mxu0
        %v864 = vpop.f32.mrb[0].mxu0
        %v865 = vadd.f32 0.0, %v864
        %v866 = vpop.f32.mrb[0].mxu0
        %867 = vdwg.mxu0
        %v868 = vsel %vm389, %v862, -1e+30
        %v869 = vsel %vm389, %v865, -1e+30
        %v870 = vsel %vm456, %v868, -inf
        %871 = vmax.xlane.f32.xlu0 %v870
        %v872 = vpop.xlane.xlu0 %871
        %v873 = vsel %vm456, %v869, -inf
        %874 = vmax.xlane.f32.xlu0 %v873
        %v875 = vpop.xlane.xlu0 %874
        %v876 = vsub.f32 %v868, %v872
        %v877 = vsub.f32 %v869, %v875
        %v878 = vmul.f32 %v876, 1.442695
        %v879 = vpow.pop %v878
        %v880 = vmul.f32 %v877, 1.442695
        %v881 = vpow.pop %v880
        %v882 = vsel %vm456, %v879, 0.0
        %883 = vadd.xlane.f32.xlu0 %v882
        %v884 = vpop.xlane.xlu0 %883
        %v885 = vsel %vm456, %v881, 0.0
        %886 = vadd.xlane.f32.xlu0 %v885
        %v887 = vpop.xlane.xlu0 %886
        %v888 = vpack.c.bf16 %v881, %v879
        %889 = vrot.lane.b32.xlu0 %v480, 32
        %v890 = vpop.permute.xlu0 %889
        %v893 = vsel %vm456, %v888, 0
        %895 = vmatprep.subr.bf16.mxu0 0
        %896 = vmatpush1.bf16.msra.mxu0 %v890
        %897 = vmatprep.subr.bf16.mxu0 0
        %898 = vmatpush1.bf16.msra.mxu0 0
        %899 = vmatprep.subr.bf16.mxu0 0
        %900 = vmatpush1.bf16.msra.mxu0 0
        %901 = vmatprep.subr.bf16.mxu0 0
        %902 = vmatpush1.bf16.msra.mxu0 0
        %903 = vmatprep.subr.bf16.mxu0 0
        %904 = vmatpush1.bf16.msra.mxu0 0
        %905 = vmatprep.subr.bf16.mxu0 0
        %906 = vmatpush1.bf16.msra.mxu0 0
        %907 = vmatprep.subr.bf16.mxu0 0
        %908 = vmatpush1.bf16.msra.mxu0 0
        %909 = vmatprep.subr.bf16.mxu0 0
        %910 = vmatpush1.bf16.msra.mxu0 0
        %911 = vmatprep.subr.bf16.mxu0 0
        %912 = vmatpush1.bf16.msra.mxu0 0
        %913 = vmatprep.subr.bf16.mxu0 0
        %914 = vmatpush1.bf16.msra.mxu0 0
        %915 = vmatprep.subr.bf16.mxu0 0
        %916 = vmatpush1.bf16.msra.mxu0 0
        %917 = vmatprep.subr.bf16.mxu0 0
        %918 = vmatpush1.bf16.msra.mxu0 0
        %919 = vmatprep.subr.bf16.mxu0 0
        %920 = vmatpush1.bf16.msra.mxu0 0
        %921 = vmatprep.subr.bf16.mxu0 0
        %922 = vmatpush1.bf16.msra.mxu0 0
        %923 = vmatprep.subr.bf16.mxu0 0
        %924 = vmatpush1.bf16.msra.mxu0 0
        %925 = vmatprep.subr.bf16.mxu0 0
        %926 = vmatpush1.bf16.msra.mxu0 0
        %927 = vmatprep.mubr.bf16.mxu0 0
        %928 = vmatmul.mubr.bf16.gmra.mrb[0].mxu0 %v893
        %v929 = vpop.f32.mrb[0].mxu0
        %v930 = vadd.f32 0.0, %v929
        %v931 = vpop.f32.mrb[0].mxu0
        %v932 = vpop.f32.mrb[0].mxu0
        %v933 = vadd.f32 0.0, %v932
        %v934 = vpop.f32.mrb[0].mxu0
        %935 = vdwg.mxu0
        %v936 = vrcp.pop %v884
        %v937 = vrcp.pop %v887
        %v938 = vmul.f32 %v930, %v936
        %v939 = vmul.f32 %v933, %v937
        %v940 = vpack.c.bf16 %v939, %v938
        %v942 = vunpack.c.l.b16 %v940
        %v943 = vunpack.c.h.b16 %v940
        %v944 = vpack.c.b16 %v942, %v942
        %v945 = vpack.c.b16 %v943, %v943
        %946 = vrot.lane.b32.xlu0 %v944, 96
        %v947 = vpop.permute.xlu0 %946
        %948 = vrot.lane.b32.xlu0 %v945, 96
        %v949 = vpop.permute.xlu0 %948
        %vm952 = vcmask 1044224
        %953 = vst.msk [vmem:[%s385] sm:$0xf] %vm952, %v947
        %954 = vst.msk [vmem:[%s385 + $0x4] sm:$0xf] %vm952, %v949
        %p955 = scmp.lt.s32.totalorder %s18, 1
        %s956 = scalar_select %p955, %s18, 1
        %p957 = scmp.lt.s32.totalorder %s19, 0
        %s958 = scalar_select %p957, %s19, 0
        %s959 = smul.addr %s956, 2
        %s960 = sadd.s32 %s958, %s959
        %s961 = smul.addr %s960, 4
        %s962 = scalar_lea.vmem %s3, %s961
        // Predicated region
        $region156: #{vitb16_forward.12} parent=142 // pred_check
          %p963 = pneg %p134
        $region157: #{vitb16_forward.12} parent=142 // pred_check_branch
          %965 = sbr.rel (%p963) target = $region159
        $region158: #{vitb16_forward.12} parent=142 // pred_region
          _
        $region159: #{vitb16_forward.12} parent=142 // pred_fallthru
          _
      $region143: #{vitb16_forward.12} parent=5 // pred_fallthru
        _
      %p966 = scmp.le.s32.totalorder 2, %s9
      // Predicated region
      $region160: #{vitb16_forward.12} parent=5 // pred_check
        %p967 = pneg %p966
      $region161: #{vitb16_forward.12} parent=5 // pred_check_branch
        %969 = sbr.rel (%p967) target = $region163
      $region162: #{vitb16_forward.12} parent=5 // pred_region
        %s970 = ssub.s32 %s9, 2
        // Predicated region
        $region164: #{vitb16_forward.12} parent=162 // pred_check
          %p971 = pneg %p140
        $region165: #{vitb16_forward.12} parent=162 // pred_check_branch
          %973 = sbr.rel (%p971) target = $region167
        $region166: #{vitb16_forward.12} parent=162 // pred_region
          %p974 = scmp.lt.s32.totalorder %s20, 1
          %s975 = scalar_select %p974, %s20, 1
          %p976 = scmp.lt.s32.totalorder %s21, 0
          %s977 = scalar_select %p976, %s21, 0
          %s978 = smul.addr %s975, 2
          %s979 = sadd.s32 %s977, %s978
          %s980 = smul.addr %s979, 4
          %s981 = scalar_lea.vmem %s3, %s980
        $region167: #{vitb16_forward.12} parent=162 // pred_fallthru
          _
      $region163: #{vitb16_forward.12} parent=5 // pred_fallthru
        _
    $region6: #{vitb16_forward.12} parent=1 // loop_footer
      %s13 = sadd.s32 1, %s9
    $region7: #{vitb16_forward.12} parent=1 // loop_footer_branch
      %8 = sbr.rel target = $region3
    $region8: #{vitb16_forward.12} parent=1 // loop_exit
      _

// kernel: vitb16_forward.10
$region0: #{vitb16_forward.10}
  #allocation0 [shape = 'u32[]', space=smem, size = 0x4, offset = 0x4, fixed_abs, tag = 'smem constant byte address 0x4 - core index']
  #allocation1 [shape = 'u32[144,128]{1,0:T(1,128)}', space=vmem, size = 0x12000, scoped, tag = 'internal scratch']
  %s0 = inlined_call_operand.vmem [shape: bf16[8,768], index: 0, kind: input, shape index: {}]
  %s1 = inlined_call_operand.vmem [shape: bf16[768,128], index: 1, kind: input, shape index: {}]
  %s2 = inlined_call_operand.vmem [shape: f32[1,128], index: 2, kind: input, shape index: {}]
  %s3 = inlined_call_operand.vmem [shape: bf16[8,128], index: 3, kind: output, shape index: {}]
  %s4 = sld [smem:[#allocation0]]
  $region22: #{vitb16_forward.10} parent=0
    _
  %s6 = ssub.s32 1, %s4
  %s7 = scalar_select 0, %s6, %s4
  // Predicated region
  $region2: #{vitb16_forward.10} parent=0 // pred_check
    _
  $region3: #{vitb16_forward.10} parent=0 // pred_check_branch
    %9 = sbr.rel (0) target = $region5
  $region4: #{vitb16_forward.10} parent=0 // pred_region
    _
  $region5: #{vitb16_forward.10} parent=0 // pred_fallthru
    _
  // Predicated region
  $region6: #{vitb16_forward.10} parent=0 // pred_check
    _
  $region7: #{vitb16_forward.10} parent=0 // pred_check_branch
    %11 = sbr.rel (0) target = $region9
  $region8: #{vitb16_forward.10} parent=0 // pred_region
    _
  $region9: #{vitb16_forward.10} parent=0 // pred_fallthru
    _
  // Predicated region
  $region10: #{vitb16_forward.10} parent=0 // pred_check
    _
  $region11: #{vitb16_forward.10} parent=0 // pred_check_branch
    %13 = sbr.rel (0) target = $region13
  $region12: #{vitb16_forward.10} parent=0 // pred_region
    _
  $region13: #{vitb16_forward.10} parent=0 // pred_fallthru
    _
  %v15 = vld [vmem:[%s0] sm:$0xff]
  %v16 = vld [vmem:[%s0 + $0x8] sm:$0xff]
  %v17 = vld [vmem:[%s0 + $0x10] sm:$0xff]
  %v18 = vld [vmem:[%s1] sm:$0xf]
  %v19 = vld [vmem:[%s1 + $0x4] sm:$0xf]
  %v20 = vld [vmem:[%s1 + $0x8] sm:$0xf]
  %v21 = vld [vmem:[%s1 + $0xc] sm:$0xf]
  %v22 = vld [vmem:[%s1 + $0x10] sm:$0xf]
  %v23 = vld [vmem:[%s1 + $0x14] sm:$0xf]
  %v24 = vld [vmem:[%s1 + $0x18] sm:$0xf]
  %v25 = vld [vmem:[%s1 + $0x1c] sm:$0xf]
  %v26 = vld [vmem:[%s1 + $0x20] sm:$0xf]
  %v27 = vld [vmem:[%s1 + $0x24] sm:$0xf]
  %v28 = vld [vmem:[%s1 + $0x28] sm:$0xf]
  %v29 = vld [vmem:[%s1 + $0x2c] sm:$0xf]
  %v30 = vld [vmem:[%s1 + $0x30] sm:$0xf]
  %v31 = vld [vmem:[%s1 + $0x34] sm:$0xf]
  %v32 = vld [vmem:[%s1 + $0x38] sm:$0xf]
  %v33 = vld [vmem:[%s1 + $0x3c] sm:$0xf]
  %v34 = vld [vmem:[%s1 + $0x40] sm:$0xf]
  %v35 = vld [vmem:[%s1 + $0x44] sm:$0xf]
  %v36 = vld [vmem:[%s1 + $0x48] sm:$0xf]
  %v37 = vld [vmem:[%s1 + $0x4c] sm:$0xf]
  %v38 = vld [vmem:[%s1 + $0x50] sm:$0xf]
  %v39 = vld [vmem:[%s1 + $0x54] sm:$0xf]
  %v40 = vld [vmem:[%s1 + $0x58] sm:$0xf]
  %v41 = vld [vmem:[%s1 + $0x5c] sm:$0xf]
  %v42 = vld [vmem:[%s1 + $0x60] sm:$0xf]
  %v43 = vld [vmem:[%s1 + $0x64] sm:$0xf]
  %v44 = vld [vmem:[%s1 + $0x68] sm:$0xf]
  %v45 = vld [vmem:[%s1 + $0x6c] sm:$0xf]
  %v46 = vld [vmem:[%s1 + $0x70] sm:$0xf]
  %v47 = vld [vmem:[%s1 + $0x74] sm:$0xf]
  %v48 = vld [vmem:[%s1 + $0x78] sm:$0xf]
  %v49 = vld [vmem:[%s1 + $0x7c] sm:$0xf]
  %v50 = vld [vmem:[%s1 + $0x80] sm:$0xf]
  %v51 = vld [vmem:[%s1 + $0x84] sm:$0xf]
  %v52 = vld [vmem:[%s1 + $0x88] sm:$0xf]
  %v53 = vld [vmem:[%s1 + $0x8c] sm:$0xf]
  %v54 = vld [vmem:[%s1 + $0x90] sm:$0xf]
  %v55 = vld [vmem:[%s1 + $0x94] sm:$0xf]
  %v56 = vld [vmem:[%s1 + $0x98] sm:$0xf]
  %v57 = vld [vmem:[%s1 + $0x9c] sm:$0xf]
  %v58 = vld [vmem:[%s1 + $0xa0] sm:$0xf]
  %v59 = vld [vmem:[%s1 + $0xa4] sm:$0xf]
  %v60 = vld [vmem:[%s1 + $0xa8] sm:$0xf]
  %v61 = vld [vmem:[%s1 + $0xac] sm:$0xf]
  %v62 = vld [vmem:[%s1 + $0xb0] sm:$0xf]
  %v63 = vld [vmem:[%s1 + $0xb4] sm:$0xf]
  %v64 = vld [vmem:[%s1 + $0xb8] sm:$0xf]
  %v65 = vld [vmem:[%s1 + $0xbc] sm:$0xf]
  %v66 = vld [vmem:[%s1 + $0xc0] sm:$0xf]
  %v67 = vld [vmem:[%s1 + $0xc4] sm:$0xf]
  %v68 = vld [vmem:[%s1 + $0xc8] sm:$0xf]
  %v69 = vld [vmem:[%s1 + $0xcc] sm:$0xf]
  %v70 = vld [vmem:[%s1 + $0xd0] sm:$0xf]
  %v71 = vld [vmem:[%s1 + $0xd4] sm:$0xf]
  %v72 = vld [vmem:[%s1 + $0xd8] sm:$0xf]
  %v73 = vld [vmem:[%s1 + $0xdc] sm:$0xf]
  %v74 = vld [vmem:[%s1 + $0xe0] sm:$0xf]
  %v75 = vld [vmem:[%s1 + $0xe4] sm:$0xf]
  %v76 = vld [vmem:[%s1 + $0xe8] sm:$0xf]
  %v77 = vld [vmem:[%s1 + $0xec] sm:$0xf]
  %v78 = vld [vmem:[%s1 + $0xf0] sm:$0xf]
  %v79 = vld [vmem:[%s1 + $0xf4] sm:$0xf]
  %v80 = vld [vmem:[%s1 + $0xf8] sm:$0xf]
  %v81 = vld [vmem:[%s1 + $0xfc] sm:$0xf]
  %v82 = vld [vmem:[%s1 + $0x100] sm:$0xf]
  %v83 = vld [vmem:[%s1 + $0x104] sm:$0xf]
  %v84 = vld [vmem:[%s1 + $0x108] sm:$0xf]
  %v85 = vld [vmem:[%s1 + $0x10c] sm:$0xf]
  %v86 = vld [vmem:[%s1 + $0x110] sm:$0xf]
  %v87 = vld [vmem:[%s1 + $0x114] sm:$0xf]
  %v88 = vld [vmem:[%s1 + $0x118] sm:$0xf]
  %v89 = vld [vmem:[%s1 + $0x11c] sm:$0xf]
  %v90 = vld [vmem:[%s1 + $0x120] sm:$0xf]
  %v91 = vld [vmem:[%s1 + $0x124] sm:$0xf]
  %v92 = vld [vmem:[%s1 + $0x128] sm:$0xf]
  %v93 = vld [vmem:[%s1 + $0x12c] sm:$0xf]
  %v94 = vld [vmem:[%s1 + $0x130] sm:$0xf]
  %v95 = vld [vmem:[%s1 + $0x134] sm:$0xf]
  %v96 = vld [vmem:[%s1 + $0x138] sm:$0xf]
  %v97 = vld [vmem:[%s1 + $0x13c] sm:$0xf]
  %v98 = vld [vmem:[%s1 + $0x140] sm:$0xf]
  %v99 = vld [vmem:[%s1 + $0x144] sm:$0xf]
  %v100 = vld [vmem:[%s1 + $0x148] sm:$0xf]
  %v101 = vld [vmem:[%s1 + $0x14c] sm:$0xf]
  %v102 = vld [vmem:[%s1 + $0x150] sm:$0xf]
  %v103 = vld [vmem:[%s1 + $0x154] sm:$0xf]
  %v104 = vld [vmem:[%s1 + $0x158] sm:$0xf]
  %v105 = vld [vmem:[%s1 + $0x15c] sm:$0xf]
  %v106 = vld [vmem:[%s1 + $0x160] sm:$0xf]
  %v107 = vld [vmem:[%s1 + $0x164] sm:$0xf]
  %v108 = vld [vmem:[%s1 + $0x168] sm:$0xf]
  %v109 = vld [vmem:[%s1 + $0x16c] sm:$0xf]
  %v110 = vld [vmem:[%s1 + $0x170] sm:$0xf]
  %v111 = vld [vmem:[%s1 + $0x174] sm:$0xf]
  %v112 = vld [vmem:[%s1 + $0x178] sm:$0xf]
  %v113 = vld [vmem:[%s1 + $0x17c] sm:$0xf]
  %v114 = vld [vmem:[%s2] sm:$0x1]
  %v116 = vlaneseq
  %v117 = vshrl.u32 %v116, 7
  %v118 = vsub.s32 0, %v117
  %v119 = vrot.slane %v114, %v118
  %v124 = vunpack.c.l.b16 %v15
  %v125 = vunpack.c.h.b16 %v15
  %v126 = vunpack.c.l.b16 %v16
  %v127 = vunpack.c.h.b16 %v16
  %v128 = vunpack.c.l.b16 %v17
  %v129 = vunpack.c.h.b16 %v17
  %v130 = vpack.c.b16 %v124, %v124
  %v131 = vpack.c.b16 %v125, %v125
  %v132 = vpack.c.b16 %v126, %v126
  %v133 = vpack.c.b16 %v127, %v127
  %v134 = vpack.c.b16 %v128, %v128
  %v135 = vpack.c.b16 %v129, %v129
  %v238 = vunpack.c.l.b16 %v18
  %v239 = vunpack.c.l.b16 %v19
  %v240 = vunpack.c.l.b16 %v20
  %v241 = vunpack.c.l.b16 %v21
  %v242 = vunpack.c.l.b16 %v22
  %v243 = vunpack.c.l.b16 %v23
  %v244 = vunpack.c.l.b16 %v24
  %v245 = vunpack.c.l.b16 %v25
  %v246 = vunpack.c.l.b16 %v26
  %v247 = vunpack.c.l.b16 %v27
  %v248 = vunpack.c.l.b16 %v28
  %v249 = vunpack.c.l.b16 %v29
  %v250 = vunpack.c.l.b16 %v30
  %v251 = vunpack.c.l.b16 %v31
  %v252 = vunpack.c.l.b16 %v32
  %v253 = vunpack.c.l.b16 %v33
  %v254 = vunpack.c.l.b16 %v34
  %v255 = vunpack.c.l.b16 %v35
  %v256 = vunpack.c.l.b16 %v36
  %v257 = vunpack.c.l.b16 %v37
  %v258 = vunpack.c.l.b16 %v38
  %v259 = vunpack.c.l.b16 %v39
  %v260 = vunpack.c.l.b16 %v40
  %v261 = vunpack.c.l.b16 %v41
  %v262 = vunpack.c.l.b16 %v42
  %v263 = vunpack.c.l.b16 %v43
  %v264 = vunpack.c.l.b16 %v44
  %v265 = vunpack.c.l.b16 %v45
  %v266 = vunpack.c.l.b16 %v46
  %v267 = vunpack.c.l.b16 %v47
  %v268 = vunpack.c.l.b16 %v48
  %v269 = vunpack.c.l.b16 %v49
  %v270 = vunpack.c.l.b16 %v50
  %v271 = vunpack.c.l.b16 %v51
  %v272 = vunpack.c.l.b16 %v52
  %v273 = vunpack.c.l.b16 %v53
  %v274 = vunpack.c.l.b16 %v54
  %v275 = vunpack.c.l.b16 %v55
  %v276 = vunpack.c.l.b16 %v56
  %v277 = vunpack.c.l.b16 %v57
  %v278 = vunpack.c.l.b16 %v58
  %v279 = vunpack.c.l.b16 %v59
  %v280 = vunpack.c.l.b16 %v60
  %v281 = vunpack.c.l.b16 %v61
  %v282 = vunpack.c.l.b16 %v62
  %v283 = vunpack.c.l.b16 %v63
  %v284 = vunpack.c.l.b16 %v64
  %v285 = vunpack.c.l.b16 %v65
  %v286 = vunpack.c.l.b16 %v66
  %v287 = vunpack.c.l.b16 %v67
  %v288 = vunpack.c.l.b16 %v68
  %v289 = vunpack.c.l.b16 %v69
  %v290 = vunpack.c.l.b16 %v70
  %v291 = vunpack.c.l.b16 %v71
  %v292 = vunpack.c.l.b16 %v72
  %v293 = vunpack.c.l.b16 %v73
  %v294 = vunpack.c.l.b16 %v74
  %v295 = vunpack.c.l.b16 %v75
  %v296 = vunpack.c.l.b16 %v76
  %v297 = vunpack.c.l.b16 %v77
  %v298 = vunpack.c.l.b16 %v78
  %v299 = vunpack.c.l.b16 %v79
  %v300 = vunpack.c.l.b16 %v80
  %v301 = vunpack.c.l.b16 %v81
  %v302 = vunpack.c.l.b16 %v82
  %v303 = vunpack.c.l.b16 %v83
  %v304 = vunpack.c.l.b16 %v84
  %v305 = vunpack.c.l.b16 %v85
  %v306 = vunpack.c.l.b16 %v86
  %v307 = vunpack.c.l.b16 %v87
  %v308 = vunpack.c.l.b16 %v88
  %v309 = vunpack.c.l.b16 %v89
  %v310 = vunpack.c.l.b16 %v90
  %v311 = vunpack.c.l.b16 %v91
  %v312 = vunpack.c.l.b16 %v92
  %v313 = vunpack.c.l.b16 %v93
  %v314 = vunpack.c.l.b16 %v94
  %v315 = vunpack.c.l.b16 %v95
  %v316 = vunpack.c.l.b16 %v96
  %v317 = vunpack.c.l.b16 %v97
  %v318 = vunpack.c.l.b16 %v98
  %v319 = vunpack.c.l.b16 %v99
  %v320 = vunpack.c.l.b16 %v100
  %v321 = vunpack.c.l.b16 %v101
  %v322 = vunpack.c.l.b16 %v102
  %v323 = vunpack.c.l.b16 %v103
  %v324 = vunpack.c.l.b16 %v104
  %v325 = vunpack.c.l.b16 %v105
  %v326 = vunpack.c.l.b16 %v106
  %v327 = vunpack.c.l.b16 %v107
  %v328 = vunpack.c.l.b16 %v108
  %v329 = vunpack.c.l.b16 %v109
  %v330 = vunpack.c.l.b16 %v110
  %v331 = vunpack.c.l.b16 %v111
  %v332 = vunpack.c.l.b16 %v112
  %v333 = vunpack.c.l.b16 %v113
  %v334 = vpack.c.b16 %v239, %v238
  %v335 = vpack.c.b16 %v241, %v240
  %v336 = vpack.c.b16 %v243, %v242
  %v337 = vpack.c.b16 %v245, %v244
  %v338 = vpack.c.b16 %v247, %v246
  %v339 = vpack.c.b16 %v249, %v248
  %v340 = vpack.c.b16 %v251, %v250
  %v341 = vpack.c.b16 %v253, %v252
  %v342 = vpack.c.b16 %v255, %v254
  %v343 = vpack.c.b16 %v257, %v256
  %v344 = vpack.c.b16 %v259, %v258
  %v345 = vpack.c.b16 %v261, %v260
  %v346 = vpack.c.b16 %v263, %v262
  %v347 = vpack.c.b16 %v265, %v264
  %v348 = vpack.c.b16 %v267, %v266
  %v349 = vpack.c.b16 %v269, %v268
  %v350 = vpack.c.b16 %v271, %v270
  %v351 = vpack.c.b16 %v273, %v272
  %v352 = vpack.c.b16 %v275, %v274
  %v353 = vpack.c.b16 %v277, %v276
  %v354 = vpack.c.b16 %v279, %v278
  %v355 = vpack.c.b16 %v281, %v280
  %v356 = vpack.c.b16 %v283, %v282
  %v357 = vpack.c.b16 %v285, %v284
  %v358 = vpack.c.b16 %v287, %v286
  %v359 = vpack.c.b16 %v289, %v288
  %v360 = vpack.c.b16 %v291, %v290
  %v361 = vpack.c.b16 %v293, %v292
  %v362 = vpack.c.b16 %v295, %v294
  %v363 = vpack.c.b16 %v297, %v296
  %v364 = vpack.c.b16 %v299, %v298
  %v365 = vpack.c.b16 %v301, %v300
  %v366 = vpack.c.b16 %v303, %v302
  %v367 = vpack.c.b16 %v305, %v304
  %v368 = vpack.c.b16 %v307, %v306
  %v369 = vpack.c.b16 %v309, %v308
  %v370 = vpack.c.b16 %v311, %v310
  %v371 = vpack.c.b16 %v313, %v312
  %v372 = vpack.c.b16 %v315, %v314
  %v373 = vpack.c.b16 %v317, %v316
  %v374 = vpack.c.b16 %v319, %v318
  %v375 = vpack.c.b16 %v321, %v320
  %v376 = vpack.c.b16 %v323, %v322
  %v377 = vpack.c.b16 %v325, %v324
  %v378 = vpack.c.b16 %v327, %v326
  %v379 = vpack.c.b16 %v329, %v328
  %v380 = vpack.c.b16 %v331, %v330
  %v381 = vpack.c.b16 %v333, %v332
  %430 = vmatprep.subr.bf16.mxu0 0
  %431 = vmatpush1.bf16.msra.mxu0 %v334
  %432 = vmatprep.subr.bf16.mxu0 0
  %433 = vmatpush1.bf16.msra.mxu0 %v335
  %434 = vmatprep.subr.bf16.mxu0 0
  %435 = vmatpush1.bf16.msra.mxu0 %v336
  %436 = vmatprep.subr.bf16.mxu0 0
  %437 = vmatpush1.bf16.msra.mxu0 %v337
  %438 = vmatprep.subr.bf16.mxu0 0
  %439 = vmatpush1.bf16.msra.mxu0 %v338
  %440 = vmatprep.subr.bf16.mxu0 0
  %441 = vmatpush1.bf16.msra.mxu0 %v339
  %442 = vmatprep.subr.bf16.mxu0 0
  %443 = vmatpush1.bf16.msra.mxu0 %v340
  %444 = vmatprep.subr.bf16.mxu0 0
  %445 = vmatpush1.bf16.msra.mxu0 %v341
  %446 = vmatprep.subr.bf16.mxu0 0
  %447 = vmatpush1.bf16.msra.mxu0 %v342
  %448 = vmatprep.subr.bf16.mxu0 0
  %449 = vmatpush1.bf16.msra.mxu0 %v343
  %450 = vmatprep.subr.bf16.mxu0 0
  %451 = vmatpush1.bf16.msra.mxu0 %v344
  %452 = vmatprep.subr.bf16.mxu0 0
  %453 = vmatpush1.bf16.msra.mxu0 %v345
  %454 = vmatprep.subr.bf16.mxu0 0
  %455 = vmatpush1.bf16.msra.mxu0 %v346
  %456 = vmatprep.subr.bf16.mxu0 0
  %457 = vmatpush1.bf16.msra.mxu0 %v347
  %458 = vmatprep.subr.bf16.mxu0 0
  %459 = vmatpush1.bf16.msra.mxu0 %v348
  %460 = vmatprep.subr.bf16.mxu0 0
  %461 = vmatpush1.bf16.msra.mxu0 %v349
  %462 = vmatprep.mubr.bf16.mxu0 %v131
  %463 = vmatmul.mubr.bf16.gmra.mrb[0].mxu0 %v130
  %v464 = vpop.f32.mrb[0].mxu0
  %v465 = vadd.f32 %v119, %v464
  %v466 = vpop.f32.mrb[0].mxu0
  %v467 = vpop.f32.mrb[0].mxu0
  %v468 = vpop.f32.mrb[0].mxu0
  %469 = vdwg.mxu0
  %470 = vmatprep.subr.bf16.mxu0 0
  %471 = vmatpush1.bf16.msra.mxu0 %v350
  %472 = vmatprep.subr.bf16.mxu0 0
  %473 = vmatpush1.bf16.msra.mxu0 %v351
  %474 = vmatprep.subr.bf16.mxu0 0
  %475 = vmatpush1.bf16.msra.mxu0 %v352
  %476 = vmatprep.subr.bf16.mxu0 0
  %477 = vmatpush1.bf16.msra.mxu0 %v353
  %478 = vmatprep.subr.bf16.mxu0 0
  %479 = vmatpush1.bf16.msra.mxu0 %v354
  %480 = vmatprep.subr.bf16.mxu0 0
  %481 = vmatpush1.bf16.msra.mxu0 %v355
  %482 = vmatprep.subr.bf16.mxu0 0
  %483 = vmatpush1.bf16.msra.mxu0 %v356
  %484 = vmatprep.subr.bf16.mxu0 0
  %485 = vmatpush1.bf16.msra.mxu0 %v357
  %486 = vmatprep.subr.bf16.mxu0 0
  %487 = vmatpush1.bf16.msra.mxu0 %v358
  %488 = vmatprep.subr.bf16.mxu0 0
  %489 = vmatpush1.bf16.msra.mxu0 %v359
  %490 = vmatprep.subr.bf16.mxu0 0
  %491 = vmatpush1.bf16.msra.mxu0 %v360
  %492 = vmatprep.subr.bf16.mxu0 0
  %493 = vmatpush1.bf16.msra.mxu0 %v361
  %494 = vmatprep.subr.bf16.mxu0 0
  %495 = vmatpush1.bf16.msra.mxu0 %v362
  %496 = vmatprep.subr.bf16.mxu0 0
  %497 = vmatpush1.bf16.msra.mxu0 %v363
  %498 = vmatprep.subr.bf16.mxu0 0
  %499 = vmatpush1.bf16.msra.mxu0 %v364
  %500 = vmatprep.subr.bf16.mxu0 0
  %501 = vmatpush1.bf16.msra.mxu0 %v365
  %502 = vmatprep.mubr.bf16.mxu0 %v133
  %503 = vmatmul.mubr.bf16.gmra.mrb[0].mxu0 %v132
  %v504 = vpop.f32.mrb[0].mxu0
  %v505 = vadd.f32 %v465, %v504
  %v506 = vpop.f32.mrb[0].mxu0
  %v507 = vpop.f32.mrb[0].mxu0
  %v508 = vpop.f32.mrb[0].mxu0
  %509 = vdwg.mxu0
  %510 = vmatprep.subr.bf16.mxu0 0
  %511 = vmatpush1.bf16.msra.mxu0 %v366
  %512 = vmatprep.subr.bf16.mxu0 0
  %513 = vmatpush1.bf16.msra.mxu0 %v367
  %514 = vmatprep.subr.bf16.mxu0 0
  %515 = vmatpush1.bf16.msra.mxu0 %v368
  %516 = vmatprep.subr.bf16.mxu0 0
  %517 = vmatpush1.bf16.msra.mxu0 %v369
  %518 = vmatprep.subr.bf16.mxu0 0
  %519 = vmatpush1.bf16.msra.mxu0 %v370
  %520 = vmatprep.subr.bf16.mxu0 0
  %521 = vmatpush1.bf16.msra.mxu0 %v371
  %522 = vmatprep.subr.bf16.mxu0 0
  %523 = vmatpush1.bf16.msra.mxu0 %v372
  %524 = vmatprep.subr.bf16.mxu0 0
  %525 = vmatpush1.bf16.msra.mxu0 %v373
  %526 = vmatprep.subr.bf16.mxu0 0
  %527 = vmatpush1.bf16.msra.mxu0 %v374
  %528 = vmatprep.subr.bf16.mxu0 0
  %529 = vmatpush1.bf16.msra.mxu0 %v375
  %530 = vmatprep.subr.bf16.mxu0 0
  %531 = vmatpush1.bf16.msra.mxu0 %v376
  %532 = vmatprep.subr.bf16.mxu0 0
  %533 = vmatpush1.bf16.msra.mxu0 %v377
  %534 = vmatprep.subr.bf16.mxu0 0
  %535 = vmatpush1.bf16.msra.mxu0 %v378
  %536 = vmatprep.subr.bf16.mxu0 0
  %537 = vmatpush1.bf16.msra.mxu0 %v379
  %538 = vmatprep.subr.bf16.mxu0 0
  %539 = vmatpush1.bf16.msra.mxu0 %v380
  %540 = vmatprep.subr.bf16.mxu0 0
  %541 = vmatpush1.bf16.msra.mxu0 %v381
  %542 = vmatprep.mubr.bf16.mxu0 %v135
  %543 = vmatmul.mubr.bf16.gmra.mrb[0].mxu0 %v134
  %v544 = vpop.f32.mrb[0].mxu0
  %v545 = vadd.f32 %v505, %v544
  %v546 = vpop.f32.mrb[0].mxu0
  %v547 = vpop.f32.mrb[0].mxu0
  %v548 = vpop.f32.mrb[0].mxu0
  %549 = vdwg.mxu0
  %v550 = vpack.c.bf16 %v545, %v545
  %551 = vst [vmem:[%s3] sm:$0xf] %v550
  // Predicated region
  $region14: #{vitb16_forward.10} parent=0 // pred_check
    _
  $region15: #{vitb16_forward.10} parent=0 // pred_check_branch
    %553 = sbr.rel (0) target = $region17
  $region16: #{vitb16_forward.10} parent=0 // pred_region
    _
  $region17: #{vitb16_forward.10} parent=0 // pred_fallthru
    _
  // Predicated region
  $region18: #{vitb16_forward.10} parent=0 // pred_check
    _
  $region19: #{vitb16_forward.10} parent=0 // pred_check_branch
    %555 = sbr.rel (0) target = $region21
  $region20: #{vitb16_forward.10} parent=0 // pred_region
    _
  $region21: #{vitb16_forward.10} parent=0 // pred_fallthru
    _

// kernel: vitb16_forward.11
$region0: #{vitb16_forward.11}
  #allocation0 [shape = 'u32[]', space=smem, size = 0x4, offset = 0x4, fixed_abs, tag = 'smem constant byte address 0x4 - core index']
  #allocation1 [shape = 'u32[144,128]{1,0:T(1,128)}', space=vmem, size = 0x12000, scoped, tag = 'internal scratch']
  #allocation2 [shape = 'bf16[32,128]{1,0:T(16,128)(2,1)}', space=vmem, size = 0x2000, scoped, tag = 'scratch operand']
  %s0 = inlined_call_operand.vmem [shape: bf16[32,128], index: 0, kind: input, shape index: {}]
  %s1 = inlined_call_operand.vmem [shape: f32[1,128], index: 1, kind: input, shape index: {}]
  %s2 = inlined_call_operand.vmem [shape: f32[1,128], index: 2, kind: input, shape index: {}]
  %s3 = inlined_call_operand.vmem [shape: bf16[128,384], index: 3, kind: input, shape index: {}]
  %s4 = inlined_call_operand.vmem [shape: f32[1,384], index: 4, kind: input, shape index: {}]
  %s5 = inlined_call_operand.vmem [shape: bf16[32,384], index: 5, kind: output, shape index: {}]
  %s6 = sld [smem:[#allocation0]]
  $region34: #{vitb16_forward.11} parent=0
    _
  %s8 = ssub.s32 1, %s6
  %s9 = scalar_select 0, %s8, %s6
  // Predicated region
  $region2: #{vitb16_forward.11} parent=0 // pred_check
    _
  $region3: #{vitb16_forward.11} parent=0 // pred_check_branch
    %11 = sbr.rel (0) target = $region5
  $region4: #{vitb16_forward.11} parent=0 // pred_region
    _
  $region5: #{vitb16_forward.11} parent=0 // pred_fallthru
    _
  // Predicated region
  $region6: #{vitb16_forward.11} parent=0 // pred_check
    _
  $region7: #{vitb16_forward.11} parent=0 // pred_check_branch
    %13 = sbr.rel (0) target = $region9
  $region8: #{vitb16_forward.11} parent=0 // pred_region
    _
  $region9: #{vitb16_forward.11} parent=0 // pred_fallthru
    _
  // Predicated region
  $region10: #{vitb16_forward.11} parent=0 // pred_check
    _
  $region11: #{vitb16_forward.11} parent=0 // pred_check_branch
    %15 = sbr.rel (0) target = $region13
  $region12: #{vitb16_forward.11} parent=0 // pred_region
    _
  $region13: #{vitb16_forward.11} parent=0 // pred_fallthru
    _
  // Predicated region
  $region14: #{vitb16_forward.11} parent=0 // pred_check
    _
  $region15: #{vitb16_forward.11} parent=0 // pred_check_branch
    %17 = sbr.rel (0) target = $region17
  $region16: #{vitb16_forward.11} parent=0 // pred_region
    _
  $region17: #{vitb16_forward.11} parent=0 // pred_fallthru
    _
  // Predicated region
  $region18: #{vitb16_forward.11} parent=0 // pred_check
    _
  $region19: #{vitb16_forward.11} parent=0 // pred_check_branch
    %19 = sbr.rel (0) target = $region21
  $region20: #{vitb16_forward.11} parent=0 // pred_region
    _
  $region21: #{vitb16_forward.11} parent=0 // pred_fallthru
    _
  %p21 = scmp.eq.s32.totalorder 0, 0
  // Predicated region
  $region22: #{vitb16_forward.11} parent=0 // pred_check
    %p22 = pneg %p21
  $region23: #{vitb16_forward.11} parent=0 // pred_check_branch
    %24 = sbr.rel (%p22) target = $region25
  $region24: #{vitb16_forward.11} parent=0 // pred_region
    %v25 = vld [vmem:[%s0] sm:$0xf]
    %v26 = vld [vmem:[%s0 + $0x4] sm:$0xf]
    %v27 = vld [vmem:[%s0 + $0x8] sm:$0xf]
    %v28 = vld [vmem:[%s0 + $0xc] sm:$0xf]
    %v29 = vunpack.c.l.bf16 %v25
    %v30 = vunpack.c.l.bf16 %v26
    %v31 = vunpack.c.l.bf16 %v27
    %v32 = vunpack.c.l.bf16 %v28
    %33 = vadd.xlane.f32.xlu0 %v29
    %v34 = vpop.xlane.xlu0 %33
    %35 = vadd.xlane.f32.xlu0 %v30
    %v36 = vpop.xlane.xlu0 %35
    %37 = vadd.xlane.f32.xlu0 %v31
    %v38 = vpop.xlane.xlu0 %37
    %39 = vadd.xlane.f32.xlu0 %v32
    %v40 = vpop.xlane.xlu0 %39
    %v41 = vrcp.pop 128.0
    %v42 = vmul.f32 %v34, %v41
    %v43 = vmul.f32 %v36, %v41
    %v44 = vmul.f32 %v38, %v41
    %v45 = vmul.f32 %v40, %v41
    %v46 = vsub.f32 %v29, %v42
    %v47 = vsub.f32 %v30, %v43
    %v48 = vsub.f32 %v31, %v44
    %v49 = vsub.f32 %v32, %v45
    %v50 = vmul.f32 %v46, %v46
    %v51 = vmul.f32 %v47, %v47
    %v52 = vmul.f32 %v48, %v48
    %v53 = vmul.f32 %v49, %v49
    %54 = vadd.xlane.f32.xlu0 %v50
    %v55 = vpop.xlane.xlu0 %54
    %56 = vadd.xlane.f32.xlu0 %v51
    %v57 = vpop.xlane.xlu0 %56
    %58 = vadd.xlane.f32.xlu0 %v52
    %v59 = vpop.xlane.xlu0 %58
    %60 = vadd.xlane.f32.xlu0 %v53
    %v61 = vpop.xlane.xlu0 %60
    %v62 = vmul.f32 %v55, %v41
    %v63 = vmul.f32 %v57, %v41
    %v64 = vmul.f32 %v59, %v41
    %v65 = vmul.f32 %v61, %v41
    %v66 = vadd.f32 %v62, 1e-06
    %v67 = vadd.f32 %v63, 1e-06
    %v68 = vadd.f32 %v64, 1e-06
    %v69 = vadd.f32 %v65, 1e-06
    %v70 = vrsqrt.pop %v66
    %v71 = vrsqrt.pop %v67
    %v72 = vrsqrt.pop %v68
    %v73 = vrsqrt.pop %v69
    %v74 = vmul.f32 %v46, %v70
    %v75 = vmul.f32 %v47, %v71
    %v76 = vmul.f32 %v48, %v72
    %v77 = vmul.f32 %v49, %v73
    %v78 = vld [vmem:[%s1] sm:$0x1]
    %v80 = vlaneseq
    %v81 = vshrl.u32 %v80, 7
    %v82 = vsub.s32 0, %v81
    %v83 = vrot.slane %v78, %v82
    %v85 = vmul.f32 %v74, %v83
    %v86 = vmul.f32 %v75, %v83
    %v87 = vmul.f32 %v76, %v83
    %v88 = vmul.f32 %v77, %v83
    %v89 = vld [vmem:[%s2] sm:$0x1]
    %v91 = vlaneseq
    %v92 = vshrl.u32 %v91, 7
    %v93 = vsub.s32 0, %v92
    %v94 = vrot.slane %v89, %v93
    %v96 = vadd.f32 %v85, %v94
    %v97 = vadd.f32 %v86, %v94
    %v98 = vadd.f32 %v87, %v94
    %v99 = vadd.f32 %v88, %v94
    %v100 = vpack.c.bf16 %v97, %v96
    %v101 = vpack.c.bf16 %v99, %v98
    %102 = vst [vmem:[#allocation2] sm:$0xff] %v100
    %103 = vst [vmem:[#allocation2 + $0x8] sm:$0xff] %v101
  $region25: #{vitb16_forward.11} parent=0 // pred_fallthru
    _
  %v104 = vld [vmem:[#allocation2] sm:$0xff]
  %v105 = vld [vmem:[#allocation2 + $0x8] sm:$0xff]
  %v106 = vld [vmem:[%s3] sm:$0xff]
  %v107 = vld [vmem:[%s3 + $0x8] sm:$0xf]
  %v108 = vld [vmem:[%s3 + $0xc] sm:$0xff]
  %v109 = vld [vmem:[%s3 + $0x14] sm:$0xf]
  %v110 = vld [vmem:[%s3 + $0x18] sm:$0xff]
  %v111 = vld [vmem:[%s3 + $0x20] sm:$0xf]
  %v112 = vld [vmem:[%s3 + $0x24] sm:$0xff]
  %v113 = vld [vmem:[%s3 + $0x2c] sm:$0xf]
  %v114 = vld [vmem:[%s3 + $0x30] sm:$0xff]
  %v115 = vld [vmem:[%s3 + $0x38] sm:$0xf]
  %v116 = vld [vmem:[%s3 + $0x3c] sm:$0xff]
  %v117 = vld [vmem:[%s3 + $0x44] sm:$0xf]
  %v118 = vld [vmem:[%s3 + $0x48] sm:$0xff]
  %v119 = vld [vmem:[%s3 + $0x50] sm:$0xf]
  %v120 = vld [vmem:[%s3 + $0x54] sm:$0xff]
  %v121 = vld [vmem:[%s3 + $0x5c] sm:$0xf]
  %v122 = vld [vmem:[%s3 + $0x60] sm:$0xff]
  %v123 = vld [vmem:[%s3 + $0x68] sm:$0xf]
  %v124 = vld [vmem:[%s3 + $0x6c] sm:$0xff]
  %v125 = vld [vmem:[%s3 + $0x74] sm:$0xf]
  %v126 = vld [vmem:[%s3 + $0x78] sm:$0xff]
  %v127 = vld [vmem:[%s3 + $0x80] sm:$0xf]
  %v128 = vld [vmem:[%s3 + $0x84] sm:$0xff]
  %v129 = vld [vmem:[%s3 + $0x8c] sm:$0xf]
  %v130 = vld [vmem:[%s3 + $0x90] sm:$0xff]
  %v131 = vld [vmem:[%s3 + $0x98] sm:$0xf]
  %v132 = vld [vmem:[%s3 + $0x9c] sm:$0xff]
  %v133 = vld [vmem:[%s3 + $0xa4] sm:$0xf]
  %v134 = vld [vmem:[%s3 + $0xa8] sm:$0xff]
  %v135 = vld [vmem:[%s3 + $0xb0] sm:$0xf]
  %v136 = vld [vmem:[%s3 + $0xb4] sm:$0xff]
  %v137 = vld [vmem:[%s3 + $0xbc] sm:$0xf]
  %v138 = vld [vmem:[%s4] sm:$0x7]
  %v140 = vlaneseq
  %v141 = vshrl.u32 %v140, 7
  %v142 = vsub.s32 0, %v141
  %v143 = vrot.slane %v138, %v142
  %v144 = vlaneseq
  %v145 = vshrl.u32 %v144, 7
  %v146 = vsub.s32 1, %v145
  %v147 = vrot.slane %v138, %v146
  %v148 = vlaneseq
  %v149 = vshrl.u32 %v148, 7
  %v150 = vsub.s32 2, %v149
  %v151 = vrot.slane %v138, %v150
  %v187 = vunpack.c.l.b16 %v106
  %v188 = vunpack.c.h.b16 %v106
  %v189 = vunpack.c.l.b16 %v107
  %v190 = vunpack.c.l.b16 %v108
  %v191 = vunpack.c.h.b16 %v108
  %v192 = vunpack.c.l.b16 %v109
  %v193 = vunpack.c.l.b16 %v110
  %v194 = vunpack.c.h.b16 %v110
  %v195 = vunpack.c.l.b16 %v111
  %v196 = vunpack.c.l.b16 %v112
  %v197 = vunpack.c.h.b16 %v112
  %v198 = vunpack.c.l.b16 %v113
  %v199 = vunpack.c.l.b16 %v114
  %v200 = vunpack.c.h.b16 %v114
  %v201 = vunpack.c.l.b16 %v115
  %v202 = vunpack.c.l.b16 %v116
  %v203 = vunpack.c.h.b16 %v116
  %v204 = vunpack.c.l.b16 %v117
  %v205 = vunpack.c.l.b16 %v118
  %v206 = vunpack.c.h.b16 %v118
  %v207 = vunpack.c.l.b16 %v119
  %v208 = vunpack.c.l.b16 %v120
  %v209 = vunpack.c.h.b16 %v120
  %v210 = vunpack.c.l.b16 %v121
  %v211 = vunpack.c.l.b16 %v122
  %v212 = vunpack.c.h.b16 %v122
  %v213 = vunpack.c.l.b16 %v123
  %v214 = vunpack.c.l.b16 %v124
  %v215 = vunpack.c.h.b16 %v124
  %v216 = vunpack.c.l.b16 %v125
  %v217 = vunpack.c.l.b16 %v126
  %v218 = vunpack.c.h.b16 %v126
  %v219 = vunpack.c.l.b16 %v127
  %v220 = vunpack.c.l.b16 %v128
  %v221 = vunpack.c.h.b16 %v128
  %v222 = vunpack.c.l.b16 %v129
  %v223 = vunpack.c.l.b16 %v130
  %v224 = vunpack.c.h.b16 %v130
  %v225 = vunpack.c.l.b16 %v131
  %v226 = vunpack.c.l.b16 %v132
  %v227 = vunpack.c.h.b16 %v132
  %v228 = vunpack.c.l.b16 %v133
  %v229 = vunpack.c.l.b16 %v134
  %v230 = vunpack.c.h.b16 %v134
  %v231 = vunpack.c.l.b16 %v135
  %v232 = vunpack.c.l.b16 %v136
  %v233 = vunpack.c.h.b16 %v136
  %v234 = vunpack.c.l.b16 %v137
  %v235 = vpack.c.b16 %v190, %v187
  %v236 = vpack.c.b16 %v191, %v188
  %v237 = vpack.c.b16 %v192, %v189
  %v238 = vpack.c.b16 %v196, %v193
  %v239 = vpack.c.b16 %v197, %v194
  %v240 = vpack.c.b16 %v198, %v195
  %v241 = vpack.c.b16 %v202, %v199
  %v242 = vpack.c.b16 %v203, %v200
  %v243 = vpack.c.b16 %v204, %v201
  %v244 = vpack.c.b16 %v208, %v205
  %v245 = vpack.c.b16 %v209, %v206
  %v246 = vpack.c.b16 %v210, %v207
  %v247 = vpack.c.b16 %v214, %v211
  %v248 = vpack.c.b16 %v215, %v212
  %v249 = vpack.c.b16 %v216, %v213
  %v250 = vpack.c.b16 %v220, %v217
  %v251 = vpack.c.b16 %v221, %v218
  %v252 = vpack.c.b16 %v222, %v219
  %v253 = vpack.c.b16 %v226, %v223
  %v254 = vpack.c.b16 %v227, %v224
  %v255 = vpack.c.b16 %v228, %v225
  %v256 = vpack.c.b16 %v232, %v229
  %v257 = vpack.c.b16 %v233, %v230
  %v258 = vpack.c.b16 %v234, %v231
  %283 = vmatprep.subr.bf16.mxu0 %v236
  %284 = vmatpush1.bf16.msra.mxu0 %v235
  %285 = vmatprep.subr.bf16.mxu0 %v239
  %286 = vmatpush1.bf16.msra.mxu0 %v238
  %287 = vmatprep.subr.bf16.mxu0 %v242
  %288 = vmatpush1.bf16.msra.mxu0 %v241
  %289 = vmatprep.subr.bf16.mxu0 %v245
  %290 = vmatpush1.bf16.msra.mxu0 %v244
  %291 = vmatprep.subr.bf16.mxu0 %v248
  %292 = vmatpush1.bf16.msra.mxu0 %v247
  %293 = vmatprep.subr.bf16.mxu0 %v251
  %294 = vmatpush1.bf16.msra.mxu0 %v250
  %295 = vmatprep.subr.bf16.mxu0 %v254
  %296 = vmatpush1.bf16.msra.mxu0 %v253
  %297 = vmatprep.subr.bf16.mxu0 %v257
  %298 = vmatpush1.bf16.msra.mxu0 %v256
  %299 = vmatprep.subr.bf16.mxu0 0
  %300 = vmatpush1.bf16.msra.mxu0 0
  %301 = vmatprep.subr.bf16.mxu0 0
  %302 = vmatpush1.bf16.msra.mxu0 0
  %303 = vmatprep.subr.bf16.mxu0 0
  %304 = vmatpush1.bf16.msra.mxu0 0
  %305 = vmatprep.subr.bf16.mxu0 0
  %306 = vmatpush1.bf16.msra.mxu0 0
  %307 = vmatprep.subr.bf16.mxu0 0
  %308 = vmatpush1.bf16.msra.mxu0 0
  %309 = vmatprep.subr.bf16.mxu0 0
  %310 = vmatpush1.bf16.msra.mxu0 0
  %311 = vmatprep.subr.bf16.mxu0 0
  %312 = vmatpush1.bf16.msra.mxu0 0
  %313 = vmatprep.subr.bf16.mxu0 0
  %314 = vmatpush1.bf16.msra.mxu0 0
  %315 = vmatprep.mubr.bf16.mxu0 0
  %316 = vmatmul.mubr.bf16.gmra.mrb[0].mxu0 %v104
  %v317 = vpop.f32.mrb[0].mxu0
  %v318 = vadd.f32 %v143, %v317
  %v319 = vpop.f32.mrb[0].mxu0
  %v320 = vadd.f32 %v147, %v319
  %v321 = vpop.f32.mrb[0].mxu0
  %v322 = vadd.f32 %v143, %v321
  %v323 = vpop.f32.mrb[0].mxu0
  %v324 = vadd.f32 %v147, %v323
  %325 = vmatprep.mubr.bf16.mxu0 0
  %326 = vmatmul.mubr.bf16.gmra.mrb[0].mxu0 %v105
  %v327 = vpop.f32.mrb[0].mxu0
  %v328 = vadd.f32 %v143, %v327
  %v329 = vpop.f32.mrb[0].mxu0
  %v330 = vadd.f32 %v147, %v329
  %v331 = vpop.f32.mrb[0].mxu0
  %v332 = vadd.f32 %v143, %v331
  %v333 = vpop.f32.mrb[0].mxu0
  %v334 = vadd.f32 %v147, %v333
  %335 = vdwg.mxu0
  %336 = vmatprep.subr.bf16.mxu0 0
  %337 = vmatpush1.bf16.msra.mxu0 %v237
  %338 = vmatprep.subr.bf16.mxu0 0
  %339 = vmatpush1.bf16.msra.mxu0 %v240
  %340 = vmatprep.subr.bf16.mxu0 0
  %341 = vmatpush1.bf16.msra.mxu0 %v243
  %342 = vmatprep.subr.bf16.mxu0 0
  %343 = vmatpush1.bf16.msra.mxu0 %v246
  %344 = vmatprep.subr.bf16.mxu0 0
  %345 = vmatpush1.bf16.msra.mxu0 %v249
  %346 = vmatprep.subr.bf16.mxu0 0
  %347 = vmatpush1.bf16.msra.mxu0 %v252
  %348 = vmatprep.subr.bf16.mxu0 0
  %349 = vmatpush1.bf16.msra.mxu0 %v255
  %350 = vmatprep.subr.bf16.mxu0 0
  %351 = vmatpush1.bf16.msra.mxu0 %v258
  %352 = vmatprep.subr.bf16.mxu0 0
  %353 = vmatpush1.bf16.msra.mxu0 0
  %354 = vmatprep.subr.bf16.mxu0 0
  %355 = vmatpush1.bf16.msra.mxu0 0
  %356 = vmatprep.subr.bf16.mxu0 0
  %357 = vmatpush1.bf16.msra.mxu0 0
  %358 = vmatprep.subr.bf16.mxu0 0
  %359 = vmatpush1.bf16.msra.mxu0 0
  %360 = vmatprep.subr.bf16.mxu0 0
  %361 = vmatpush1.bf16.msra.mxu0 0
  %362 = vmatprep.subr.bf16.mxu0 0
  %363 = vmatpush1.bf16.msra.mxu0 0
  %364 = vmatprep.subr.bf16.mxu0 0
  %365 = vmatpush1.bf16.msra.mxu0 0
  %366 = vmatprep.subr.bf16.mxu0 0
  %367 = vmatpush1.bf16.msra.mxu0 0
  %368 = vmatprep.mubr.bf16.mxu0 0
  %369 = vmatmul.mubr.bf16.gmra.mrb[0].mxu0 %v104
  %v370 = vpop.f32.mrb[0].mxu0
  %v371 = vadd.f32 %v151, %v370
  %v372 = vpop.f32.mrb[0].mxu0
  %v373 = vpop.f32.mrb[0].mxu0
  %v374 = vadd.f32 %v151, %v373
  %v375 = vpop.f32.mrb[0].mxu0
  %376 = vmatprep.mubr.bf16.mxu0 0
  %377 = vmatmul.mubr.bf16.gmra.mrb[0].mxu0 %v105
  %v378 = vpop.f32.mrb[0].mxu0
  %v379 = vadd.f32 %v151, %v378
  %v380 = vpop.f32.mrb[0].mxu0
  %v381 = vpop.f32.mrb[0].mxu0
  %v382 = vadd.f32 %v151, %v381
  %v383 = vpop.f32.mrb[0].mxu0
  %384 = vdwg.mxu0
  %v385 = vpack.c.bf16 %v322, %v318
  %v386 = vpack.c.bf16 %v324, %v320
  %v387 = vpack.c.bf16 %v374, %v371
  %v388 = vpack.c.bf16 %v332, %v328
  %v389 = vpack.c.bf16 %v334, %v330
  %v390 = vpack.c.bf16 %v382, %v379
  %v397 = vunpack.c.l.b16 %v385
  %v398 = vunpack.c.l.b16 %v386
  %v399 = vunpack.c.l.b16 %v387
  %v400 = vunpack.c.h.b16 %v385
  %v401 = vunpack.c.h.b16 %v386
  %v402 = vunpack.c.h.b16 %v387
  %v403 = vunpack.c.l.b16 %v388
  %v404 = vunpack.c.l.b16 %v389
  %v405 = vunpack.c.l.b16 %v390
  %v406 = vunpack.c.h.b16 %v388
  %v407 = vunpack.c.h.b16 %v389
  %v408 = vunpack.c.h.b16 %v390
  %v409 = vpack.c.b16 %v398, %v397
  %v410 = vpack.c.b16 %v399, %v399
  %v411 = vpack.c.b16 %v401, %v400
  %v412 = vpack.c.b16 %v402, %v402
  %v413 = vpack.c.b16 %v404, %v403
  %v414 = vpack.c.b16 %v405, %v405
  %v415 = vpack.c.b16 %v407, %v406
  %v416 = vpack.c.b16 %v408, %v408
  %425 = vst [vmem:[%s5] sm:$0xff] %v409
  %426 = vst [vmem:[%s5 + $0x8] sm:$0xf] %v410
  %427 = vst [vmem:[%s5 + $0xc] sm:$0xff] %v411
  %428 = vst [vmem:[%s5 + $0x14] sm:$0xf] %v412
  %429 = vst [vmem:[%s5 + $0x18] sm:$0xff] %v413
  %430 = vst [vmem:[%s5 + $0x20] sm:$0xf] %v414
  %431 = vst [vmem:[%s5 + $0x24] sm:$0xff] %v415
  %432 = vst [vmem:[%s5 + $0x2c] sm:$0xf] %v416
  // Predicated region
  $region26: #{vitb16_forward.11} parent=0 // pred_check
    _
  $region27: #{vitb16_forward.11} parent=0 // pred_check_branch
    %434 = sbr.rel (0) target = $region29
  $region28: #{vitb16_forward.11} parent=0 // pred_region
    _
  $region29: #{vitb16_forward.11} parent=0 // pred_fallthru
    _
  // Predicated region
  $region30: #{vitb16_forward.11} parent=0 // pred_check
    _
  $region31: #{vitb16_forward.11} parent=0 // pred_check_branch
    %436 = sbr.rel (0) target = $region33
  $region32: #{vitb16_forward.11} parent=0 // pred_region
    _
  $region33: #{vitb16_forward.11} parent=0 // pred_fallthru
    _

// kernel: vitb16_forward.19
$region0: #{vitb16_forward.19}
  #allocation0 [shape = 'u32[]', space=smem, size = 0x4, offset = 0x4, fixed_abs, tag = 'smem constant byte address 0x4 - core index']
  #allocation1 [shape = 'u32[144,128]{1,0:T(1,128)}', space=vmem, size = 0x12000, scoped, tag = 'internal scratch']
  #allocation2 [shape = 'bf16[8,128]{1,0:T(8,128)(2,1)}', space=vmem, size = 0x800, scoped, tag = 'scratch operand']
  %s0 = inlined_call_operand.vmem [shape: bf16[8,128], index: 0, kind: input, shape index: {}]
  %s1 = inlined_call_operand.vmem [shape: f32[1,128], index: 1, kind: input, shape index: {}]
  %s2 = inlined_call_operand.vmem [shape: f32[1,128], index: 2, kind: input, shape index: {}]
  %s3 = inlined_call_operand.vmem [shape: bf16[128,128], index: 3, kind: input, shape index: {}]
  %s4 = inlined_call_operand.vmem [shape: f32[1,128], index: 4, kind: input, shape index: {}]
  %s5 = inlined_call_operand.vmem [shape: bf16[8,128], index: 5, kind: output, shape index: {}]
  %s6 = sld [smem:[#allocation0]]
  $region34: #{vitb16_forward.19} parent=0
    _
  %s8 = ssub.s32 1, %s6
  %s9 = scalar_select 0, %s8, %s6
  // Predicated region
  $region2: #{vitb16_forward.19} parent=0 // pred_check
    _
  $region3: #{vitb16_forward.19} parent=0 // pred_check_branch
    %11 = sbr.rel (0) target = $region5
  $region4: #{vitb16_forward.19} parent=0 // pred_region
    _
  $region5: #{vitb16_forward.19} parent=0 // pred_fallthru
    _
  // Predicated region
  $region6: #{vitb16_forward.19} parent=0 // pred_check
    _
  $region7: #{vitb16_forward.19} parent=0 // pred_check_branch
    %13 = sbr.rel (0) target = $region9
  $region8: #{vitb16_forward.19} parent=0 // pred_region
    _
  $region9: #{vitb16_forward.19} parent=0 // pred_fallthru
    _
  // Predicated region
  $region10: #{vitb16_forward.19} parent=0 // pred_check
    _
  $region11: #{vitb16_forward.19} parent=0 // pred_check_branch
    %15 = sbr.rel (0) target = $region13
  $region12: #{vitb16_forward.19} parent=0 // pred_region
    _
  $region13: #{vitb16_forward.19} parent=0 // pred_fallthru
    _
  // Predicated region
  $region14: #{vitb16_forward.19} parent=0 // pred_check
    _
  $region15: #{vitb16_forward.19} parent=0 // pred_check_branch
    %17 = sbr.rel (0) target = $region17
  $region16: #{vitb16_forward.19} parent=0 // pred_region
    _
  $region17: #{vitb16_forward.19} parent=0 // pred_fallthru
    _
  // Predicated region
  $region18: #{vitb16_forward.19} parent=0 // pred_check
    _
  $region19: #{vitb16_forward.19} parent=0 // pred_check_branch
    %19 = sbr.rel (0) target = $region21
  $region20: #{vitb16_forward.19} parent=0 // pred_region
    _
  $region21: #{vitb16_forward.19} parent=0 // pred_fallthru
    _
  %p21 = scmp.eq.s32.totalorder 0, 0
  // Predicated region
  $region22: #{vitb16_forward.19} parent=0 // pred_check
    %p22 = pneg %p21
  $region23: #{vitb16_forward.19} parent=0 // pred_check_branch
    %24 = sbr.rel (%p22) target = $region25
  $region24: #{vitb16_forward.19} parent=0 // pred_region
    %v25 = vld [vmem:[%s0] sm:$0xf]
    %v26 = vunpack.c.l.bf16 %v25
    %27 = vadd.xlane.f32.xlu0 %v26
    %v28 = vpop.xlane.xlu0 %27
    %v29 = vrcp.pop 128.0
    %v30 = vmul.f32 %v28, %v29
    %v31 = vsub.f32 %v26, %v30
    %v32 = vmul.f32 %v31, %v31
    %33 = vadd.xlane.f32.xlu0 %v32
    %v34 = vpop.xlane.xlu0 %33
    %v35 = vmul.f32 %v34, %v29
    %v36 = vadd.f32 %v35, 1e-06
    %v37 = vrsqrt.pop %v36
    %v38 = vmul.f32 %v31, %v37
    %v39 = vld [vmem:[%s1] sm:$0x1]
    %v41 = vlaneseq
    %v42 = vshrl.u32 %v41, 7
    %v43 = vsub.s32 0, %v42
    %v44 = vrot.slane %v39, %v43
    %v46 = vmul.f32 %v38, %v44
    %v47 = vld [vmem:[%s2] sm:$0x1]
    %v49 = vlaneseq
    %v50 = vshrl.u32 %v49, 7
    %v51 = vsub.s32 0, %v50
    %v52 = vrot.slane %v47, %v51
    %v54 = vadd.f32 %v46, %v52
    %v55 = vpack.c.bf16 %v54, %v54
    %56 = vst [vmem:[#allocation2] sm:$0xf] %v55
  $region25: #{vitb16_forward.19} parent=0 // pred_fallthru
    _
  %v57 = vld [vmem:[#allocation2] sm:$0xf]
  %v58 = vld [vmem:[%s3] sm:$0xf]
  %v59 = vld [vmem:[%s3 + $0x4] sm:$0xf]
  %v60 = vld [vmem:[%s3 + $0x8] sm:$0xf]
  %v61 = vld [vmem:[%s3 + $0xc] sm:$0xf]
  %v62 = vld [vmem:[%s3 + $0x10] sm:$0xf]
  %v63 = vld [vmem:[%s3 + $0x14] sm:$0xf]
  %v64 = vld [vmem:[%s3 + $0x18] sm:$0xf]
  %v65 = vld [vmem:[%s3 + $0x1c] sm:$0xf]
  %v66 = vld [vmem:[%s3 + $0x20] sm:$0xf]
  %v67 = vld [vmem:[%s3 + $0x24] sm:$0xf]
  %v68 = vld [vmem:[%s3 + $0x28] sm:$0xf]
  %v69 = vld [vmem:[%s3 + $0x2c] sm:$0xf]
  %v70 = vld [vmem:[%s3 + $0x30] sm:$0xf]
  %v71 = vld [vmem:[%s3 + $0x34] sm:$0xf]
  %v72 = vld [vmem:[%s3 + $0x38] sm:$0xf]
  %v73 = vld [vmem:[%s3 + $0x3c] sm:$0xf]
  %v74 = vld [vmem:[%s4] sm:$0x1]
  %v76 = vlaneseq
  %v77 = vshrl.u32 %v76, 7
  %v78 = vsub.s32 0, %v77
  %v79 = vrot.slane %v74, %v78
  %v97 = vunpack.c.l.b16 %v58
  %v98 = vunpack.c.l.b16 %v59
  %v99 = vunpack.c.l.b16 %v60
  %v100 = vunpack.c.l.b16 %v61
  %v101 = vunpack.c.l.b16 %v62
  %v102 = vunpack.c.l.b16 %v63
  %v103 = vunpack.c.l.b16 %v64
  %v104 = vunpack.c.l.b16 %v65
  %v105 = vunpack.c.l.b16 %v66
  %v106 = vunpack.c.l.b16 %v67
  %v107 = vunpack.c.l.b16 %v68
  %v108 = vunpack.c.l.b16 %v69
  %v109 = vunpack.c.l.b16 %v70
  %v110 = vunpack.c.l.b16 %v71
  %v111 = vunpack.c.l.b16 %v72
  %v112 = vunpack.c.l.b16 %v73
  %v113 = vpack.c.b16 %v98, %v97
  %v114 = vpack.c.b16 %v100, %v99
  %v115 = vpack.c.b16 %v102, %v101
  %v116 = vpack.c.b16 %v104, %v103
  %v117 = vpack.c.b16 %v106, %v105
  %v118 = vpack.c.b16 %v108, %v107
  %v119 = vpack.c.b16 %v110, %v109
  %v120 = vpack.c.b16 %v112, %v111
  %129 = vmatprep.subr.bf16.mxu0 0
  %130 = vmatpush1.bf16.msra.mxu0 %v113
  %131 = vmatprep.subr.bf16.mxu0 0
  %132 = vmatpush1.bf16.msra.mxu0 %v114
  %133 = vmatprep.subr.bf16.mxu0 0
  %134 = vmatpush1.bf16.msra.mxu0 %v115
  %135 = vmatprep.subr.bf16.mxu0 0
  %136 = vmatpush1.bf16.msra.mxu0 %v116
  %137 = vmatprep.subr.bf16.mxu0 0
  %138 = vmatpush1.bf16.msra.mxu0 %v117
  %139 = vmatprep.subr.bf16.mxu0 0
  %140 = vmatpush1.bf16.msra.mxu0 %v118
  %141 = vmatprep.subr.bf16.mxu0 0
  %142 = vmatpush1.bf16.msra.mxu0 %v119
  %143 = vmatprep.subr.bf16.mxu0 0
  %144 = vmatpush1.bf16.msra.mxu0 %v120
  %145 = vmatprep.subr.bf16.mxu0 0
  %146 = vmatpush1.bf16.msra.mxu0 0
  %147 = vmatprep.subr.bf16.mxu0 0
  %148 = vmatpush1.bf16.msra.mxu0 0
  %149 = vmatprep.subr.bf16.mxu0 0
  %150 = vmatpush1.bf16.msra.mxu0 0
  %151 = vmatprep.subr.bf16.mxu0 0
  %152 = vmatpush1.bf16.msra.mxu0 0
  %153 = vmatprep.subr.bf16.mxu0 0
  %154 = vmatpush1.bf16.msra.mxu0 0
  %155 = vmatprep.subr.bf16.mxu0 0
  %156 = vmatpush1.bf16.msra.mxu0 0
  %157 = vmatprep.subr.bf16.mxu0 0
  %158 = vmatpush1.bf16.msra.mxu0 0
  %159 = vmatprep.subr.bf16.mxu0 0
  %160 = vmatpush1.bf16.msra.mxu0 0
  %161 = vmatprep.mubr.bf16.mxu0 0
  %162 = vmatmul.mubr.bf16.gmra.mrb[0].mxu0 %v57
  %v163 = vpop.f32.mrb[0].mxu0
  %v164 = vadd.f32 %v79, %v163
  %v165 = vpop.f32.mrb[0].mxu0
  %v166 = vpop.f32.mrb[0].mxu0
  %v167 = vpop.f32.mrb[0].mxu0
  %168 = vdwg.mxu0
  %v169 = vmax.f32 %v164, 0.0
  %v170 = vpack.c.bf16 %v169, %v169
  %171 = vst [vmem:[%s5] sm:$0xf] %v170
  // Predicated region
  $region26: #{vitb16_forward.19} parent=0 // pred_check
    _
  $region27: #{vitb16_forward.19} parent=0 // pred_check_branch
    %173 = sbr.rel (0) target = $region29
  $region28: #{vitb16_forward.19} parent=0 // pred_region
    _
  $region29: #{vitb16_forward.19} parent=0 // pred_fallthru
    _
  // Predicated region
  $region30: #{vitb16_forward.19} parent=0 // pred_check
    _
  $region31: #{vitb16_forward.19} parent=0 // pred_check_branch
    %175 = sbr.rel (0) target = $region33
  $region32: #{vitb16_forward.19} parent=0 // pred_region
    _
  $region33: #{vitb16_forward.19} parent=0 // pred_fallthru
    _

// kernel: vitb16_forward.14
$region0: #{vitb16_forward.14}
  #allocation0 [shape = 'u32[]', space=smem, size = 0x4, offset = 0x4, fixed_abs, tag = 'smem constant byte address 0x4 - core index']
  #allocation1 [shape = 'u32[144,128]{1,0:T(1,128)}', space=vmem, size = 0x12000, scoped, tag = 'internal scratch']
  #allocation2 [shape = 'f32[32,128]{1,0:T(8,128)}', space=vmem, size = 0x4000, scoped, tag = 'scratch operand']
  #allocation3 [shape = 'bf16[32,128]{1,0:T(16,128)(2,1)}', space=vmem, size = 0x2000, scoped, tag = 'scratch operand']
  %s0 = inlined_call_operand.vmem [shape: bf16[32,128], index: 0, kind: input, shape index: {}, may-alias: {0,7}]
  %s1 = inlined_call_operand.vmem [shape: f32[1,128], index: 1, kind: input, shape index: {}]
  %s2 = inlined_call_operand.vmem [shape: f32[1,128], index: 2, kind: input, shape index: {}]
  %s3 = inlined_call_operand.vmem [shape: bf16[128,512], index: 3, kind: input, shape index: {}]
  %s4 = inlined_call_operand.vmem [shape: f32[1,512], index: 4, kind: input, shape index: {}]
  %s5 = inlined_call_operand.vmem [shape: bf16[512,128], index: 5, kind: input, shape index: {}]
  %s6 = inlined_call_operand.vmem [shape: f32[1,128], index: 6, kind: input, shape index: {}]
  %s7 = inlined_call_operand.vmem [shape: bf16[32,128], index: 7, kind: input, shape index: {}, may-alias: {0,7}]
  %s8 = inlined_call_operand.vmem [shape: bf16[32,128], index: 8, kind: output, shape index: {}]
  %s9 = sld [smem:[#allocation0]]
  $region50: #{vitb16_forward.14} parent=0
    _
  %s11 = ssub.s32 1, %s9
  %s12 = scalar_select 0, %s11, %s9
  // Predicated region
  $region2: #{vitb16_forward.14} parent=0 // pred_check
    _
  $region3: #{vitb16_forward.14} parent=0 // pred_check_branch
    %14 = sbr.rel (0) target = $region5
  $region4: #{vitb16_forward.14} parent=0 // pred_region
    _
  $region5: #{vitb16_forward.14} parent=0 // pred_fallthru
    _
  // Predicated region
  $region6: #{vitb16_forward.14} parent=0 // pred_check
    _
  $region7: #{vitb16_forward.14} parent=0 // pred_check_branch
    %16 = sbr.rel (0) target = $region9
  $region8: #{vitb16_forward.14} parent=0 // pred_region
    _
  $region9: #{vitb16_forward.14} parent=0 // pred_fallthru
    _
  // Predicated region
  $region10: #{vitb16_forward.14} parent=0 // pred_check
    _
  $region11: #{vitb16_forward.14} parent=0 // pred_check_branch
    %18 = sbr.rel (0) target = $region13
  $region12: #{vitb16_forward.14} parent=0 // pred_region
    _
  $region13: #{vitb16_forward.14} parent=0 // pred_fallthru
    _
  // Predicated region
  $region14: #{vitb16_forward.14} parent=0 // pred_check
    _
  $region15: #{vitb16_forward.14} parent=0 // pred_check_branch
    %20 = sbr.rel (0) target = $region17
  $region16: #{vitb16_forward.14} parent=0 // pred_region
    _
  $region17: #{vitb16_forward.14} parent=0 // pred_fallthru
    _
  // Predicated region
  $region18: #{vitb16_forward.14} parent=0 // pred_check
    _
  $region19: #{vitb16_forward.14} parent=0 // pred_check_branch
    %22 = sbr.rel (0) target = $region21
  $region20: #{vitb16_forward.14} parent=0 // pred_region
    _
  $region21: #{vitb16_forward.14} parent=0 // pred_fallthru
    _
  // Predicated region
  $region22: #{vitb16_forward.14} parent=0 // pred_check
    _
  $region23: #{vitb16_forward.14} parent=0 // pred_check_branch
    %24 = sbr.rel (0) target = $region25
  $region24: #{vitb16_forward.14} parent=0 // pred_region
    _
  $region25: #{vitb16_forward.14} parent=0 // pred_fallthru
    _
  // Predicated region
  $region26: #{vitb16_forward.14} parent=0 // pred_check
    _
  $region27: #{vitb16_forward.14} parent=0 // pred_check_branch
    %26 = sbr.rel (0) target = $region29
  $region28: #{vitb16_forward.14} parent=0 // pred_region
    _
  $region29: #{vitb16_forward.14} parent=0 // pred_fallthru
    _
  // Predicated region
  $region30: #{vitb16_forward.14} parent=0 // pred_check
    _
  $region31: #{vitb16_forward.14} parent=0 // pred_check_branch
    %28 = sbr.rel (0) target = $region33
  $region32: #{vitb16_forward.14} parent=0 // pred_region
    _
  $region33: #{vitb16_forward.14} parent=0 // pred_fallthru
    _
  %p30 = scmp.eq.s32.totalorder 0, 0
  // Predicated region
  $region34: #{vitb16_forward.14} parent=0 // pred_check
    %p31 = pneg %p30
  $region35: #{vitb16_forward.14} parent=0 // pred_check_branch
    %33 = sbr.rel (%p31) target = $region37
  $region36: #{vitb16_forward.14} parent=0 // pred_region
    %34 = vst [vmem:[#allocation2] sm:$0xff] 0.0
    %35 = vst [vmem:[#allocation2 + $0x8] sm:$0xff] 0.0
    %36 = vst [vmem:[#allocation2 + $0x10] sm:$0xff] 0.0
    %37 = vst [vmem:[#allocation2 + $0x18] sm:$0xff] 0.0
    %v38 = vld [vmem:[%s0] sm:$0xf]
    %v39 = vld [vmem:[%s0 + $0x4] sm:$0xf]
    %v40 = vld [vmem:[%s0 + $0x8] sm:$0xf]
    %v41 = vld [vmem:[%s0 + $0xc] sm:$0xf]
    %v42 = vunpack.c.l.bf16 %v38
    %v43 = vunpack.c.l.bf16 %v39
    %v44 = vunpack.c.l.bf16 %v40
    %v45 = vunpack.c.l.bf16 %v41
    %46 = vadd.xlane.f32.xlu0 %v42
    %v47 = vpop.xlane.xlu0 %46
    %48 = vadd.xlane.f32.xlu0 %v43
    %v49 = vpop.xlane.xlu0 %48
    %50 = vadd.xlane.f32.xlu0 %v44
    %v51 = vpop.xlane.xlu0 %50
    %52 = vadd.xlane.f32.xlu0 %v45
    %v53 = vpop.xlane.xlu0 %52
    %v54 = vrcp.pop 128.0
    %v55 = vmul.f32 %v47, %v54
    %v56 = vmul.f32 %v49, %v54
    %v57 = vmul.f32 %v51, %v54
    %v58 = vmul.f32 %v53, %v54
    %v59 = vsub.f32 %v42, %v55
    %v60 = vsub.f32 %v43, %v56
    %v61 = vsub.f32 %v44, %v57
    %v62 = vsub.f32 %v45, %v58
    %v63 = vmul.f32 %v59, %v59
    %v64 = vmul.f32 %v60, %v60
    %v65 = vmul.f32 %v61, %v61
    %v66 = vmul.f32 %v62, %v62
    %67 = vadd.xlane.f32.xlu0 %v63
    %v68 = vpop.xlane.xlu0 %67
    %69 = vadd.xlane.f32.xlu0 %v64
    %v70 = vpop.xlane.xlu0 %69
    %71 = vadd.xlane.f32.xlu0 %v65
    %v72 = vpop.xlane.xlu0 %71
    %73 = vadd.xlane.f32.xlu0 %v66
    %v74 = vpop.xlane.xlu0 %73
    %v75 = vmul.f32 %v68, %v54
    %v76 = vmul.f32 %v70, %v54
    %v77 = vmul.f32 %v72, %v54
    %v78 = vmul.f32 %v74, %v54
    %v79 = vadd.f32 %v75, 1e-06
    %v80 = vadd.f32 %v76, 1e-06
    %v81 = vadd.f32 %v77, 1e-06
    %v82 = vadd.f32 %v78, 1e-06
    %v83 = vrsqrt.pop %v79
    %v84 = vrsqrt.pop %v80
    %v85 = vrsqrt.pop %v81
    %v86 = vrsqrt.pop %v82
    %v87 = vmul.f32 %v59, %v83
    %v88 = vmul.f32 %v60, %v84
    %v89 = vmul.f32 %v61, %v85
    %v90 = vmul.f32 %v62, %v86
    %v91 = vld [vmem:[%s1] sm:$0x1]
    %v93 = vlaneseq
    %v94 = vshrl.u32 %v93, 7
    %v95 = vsub.s32 0, %v94
    %v96 = vrot.slane %v91, %v95
    %v98 = vmul.f32 %v87, %v96
    %v99 = vmul.f32 %v88, %v96
    %v100 = vmul.f32 %v89, %v96
    %v101 = vmul.f32 %v90, %v96
    %v102 = vld [vmem:[%s2] sm:$0x1]
    %v104 = vlaneseq
    %v105 = vshrl.u32 %v104, 7
    %v106 = vsub.s32 0, %v105
    %v107 = vrot.slane %v102, %v106
    %v109 = vadd.f32 %v98, %v107
    %v110 = vadd.f32 %v99, %v107
    %v111 = vadd.f32 %v100, %v107
    %v112 = vadd.f32 %v101, %v107
    %v113 = vpack.c.bf16 %v110, %v109
    %v114 = vpack.c.bf16 %v112, %v111
    %115 = vst [vmem:[#allocation3] sm:$0xff] %v113
    %116 = vst [vmem:[#allocation3 + $0x8] sm:$0xff] %v114
  $region37: #{vitb16_forward.14} parent=0 // pred_fallthru
    _
  %v117 = vld [vmem:[#allocation3] sm:$0xff]
  %v118 = vld [vmem:[#allocation3 + $0x8] sm:$0xff]
  %v119 = vld [vmem:[%s3] sm:$0xff]
  %v120 = vld [vmem:[%s3 + $0x8] sm:$0xff]
  %v121 = vld [vmem:[%s3 + $0x10] sm:$0xff]
  %v122 = vld [vmem:[%s3 + $0x18] sm:$0xff]
  %v123 = vld [vmem:[%s3 + $0x20] sm:$0xff]
  %v124 = vld [vmem:[%s3 + $0x28] sm:$0xff]
  %v125 = vld [vmem:[%s3 + $0x30] sm:$0xff]
  %v126 = vld [vmem:[%s3 + $0x38] sm:$0xff]
  %v127 = vld [vmem:[%s3 + $0x40] sm:$0xff]
  %v128 = vld [vmem:[%s3 + $0x48] sm:$0xff]
  %v129 = vld [vmem:[%s3 + $0x50] sm:$0xff]
  %v130 = vld [vmem:[%s3 + $0x58] sm:$0xff]
  %v131 = vld [vmem:[%s3 + $0x60] sm:$0xff]
  %v132 = vld [vmem:[%s3 + $0x68] sm:$0xff]
  %v133 = vld [vmem:[%s3 + $0x70] sm:$0xff]
  %v134 = vld [vmem:[%s3 + $0x78] sm:$0xff]
  %v135 = vld [vmem:[%s3 + $0x80] sm:$0xff]
  %v136 = vld [vmem:[%s3 + $0x88] sm:$0xff]
  %v137 = vld [vmem:[%s3 + $0x90] sm:$0xff]
  %v138 = vld [vmem:[%s3 + $0x98] sm:$0xff]
  %v139 = vld [vmem:[%s3 + $0xa0] sm:$0xff]
  %v140 = vld [vmem:[%s3 + $0xa8] sm:$0xff]
  %v141 = vld [vmem:[%s3 + $0xb0] sm:$0xff]
  %v142 = vld [vmem:[%s3 + $0xb8] sm:$0xff]
  %v143 = vld [vmem:[%s3 + $0xc0] sm:$0xff]
  %v144 = vld [vmem:[%s3 + $0xc8] sm:$0xff]
  %v145 = vld [vmem:[%s3 + $0xd0] sm:$0xff]
  %v146 = vld [vmem:[%s3 + $0xd8] sm:$0xff]
  %v147 = vld [vmem:[%s3 + $0xe0] sm:$0xff]
  %v148 = vld [vmem:[%s3 + $0xe8] sm:$0xff]
  %v149 = vld [vmem:[%s3 + $0xf0] sm:$0xff]
  %v150 = vld [vmem:[%s3 + $0xf8] sm:$0xff]
  %v151 = vld [vmem:[%s4] sm:$0xf]
  %v153 = vlaneseq
  %v154 = vshrl.u32 %v153, 7
  %v155 = vsub.s32 0, %v154
  %v156 = vrot.slane %v151, %v155
  %v157 = vlaneseq
  %v158 = vshrl.u32 %v157, 7
  %v159 = vsub.s32 1, %v158
  %v160 = vrot.slane %v151, %v159
  %v161 = vlaneseq
  %v162 = vshrl.u32 %v161, 7
  %v163 = vsub.s32 2, %v162
  %v164 = vrot.slane %v151, %v163
  %v165 = vlaneseq
  %v166 = vshrl.u32 %v165, 7
  %v167 = vsub.s32 3, %v166
  %v168 = vrot.slane %v151, %v167
  %v205 = vunpack.c.l.b16 %v119
  %v206 = vunpack.c.h.b16 %v119
  %v207 = vunpack.c.l.b16 %v120
  %v208 = vunpack.c.h.b16 %v120
  %v209 = vunpack.c.l.b16 %v121
  %v210 = vunpack.c.h.b16 %v121
  %v211 = vunpack.c.l.b16 %v122
  %v212 = vunpack.c.h.b16 %v122
  %v213 = vunpack.c.l.b16 %v123
  %v214 = vunpack.c.h.b16 %v123
  %v215 = vunpack.c.l.b16 %v124
  %v216 = vunpack.c.h.b16 %v124
  %v217 = vunpack.c.l.b16 %v125
  %v218 = vunpack.c.h.b16 %v125
  %v219 = vunpack.c.l.b16 %v126
  %v220 = vunpack.c.h.b16 %v126
  %v221 = vunpack.c.l.b16 %v127
  %v222 = vunpack.c.h.b16 %v127
  %v223 = vunpack.c.l.b16 %v128
  %v224 = vunpack.c.h.b16 %v128
  %v225 = vunpack.c.l.b16 %v129
  %v226 = vunpack.c.h.b16 %v129
  %v227 = vunpack.c.l.b16 %v130
  %v228 = vunpack.c.h.b16 %v130
  %v229 = vunpack.c.l.b16 %v131
  %v230 = vunpack.c.h.b16 %v131
  %v231 = vunpack.c.l.b16 %v132
  %v232 = vunpack.c.h.b16 %v132
  %v233 = vunpack.c.l.b16 %v133
  %v234 = vunpack.c.h.b16 %v133
  %v235 = vunpack.c.l.b16 %v134
  %v236 = vunpack.c.h.b16 %v134
  %v237 = vunpack.c.l.b16 %v135
  %v238 = vunpack.c.h.b16 %v135
  %v239 = vunpack.c.l.b16 %v136
  %v240 = vunpack.c.h.b16 %v136
  %v241 = vunpack.c.l.b16 %v137
  %v242 = vunpack.c.h.b16 %v137
  %v243 = vunpack.c.l.b16 %v138
  %v244 = vunpack.c.h.b16 %v138
  %v245 = vunpack.c.l.b16 %v139
  %v246 = vunpack.c.h.b16 %v139
  %v247 = vunpack.c.l.b16 %v140
  %v248 = vunpack.c.h.b16 %v140
  %v249 = vunpack.c.l.b16 %v141
  %v250 = vunpack.c.h.b16 %v141
  %v251 = vunpack.c.l.b16 %v142
  %v252 = vunpack.c.h.b16 %v142
  %v253 = vunpack.c.l.b16 %v143
  %v254 = vunpack.c.h.b16 %v143
  %v255 = vunpack.c.l.b16 %v144
  %v256 = vunpack.c.h.b16 %v144
  %v257 = vunpack.c.l.b16 %v145
  %v258 = vunpack.c.h.b16 %v145
  %v259 = vunpack.c.l.b16 %v146
  %v260 = vunpack.c.h.b16 %v146
  %v261 = vunpack.c.l.b16 %v147
  %v262 = vunpack.c.h.b16 %v147
  %v263 = vunpack.c.l.b16 %v148
  %v264 = vunpack.c.h.b16 %v148
  %v265 = vunpack.c.l.b16 %v149
  %v266 = vunpack.c.h.b16 %v149
  %v267 = vunpack.c.l.b16 %v150
  %v268 = vunpack.c.h.b16 %v150
  %v269 = vpack.c.b16 %v209, %v205
  %v270 = vpack.c.b16 %v210, %v206
  %v271 = vpack.c.b16 %v211, %v207
  %v272 = vpack.c.b16 %v212, %v208
  %v273 = vpack.c.b16 %v217, %v213
  %v274 = vpack.c.b16 %v218, %v214
  %v275 = vpack.c.b16 %v219, %v215
  %v276 = vpack.c.b16 %v220, %v216
  %v277 = vpack.c.b16 %v225, %v221
  %v278 = vpack.c.b16 %v226, %v222
  %v279 = vpack.c.b16 %v227, %v223
  %v280 = vpack.c.b16 %v228, %v224
  %v281 = vpack.c.b16 %v233, %v229
  %v282 = vpack.c.b16 %v234, %v230
  %v283 = vpack.c.b16 %v235, %v231
  %v284 = vpack.c.b16 %v236, %v232
  %v285 = vpack.c.b16 %v241, %v237
  %v286 = vpack.c.b16 %v242, %v238
  %v287 = vpack.c.b16 %v243, %v239
  %v288 = vpack.c.b16 %v244, %v240
  %v289 = vpack.c.b16 %v249, %v245
  %v290 = vpack.c.b16 %v250, %v246
  %v291 = vpack.c.b16 %v251, %v247
  %v292 = vpack.c.b16 %v252, %v248
  %v293 = vpack.c.b16 %v257, %v253
  %v294 = vpack.c.b16 %v258, %v254
  %v295 = vpack.c.b16 %v259, %v255
  %v296 = vpack.c.b16 %v260, %v256
  %v297 = vpack.c.b16 %v265, %v261
  %v298 = vpack.c.b16 %v266, %v262
  %v299 = vpack.c.b16 %v267, %v263
  %v300 = vpack.c.b16 %v268, %v264
  %333 = vmatprep.subr.bf16.mxu0 %v270
  %334 = vmatpush1.bf16.msra.mxu0 %v269
  %335 = vmatprep.subr.bf16.mxu0 %v274
  %336 = vmatpush1.bf16.msra.mxu0 %v273
  %337 = vmatprep.subr.bf16.mxu0 %v278
  %338 = vmatpush1.bf16.msra.mxu0 %v277
  %339 = vmatprep.subr.bf16.mxu0 %v282
  %340 = vmatpush1.bf16.msra.mxu0 %v281
  %341 = vmatprep.subr.bf16.mxu0 %v286
  %342 = vmatpush1.bf16.msra.mxu0 %v285
  %343 = vmatprep.subr.bf16.mxu0 %v290
  %344 = vmatpush1.bf16.msra.mxu0 %v289
  %345 = vmatprep.subr.bf16.mxu0 %v294
  %346 = vmatpush1.bf16.msra.mxu0 %v293
  %347 = vmatprep.subr.bf16.mxu0 %v298
  %348 = vmatpush1.bf16.msra.mxu0 %v297
  %349 = vmatprep.subr.bf16.mxu0 0
  %350 = vmatpush1.bf16.msra.mxu0 0
  %351 = vmatprep.subr.bf16.mxu0 0
  %352 = vmatpush1.bf16.msra.mxu0 0
  %353 = vmatprep.subr.bf16.mxu0 0
  %354 = vmatpush1.bf16.msra.mxu0 0
  %355 = vmatprep.subr.bf16.mxu0 0
  %356 = vmatpush1.bf16.msra.mxu0 0
  %357 = vmatprep.subr.bf16.mxu0 0
  %358 = vmatpush1.bf16.msra.mxu0 0
  %359 = vmatprep.subr.bf16.mxu0 0
  %360 = vmatpush1.bf16.msra.mxu0 0
  %361 = vmatprep.subr.bf16.mxu0 0
  %362 = vmatpush1.bf16.msra.mxu0 0
  %363 = vmatprep.subr.bf16.mxu0 0
  %364 = vmatpush1.bf16.msra.mxu0 0
  %365 = vmatprep.mubr.bf16.mxu0 0
  %366 = vmatmul.mubr.bf16.gmra.mrb[0].mxu0 %v117
  %v367 = vpop.f32.mrb[0].mxu0
  %v368 = vadd.f32 %v156, %v367
  %v369 = vpop.f32.mrb[0].mxu0
  %v370 = vadd.f32 %v160, %v369
  %v371 = vpop.f32.mrb[0].mxu0
  %v372 = vadd.f32 %v156, %v371
  %v373 = vpop.f32.mrb[0].mxu0
  %v374 = vadd.f32 %v160, %v373
  %375 = vmatprep.mubr.bf16.mxu0 0
  %376 = vmatmul.mubr.bf16.gmra.mrb[0].mxu0 %v118
  %v377 = vpop.f32.mrb[0].mxu0
  %v378 = vadd.f32 %v156, %v377
  %v379 = vpop.f32.mrb[0].mxu0
  %v380 = vadd.f32 %v160, %v379
  %v381 = vpop.f32.mrb[0].mxu0
  %v382 = vadd.f32 %v156, %v381
  %v383 = vpop.f32.mrb[0].mxu0
  %v384 = vadd.f32 %v160, %v383
  %385 = vdwg.mxu0
  %386 = vmatprep.subr.bf16.mxu0 %v272
  %387 = vmatpush1.bf16.msra.mxu0 %v271
  %388 = vmatprep.subr.bf16.mxu0 %v276
  %389 = vmatpush1.bf16.msra.mxu0 %v275
  %390 = vmatprep.subr.bf16.mxu0 %v280
  %391 = vmatpush1.bf16.msra.mxu0 %v279
  %392 = vmatprep.subr.bf16.mxu0 %v284
  %393 = vmatpush1.bf16.msra.mxu0 %v283
  %394 = vmatprep.subr.bf16.mxu0 %v288
  %395 = vmatpush1.bf16.msra.mxu0 %v287
  %396 = vmatprep.subr.bf16.mxu0 %v292
  %397 = vmatpush1.bf16.msra.mxu0 %v291
  %398 = vmatprep.subr.bf16.mxu0 %v296
  %399 = vmatpush1.bf16.msra.mxu0 %v295
  %400 = vmatprep.subr.bf16.mxu0 %v300
  %401 = vmatpush1.bf16.msra.mxu0 %v299
  %402 = vmatprep.subr.bf16.mxu0 0
  %403 = vmatpush1.bf16.msra.mxu0 0
  %404 = vmatprep.subr.bf16.mxu0 0
  %405 = vmatpush1.bf16.msra.mxu0 0
  %406 = vmatprep.subr.bf16.mxu0 0
  %407 = vmatpush1.bf16.msra.mxu0 0
  %408 = vmatprep.subr.bf16.mxu0 0
  %409 = vmatpush1.bf16.msra.mxu0 0
  %410 = vmatprep.subr.bf16.mxu0 0
  %411 = vmatpush1.bf16.msra.mxu0 0
  %412 = vmatprep.subr.bf16.mxu0 0
  %413 = vmatpush1.bf16.msra.mxu0 0
  %414 = vmatprep.subr.bf16.mxu0 0
  %415 = vmatpush1.bf16.msra.mxu0 0
  %416 = vmatprep.subr.bf16.mxu0 0
  %417 = vmatpush1.bf16.msra.mxu0 0
  %418 = vmatprep.mubr.bf16.mxu0 0
  %419 = vmatmul.mubr.bf16.gmra.mrb[0].mxu0 %v117
  %v420 = vpop.f32.mrb[0].mxu0
  %v421 = vadd.f32 %v164, %v420
  %v422 = vpop.f32.mrb[0].mxu0
  %v423 = vadd.f32 %v168, %v422
  %v424 = vpop.f32.mrb[0].mxu0
  %v425 = vadd.f32 %v164, %v424
  %v426 = vpop.f32.mrb[0].mxu0
  %v427 = vadd.f32 %v168, %v426
  %428 = vmatprep.mubr.bf16.mxu0 0
  %429 = vmatmul.mubr.bf16.gmra.mrb[0].mxu0 %v118
  %v430 = vpop.f32.mrb[0].mxu0
  %v431 = vadd.f32 %v164, %v430
  %v432 = vpop.f32.mrb[0].mxu0
  %v433 = vadd.f32 %v168, %v432
  %v434 = vpop.f32.mrb[0].mxu0
  %v435 = vadd.f32 %v164, %v434
  %v436 = vpop.f32.mrb[0].mxu0
  %v437 = vadd.f32 %v168, %v436
  %438 = vdwg.mxu0
  %v439 = vmul.f32 %v368, %v368
  %v440 = vmul.f32 %v370, %v370
  %v441 = vmul.f32 %v421, %v421
  %v442 = vmul.f32 %v423, %v423
  %v443 = vmul.f32 %v372, %v372
  %v444 = vmul.f32 %v374, %v374
  %v445 = vmul.f32 %v425, %v425
  %v446 = vmul.f32 %v427, %v427
  %v447 = vmul.f32 %v378, %v378
  %v448 = vmul.f32 %v380, %v380
  %v449 = vmul.f32 %v431, %v431
  %v450 = vmul.f32 %v433, %v433
  %v451 = vmul.f32 %v382, %v382
  %v452 = vmul.f32 %v384, %v384
  %v453 = vmul.f32 %v435, %v435
  %v454 = vmul.f32 %v437, %v437
  %v455 = vmul.f32 %v368, %v439
  %v456 = vmul.f32 %v370, %v440
  %v457 = vmul.f32 %v421, %v441
  %v458 = vmul.f32 %v423, %v442
  %v459 = vmul.f32 %v372, %v443
  %v460 = vmul.f32 %v374, %v444
  %v461 = vmul.f32 %v425, %v445
  %v462 = vmul.f32 %v427, %v446
  %v463 = vmul.f32 %v378, %v447
  %v464 = vmul.f32 %v380, %v448
  %v465 = vmul.f32 %v431, %v449
  %v466 = vmul.f32 %v433, %v450
  %v467 = vmul.f32 %v382, %v451
  %v468 = vmul.f32 %v384, %v452
  %v469 = vmul.f32 %v435, %v453
  %v470 = vmul.f32 %v437, %v454
  %v471 = vmul.f32 %v455, 0.044715
  %v472 = vmul.f32 %v456, 0.044715
  %v473 = vmul.f32 %v457, 0.044715
  %v474 = vmul.f32 %v458, 0.044715
  %v475 = vmul.f32 %v459, 0.044715
  %v476 = vmul.f32 %v460, 0.044715
  %v477 = vmul.f32 %v461, 0.044715
  %v478 = vmul.f32 %v462, 0.044715
  %v479 = vmul.f32 %v463, 0.044715
  %v480 = vmul.f32 %v464, 0.044715
  %v481 = vmul.f32 %v465, 0.044715
  %v482 = vmul.f32 %v466, 0.044715
  %v483 = vmul.f32 %v467, 0.044715
  %v484 = vmul.f32 %v468, 0.044715
  %v485 = vmul.f32 %v469, 0.044715
  %v486 = vmul.f32 %v470, 0.044715
  %v487 = vadd.f32 %v368, %v471
  %v488 = vadd.f32 %v370, %v472
  %v489 = vadd.f32 %v421, %v473
  %v490 = vadd.f32 %v423, %v474
  %v491 = vadd.f32 %v372, %v475
  %v492 = vadd.f32 %v374, %v476
  %v493 = vadd.f32 %v425, %v477
  %v494 = vadd.f32 %v427, %v478
  %v495 = vadd.f32 %v378, %v479
  %v496 = vadd.f32 %v380, %v480
  %v497 = vadd.f32 %v431, %v481
  %v498 = vadd.f32 %v433, %v482
  %v499 = vadd.f32 %v382, %v483
  %v500 = vadd.f32 %v384, %v484
  %v501 = vadd.f32 %v435, %v485
  %v502 = vadd.f32 %v437, %v486
  %v503 = vmul.f32 %v487, 0.7978846
  %v504 = vmul.f32 %v488, 0.7978846
  %v505 = vmul.f32 %v489, 0.7978846
  %v506 = vmul.f32 %v490, 0.7978846
  %v507 = vmul.f32 %v491, 0.7978846
  %v508 = vmul.f32 %v492, 0.7978846
  %v509 = vmul.f32 %v493, 0.7978846
  %v510 = vmul.f32 %v494, 0.7978846
  %v511 = vmul.f32 %v495, 0.7978846
  %v512 = vmul.f32 %v496, 0.7978846
  %v513 = vmul.f32 %v497, 0.7978846
  %v514 = vmul.f32 %v498, 0.7978846
  %v515 = vmul.f32 %v499, 0.7978846
  %v516 = vmul.f32 %v500, 0.7978846
  %v517 = vmul.f32 %v501, 0.7978846
  %v518 = vmul.f32 %v502, 0.7978846
  %v519 = vtanh.pop %v503
  %v520 = vtanh.pop %v504
  %v521 = vtanh.pop %v505
  %v522 = vtanh.pop %v506
  %v523 = vtanh.pop %v507
  %v524 = vtanh.pop %v508
  %v525 = vtanh.pop %v509
  %v526 = vtanh.pop %v510
  %v527 = vtanh.pop %v511
  %v528 = vtanh.pop %v512
  %v529 = vtanh.pop %v513
  %v530 = vtanh.pop %v514
  %v531 = vtanh.pop %v515
  %v532 = vtanh.pop %v516
  %v533 = vtanh.pop %v517
  %v534 = vtanh.pop %v518
  %v535 = vadd.f32 %v519, 1.0
  %v536 = vadd.f32 %v520, 1.0
  %v537 = vadd.f32 %v521, 1.0
  %v538 = vadd.f32 %v522, 1.0
  %v539 = vadd.f32 %v523, 1.0
  %v540 = vadd.f32 %v524, 1.0
  %v541 = vadd.f32 %v525, 1.0
  %v542 = vadd.f32 %v526, 1.0
  %v543 = vadd.f32 %v527, 1.0
  %v544 = vadd.f32 %v528, 1.0
  %v545 = vadd.f32 %v529, 1.0
  %v546 = vadd.f32 %v530, 1.0
  %v547 = vadd.f32 %v531, 1.0
  %v548 = vadd.f32 %v532, 1.0
  %v549 = vadd.f32 %v533, 1.0
  %v550 = vadd.f32 %v534, 1.0
  %v551 = vmul.f32 %v535, 0.5
  %v552 = vmul.f32 %v536, 0.5
  %v553 = vmul.f32 %v537, 0.5
  %v554 = vmul.f32 %v538, 0.5
  %v555 = vmul.f32 %v539, 0.5
  %v556 = vmul.f32 %v540, 0.5
  %v557 = vmul.f32 %v541, 0.5
  %v558 = vmul.f32 %v542, 0.5
  %v559 = vmul.f32 %v543, 0.5
  %v560 = vmul.f32 %v544, 0.5
  %v561 = vmul.f32 %v545, 0.5
  %v562 = vmul.f32 %v546, 0.5
  %v563 = vmul.f32 %v547, 0.5
  %v564 = vmul.f32 %v548, 0.5
  %v565 = vmul.f32 %v549, 0.5
  %v566 = vmul.f32 %v550, 0.5
  %v567 = vmul.f32 %v368, %v551
  %v568 = vmul.f32 %v370, %v552
  %v569 = vmul.f32 %v421, %v553
  %v570 = vmul.f32 %v423, %v554
  %v571 = vmul.f32 %v372, %v555
  %v572 = vmul.f32 %v374, %v556
  %v573 = vmul.f32 %v425, %v557
  %v574 = vmul.f32 %v427, %v558
  %v575 = vmul.f32 %v378, %v559
  %v576 = vmul.f32 %v380, %v560
  %v577 = vmul.f32 %v431, %v561
  %v578 = vmul.f32 %v433, %v562
  %v579 = vmul.f32 %v382, %v563
  %v580 = vmul.f32 %v384, %v564
  %v581 = vmul.f32 %v435, %v565
  %v582 = vmul.f32 %v437, %v566
  %v583 = vld [vmem:[#allocation2] sm:$0xff]
  %v584 = vld [vmem:[#allocation2 + $0x8] sm:$0xff]
  %v585 = vld [vmem:[#allocation2 + $0x10] sm:$0xff]
  %v586 = vld [vmem:[#allocation2 + $0x18] sm:$0xff]
  %v587 = vpack.c.bf16 %v571, %v567
  %v588 = vpack.c.bf16 %v572, %v568
  %v589 = vpack.c.bf16 %v573, %v569
  %v590 = vpack.c.bf16 %v574, %v570
  %v591 = vpack.c.bf16 %v579, %v575
  %v592 = vpack.c.bf16 %v580, %v576
  %v593 = vpack.c.bf16 %v581, %v577
  %v594 = vpack.c.bf16 %v582, %v578
  %v595 = vld [vmem:[%s5] sm:$0xf]
  %v596 = vld [vmem:[%s5 + $0x4] sm:$0xf]
  %v597 = vld [vmem:[%s5 + $0x8] sm:$0xf]
  %v598 = vld [vmem:[%s5 + $0xc] sm:$0xf]
  %v599 = vld [vmem:[%s5 + $0x10] sm:$0xf]
  %v600 = vld [vmem:[%s5 + $0x14] sm:$0xf]
  %v601 = vld [vmem:[%s5 + $0x18] sm:$0xf]
  %v602 = vld [vmem:[%s5 + $0x1c] sm:$0xf]
  %v603 = vld [vmem:[%s5 + $0x20] sm:$0xf]
  %v604 = vld [vmem:[%s5 + $0x24] sm:$0xf]
  %v605 = vld [vmem:[%s5 + $0x28] sm:$0xf]
  %v606 = vld [vmem:[%s5 + $0x2c] sm:$0xf]
  %v607 = vld [vmem:[%s5 + $0x30] sm:$0xf]
  %v608 = vld [vmem:[%s5 + $0x34] sm:$0xf]
  %v609 = vld [vmem:[%s5 + $0x38] sm:$0xf]
  %v610 = vld [vmem:[%s5 + $0x3c] sm:$0xf]
  %v611 = vld [vmem:[%s5 + $0x40] sm:$0xf]
  %v612 = vld [vmem:[%s5 + $0x44] sm:$0xf]
  %v613 = vld [vmem:[%s5 + $0x48] sm:$0xf]
  %v614 = vld [vmem:[%s5 + $0x4c] sm:$0xf]
  %v615 = vld [vmem:[%s5 + $0x50] sm:$0xf]
  %v616 = vld [vmem:[%s5 + $0x54] sm:$0xf]
  %v617 = vld [vmem:[%s5 + $0x58] sm:$0xf]
  %v618 = vld [vmem:[%s5 + $0x5c] sm:$0xf]
  %v619 = vld [vmem:[%s5 + $0x60] sm:$0xf]
  %v620 = vld [vmem:[%s5 + $0x64] sm:$0xf]
  %v621 = vld [vmem:[%s5 + $0x68] sm:$0xf]
  %v622 = vld [vmem:[%s5 + $0x6c] sm:$0xf]
  %v623 = vld [vmem:[%s5 + $0x70] sm:$0xf]
  %v624 = vld [vmem:[%s5 + $0x74] sm:$0xf]
  %v625 = vld [vmem:[%s5 + $0x78] sm:$0xf]
  %v626 = vld [vmem:[%s5 + $0x7c] sm:$0xf]
  %v627 = vld [vmem:[%s5 + $0x80] sm:$0xf]
  %v628 = vld [vmem:[%s5 + $0x84] sm:$0xf]
  %v629 = vld [vmem:[%s5 + $0x88] sm:$0xf]
  %v630 = vld [vmem:[%s5 + $0x8c] sm:$0xf]
  %v631 = vld [vmem:[%s5 + $0x90] sm:$0xf]
  %v632 = vld [vmem:[%s5 + $0x94] sm:$0xf]
  %v633 = vld [vmem:[%s5 + $0x98] sm:$0xf]
  %v634 = vld [vmem:[%s5 + $0x9c] sm:$0xf]
  %v635 = vld [vmem:[%s5 + $0xa0] sm:$0xf]
  %v636 = vld [vmem:[%s5 + $0xa4] sm:$0xf]
  %v637 = vld [vmem:[%s5 + $0xa8] sm:$0xf]
  %v638 = vld [vmem:[%s5 + $0xac] sm:$0xf]
  %v639 = vld [vmem:[%s5 + $0xb0] sm:$0xf]
  %v640 = vld [vmem:[%s5 + $0xb4] sm:$0xf]
  %v641 = vld [vmem:[%s5 + $0xb8] sm:$0xf]
  %v642 = vld [vmem:[%s5 + $0xbc] sm:$0xf]
  %v643 = vld [vmem:[%s5 + $0xc0] sm:$0xf]
  %v644 = vld [vmem:[%s5 + $0xc4] sm:$0xf]
  %v645 = vld [vmem:[%s5 + $0xc8] sm:$0xf]
  %v646 = vld [vmem:[%s5 + $0xcc] sm:$0xf]
  %v647 = vld [vmem:[%s5 + $0xd0] sm:$0xf]
  %v648 = vld [vmem:[%s5 + $0xd4] sm:$0xf]
  %v649 = vld [vmem:[%s5 + $0xd8] sm:$0xf]
  %v650 = vld [vmem:[%s5 + $0xdc] sm:$0xf]
  %v651 = vld [vmem:[%s5 + $0xe0] sm:$0xf]
  %v652 = vld [vmem:[%s5 + $0xe4] sm:$0xf]
  %v653 = vld [vmem:[%s5 + $0xe8] sm:$0xf]
  %v654 = vld [vmem:[%s5 + $0xec] sm:$0xf]
  %v655 = vld [vmem:[%s5 + $0xf0] sm:$0xf]
  %v656 = vld [vmem:[%s5 + $0xf4] sm:$0xf]
  %v657 = vld [vmem:[%s5 + $0xf8] sm:$0xf]
  %v658 = vld [vmem:[%s5 + $0xfc] sm:$0xf]
  %v723 = vunpack.c.l.b16 %v595
  %v724 = vunpack.c.l.b16 %v596
  %v725 = vunpack.c.l.b16 %v597
  %v726 = vunpack.c.l.b16 %v598
  %v727 = vunpack.c.l.b16 %v599
  %v728 = vunpack.c.l.b16 %v600
  %v729 = vunpack.c.l.b16 %v601
  %v730 = vunpack.c.l.b16 %v602
  %v731 = vunpack.c.l.b16 %v603
  %v732 = vunpack.c.l.b16 %v604
  %v733 = vunpack.c.l.b16 %v605
  %v734 = vunpack.c.l.b16 %v606
  %v735 = vunpack.c.l.b16 %v607
  %v736 = vunpack.c.l.b16 %v608
  %v737 = vunpack.c.l.b16 %v609
  %v738 = vunpack.c.l.b16 %v610
  %v739 = vunpack.c.l.b16 %v611
  %v740 = vunpack.c.l.b16 %v612
  %v741 = vunpack.c.l.b16 %v613
  %v742 = vunpack.c.l.b16 %v614
  %v743 = vunpack.c.l.b16 %v615
  %v744 = vunpack.c.l.b16 %v616
  %v745 = vunpack.c.l.b16 %v617
  %v746 = vunpack.c.l.b16 %v618
  %v747 = vunpack.c.l.b16 %v619
  %v748 = vunpack.c.l.b16 %v620
  %v749 = vunpack.c.l.b16 %v621
  %v750 = vunpack.c.l.b16 %v622
  %v751 = vunpack.c.l.b16 %v623
  %v752 = vunpack.c.l.b16 %v624
  %v753 = vunpack.c.l.b16 %v625
  %v754 = vunpack.c.l.b16 %v626
  %v755 = vunpack.c.l.b16 %v627
  %v756 = vunpack.c.l.b16 %v628
  %v757 = vunpack.c.l.b16 %v629
  %v758 = vunpack.c.l.b16 %v630
  %v759 = vunpack.c.l.b16 %v631
  %v760 = vunpack.c.l.b16 %v632
  %v761 = vunpack.c.l.b16 %v633
  %v762 = vunpack.c.l.b16 %v634
  %v763 = vunpack.c.l.b16 %v635
  %v764 = vunpack.c.l.b16 %v636
  %v765 = vunpack.c.l.b16 %v637
  %v766 = vunpack.c.l.b16 %v638
  %v767 = vunpack.c.l.b16 %v639
  %v768 = vunpack.c.l.b16 %v640
  %v769 = vunpack.c.l.b16 %v641
  %v770 = vunpack.c.l.b16 %v642
  %v771 = vunpack.c.l.b16 %v643
  %v772 = vunpack.c.l.b16 %v644
  %v773 = vunpack.c.l.b16 %v645
  %v774 = vunpack.c.l.b16 %v646
  %v775 = vunpack.c.l.b16 %v647
  %v776 = vunpack.c.l.b16 %v648
  %v777 = vunpack.c.l.b16 %v649
  %v778 = vunpack.c.l.b16 %v650
  %v779 = vunpack.c.l.b16 %v651
  %v780 = vunpack.c.l.b16 %v652
  %v781 = vunpack.c.l.b16 %v653
  %v782 = vunpack.c.l.b16 %v654
  %v783 = vunpack.c.l.b16 %v655
  %v784 = vunpack.c.l.b16 %v656
  %v785 = vunpack.c.l.b16 %v657
  %v786 = vunpack.c.l.b16 %v658
  %v787 = vpack.c.b16 %v724, %v723
  %v788 = vpack.c.b16 %v726, %v725
  %v789 = vpack.c.b16 %v728, %v727
  %v790 = vpack.c.b16 %v730, %v729
  %v791 = vpack.c.b16 %v732, %v731
  %v792 = vpack.c.b16 %v734, %v733
  %v793 = vpack.c.b16 %v736, %v735
  %v794 = vpack.c.b16 %v738, %v737
  %v795 = vpack.c.b16 %v740, %v739
  %v796 = vpack.c.b16 %v742, %v741
  %v797 = vpack.c.b16 %v744, %v743
  %v798 = vpack.c.b16 %v746, %v745
  %v799 = vpack.c.b16 %v748, %v747
  %v800 = vpack.c.b16 %v750, %v749
  %v801 = vpack.c.b16 %v752, %v751
  %v802 = vpack.c.b16 %v754, %v753
  %v803 = vpack.c.b16 %v756, %v755
  %v804 = vpack.c.b16 %v758, %v757
  %v805 = vpack.c.b16 %v760, %v759
  %v806 = vpack.c.b16 %v762, %v761
  %v807 = vpack.c.b16 %v764, %v763
  %v808 = vpack.c.b16 %v766, %v765
  %v809 = vpack.c.b16 %v768, %v767
  %v810 = vpack.c.b16 %v770, %v769
  %v811 = vpack.c.b16 %v772, %v771
  %v812 = vpack.c.b16 %v774, %v773
  %v813 = vpack.c.b16 %v776, %v775
  %v814 = vpack.c.b16 %v778, %v777
  %v815 = vpack.c.b16 %v780, %v779
  %v816 = vpack.c.b16 %v782, %v781
  %v817 = vpack.c.b16 %v784, %v783
  %v818 = vpack.c.b16 %v786, %v785
  %851 = vmatprep.subr.bf16.mxu0 0
  %852 = vmatpush1.bf16.msra.mxu0 %v787
  %853 = vmatprep.subr.bf16.mxu0 0
  %854 = vmatpush1.bf16.msra.mxu0 %v788
  %855 = vmatprep.subr.bf16.mxu0 0
  %856 = vmatpush1.bf16.msra.mxu0 %v789
  %857 = vmatprep.subr.bf16.mxu0 0
  %858 = vmatpush1.bf16.msra.mxu0 %v790
  %859 = vmatprep.subr.bf16.mxu0 0
  %860 = vmatpush1.bf16.msra.mxu0 %v791
  %861 = vmatprep.subr.bf16.mxu0 0
  %862 = vmatpush1.bf16.msra.mxu0 %v792
  %863 = vmatprep.subr.bf16.mxu0 0
  %864 = vmatpush1.bf16.msra.mxu0 %v793
  %865 = vmatprep.subr.bf16.mxu0 0
  %866 = vmatpush1.bf16.msra.mxu0 %v794
  %867 = vmatprep.subr.bf16.mxu0 0
  %868 = vmatpush1.bf16.msra.mxu0 %v795
  %869 = vmatprep.subr.bf16.mxu0 0
  %870 = vmatpush1.bf16.msra.mxu0 %v796
  %871 = vmatprep.subr.bf16.mxu0 0
  %872 = vmatpush1.bf16.msra.mxu0 %v797
  %873 = vmatprep.subr.bf16.mxu0 0
  %874 = vmatpush1.bf16.msra.mxu0 %v798
  %875 = vmatprep.subr.bf16.mxu0 0
  %876 = vmatpush1.bf16.msra.mxu0 %v799
  %877 = vmatprep.subr.bf16.mxu0 0
  %878 = vmatpush1.bf16.msra.mxu0 %v800
  %879 = vmatprep.subr.bf16.mxu0 0
  %880 = vmatpush1.bf16.msra.mxu0 %v801
  %881 = vmatprep.subr.bf16.mxu0 0
  %882 = vmatpush1.bf16.msra.mxu0 %v802
  %883 = vmatprep.mubr.bf16.mxu0 %v588
  %884 = vmatmul.mubr.bf16.gmra.mrb[0].mxu0 %v587
  %v885 = vpop.f32.mrb[0].mxu0
  %v886 = vadd.f32 0.0, %v885
  %v887 = vpop.f32.mrb[0].mxu0
  %v888 = vpop.f32.mrb[0].mxu0
  %v889 = vadd.f32 0.0, %v888
  %v890 = vpop.f32.mrb[0].mxu0
  %891 = vmatprep.mubr.bf16.mxu0 %v592
  %892 = vmatmul.mubr.bf16.gmra.mrb[0].mxu0 %v591
  %v893 = vpop.f32.mrb[0].mxu0
  %v894 = vadd.f32 0.0, %v893
  %v895 = vpop.f32.mrb[0].mxu0
  %v896 = vpop.f32.mrb[0].mxu0
  %v897 = vadd.f32 0.0, %v896
  %v898 = vpop.f32.mrb[0].mxu0
  %899 = vdwg.mxu0
  %900 = vmatprep.subr.bf16.mxu0 0
  %901 = vmatpush1.bf16.msra.mxu0 %v803
  %902 = vmatprep.subr.bf16.mxu0 0
  %903 = vmatpush1.bf16.msra.mxu0 %v804
  %904 = vmatprep.subr.bf16.mxu0 0
  %905 = vmatpush1.bf16.msra.mxu0 %v805
  %906 = vmatprep.subr.bf16.mxu0 0
  %907 = vmatpush1.bf16.msra.mxu0 %v806
  %908 = vmatprep.subr.bf16.mxu0 0
  %909 = vmatpush1.bf16.msra.mxu0 %v807
  %910 = vmatprep.subr.bf16.mxu0 0
  %911 = vmatpush1.bf16.msra.mxu0 %v808
  %912 = vmatprep.subr.bf16.mxu0 0
  %913 = vmatpush1.bf16.msra.mxu0 %v809
  %914 = vmatprep.subr.bf16.mxu0 0
  %915 = vmatpush1.bf16.msra.mxu0 %v810
  %916 = vmatprep.subr.bf16.mxu0 0
  %917 = vmatpush1.bf16.msra.mxu0 %v811
  %918 = vmatprep.subr.bf16.mxu0 0
  %919 = vmatpush1.bf16.msra.mxu0 %v812
  %920 = vmatprep.subr.bf16.mxu0 0
  %921 = vmatpush1.bf16.msra.mxu0 %v813
  %922 = vmatprep.subr.bf16.mxu0 0
  %923 = vmatpush1.bf16.msra.mxu0 %v814
  %924 = vmatprep.subr.bf16.mxu0 0
  %925 = vmatpush1.bf16.msra.mxu0 %v815
  %926 = vmatprep.subr.bf16.mxu0 0
  %927 = vmatpush1.bf16.msra.mxu0 %v816
  %928 = vmatprep.subr.bf16.mxu0 0
  %929 = vmatpush1.bf16.msra.mxu0 %v817
  %930 = vmatprep.subr.bf16.mxu0 0
  %931 = vmatpush1.bf16.msra.mxu0 %v818
  %932 = vmatprep.mubr.bf16.mxu0 %v590
  %933 = vmatmul.mubr.bf16.gmra.mrb[0].mxu0 %v589
  %v934 = vpop.f32.mrb[0].mxu0
  %v935 = vadd.f32 %v886, %v934
  %v936 = vpop.f32.mrb[0].mxu0
  %v937 = vpop.f32.mrb[0].mxu0
  %v938 = vadd.f32 %v889, %v937
  %v939 = vpop.f32.mrb[0].mxu0
  %940 = vmatprep.mubr.bf16.mxu0 %v594
  %941 = vmatmul.mubr.bf16.gmra.mrb[0].mxu0 %v593
  %v942 = vpop.f32.mrb[0].mxu0
  %v943 = vadd.f32 %v894, %v942
  %v944 = vpop.f32.mrb[0].mxu0
  %v945 = vpop.f32.mrb[0].mxu0
  %v946 = vadd.f32 %v897, %v945
  %v947 = vpop.f32.mrb[0].mxu0
  %948 = vdwg.mxu0
  %v949 = vadd.f32 %v583, %v935
  %v950 = vadd.f32 %v584, %v938
  %v951 = vadd.f32 %v585, %v943
  %v952 = vadd.f32 %v586, %v946
  %953 = vst [vmem:[#allocation2] sm:$0xff] %v949
  %954 = vst [vmem:[#allocation2 + $0x8] sm:$0xff] %v950
  %955 = vst [vmem:[#allocation2 + $0x10] sm:$0xff] %v951
  %956 = vst [vmem:[#allocation2 + $0x18] sm:$0xff] %v952
  // Predicated region
  $region38: #{vitb16_forward.14} parent=0 // pred_check
    %p957 = pneg %p30
  $region39: #{vitb16_forward.14} parent=0 // pred_check_branch
    %959 = sbr.rel (%p957) target = $region41
  $region40: #{vitb16_forward.14} parent=0 // pred_region
    %v960 = vld [vmem:[#allocation2] sm:$0xff]
    %v961 = vld [vmem:[#allocation2 + $0x8] sm:$0xff]
    %v962 = vld [vmem:[#allocation2 + $0x10] sm:$0xff]
    %v963 = vld [vmem:[#allocation2 + $0x18] sm:$0xff]
    %v964 = vld [vmem:[%s6] sm:$0x1]
    %v966 = vlaneseq
    %v967 = vshrl.u32 %v966, 7
    %v968 = vsub.s32 0, %v967
    %v969 = vrot.slane %v964, %v968
    %v971 = vadd.f32 %v960, %v969
    %v972 = vadd.f32 %v961, %v969
    %v973 = vadd.f32 %v962, %v969
    %v974 = vadd.f32 %v963, %v969
    %v975 = vld [vmem:[%s7] sm:$0xf]
    %v976 = vld [vmem:[%s7 + $0x4] sm:$0xf]
    %v977 = vld [vmem:[%s7 + $0x8] sm:$0xf]
    %v978 = vld [vmem:[%s7 + $0xc] sm:$0xf]
    %v979 = vunpack.c.l.bf16 %v975
    %v980 = vunpack.c.l.bf16 %v976
    %v981 = vunpack.c.l.bf16 %v977
    %v982 = vunpack.c.l.bf16 %v978
    %v983 = vadd.f32 %v971, %v979
    %v984 = vadd.f32 %v972, %v980
    %v985 = vadd.f32 %v973, %v981
    %v986 = vadd.f32 %v974, %v982
    %v987 = vpack.c.bf16 %v984, %v983
    %v988 = vpack.c.bf16 %v986, %v985
    %v991 = vunpack.c.l.b16 %v987
    %v992 = vunpack.c.h.b16 %v987
    %v993 = vunpack.c.l.b16 %v988
    %v994 = vunpack.c.h.b16 %v988
    %v995 = vpack.c.b16 %v991, %v991
    %v996 = vpack.c.b16 %v992, %v992
    %v997 = vpack.c.b16 %v993, %v993
    %v998 = vpack.c.b16 %v994, %v994
    %1003 = vst [vmem:[%s8] sm:$0xf] %v995
    %1004 = vst [vmem:[%s8 + $0x4] sm:$0xf] %v996
    %1005 = vst [vmem:[%s8 + $0x8] sm:$0xf] %v997
    %1006 = vst [vmem:[%s8 + $0xc] sm:$0xf] %v998
  $region41: #{vitb16_forward.14} parent=0 // pred_fallthru
    _
  // Predicated region
  $region42: #{vitb16_forward.14} parent=0 // pred_check
    _
  $region43: #{vitb16_forward.14} parent=0 // pred_check_branch
    %1008 = sbr.rel (0) target = $region45
  $region44: #{vitb16_forward.14} parent=0 // pred_region
    _
  $region45: #{vitb16_forward.14} parent=0 // pred_fallthru
    _
  // Predicated region
  $region46: #{vitb16_forward.14} parent=0 // pred_check
    _
  $region47: #{vitb16_forward.14} parent=0 // pred_check_branch
    %1010 = sbr.rel (0) target = $region49
  $region48: #{vitb16_forward.14} parent=0 // pred_region
    _
  $region49: #{vitb16_forward.14} parent=0 // pred_fallthru
    _

</llo_original>
